<compile_context>
chip_gen: v7x
topology: tpu7x:2x2x1
jax: 0.10.0
libtpu: 0.0.40
codegen_flags: <defaults>
</compile_context>

<pallas_src>
import functools
import math

import jax
import jax.numpy as jnp
from jax import lax
from jax.experimental import pallas as pl
from jax.experimental.pallas import tpu as pltpu


def _sdpa_body(q, kv, am, mask_value):
    # q: (T, D) with 1/sqrt(d_k) pre-folded, same dtype as kv; kv: (L, D);
    # am: (T, L) int8 or None.
    # scores = Q @ K^T expressed directly as a D-contraction (no kv.T relayout).
    s = lax.dot_general(
        q, kv,
        dimension_numbers=(((1,), (1,)), ((), ())),
        preferred_element_type=jnp.float32,
    )                                                      # (T, L) f32
    if am is not None:
        s = jnp.where(am != 0, jnp.float32(mask_value), s)
    # Numerically stable softmax over L in f32 (fits in a few vregs at T=8).
    s = s - jnp.max(s, axis=-1, keepdims=True)
    p = jnp.exp(s)
    attn = p / jnp.sum(p, axis=-1, keepdims=True)
    # context = attn @ V  (f32 accumulate on the MXU).
    return jnp.dot(attn.astype(kv.dtype), kv, preferred_element_type=jnp.float32)


def _per_batch(i, q, kv_ref, am_ref, o_ref, mask_value):
    am = am_ref[i] if am_ref is not None else None
    o_ref[i] = _sdpa_body(q, kv_ref[i], am, mask_value).astype(o_ref.dtype)


def _batch_loop(q_ref, kv_ref, am_ref, o_ref, bb, mask_value):
    q = q_ref[0]                      # (T, D), shared across the batch block
    if bb <= 4:
        for i in range(bb):           # short static unroll
            _per_batch(i, q, kv_ref, am_ref, o_ref, mask_value)
    else:
        # Bound vreg live ranges for larger batch blocks: each iteration's
        # f32 (T, D) context tile is ~32 vregs before the cast+store.
        def body(i, carry):
            _per_batch(i, q, kv_ref, am_ref, o_ref, mask_value)
            return carry
        lax.fori_loop(0, bb, body, 0)


def _sdpa_kernel_masked(q_ref, kv_ref, am_ref, o_ref, *, bb, mask_value):
    _batch_loop(q_ref, kv_ref, am_ref, o_ref, bb, mask_value)


def _sdpa_kernel_nomask(q_ref, kv_ref, o_ref, *, bb):
    _batch_loop(q_ref, kv_ref, None, o_ref, bb, 0.0)


def _vmem_budget_and_limit():
    """Per-generation VMEM budget for block sizing + scoped vmem limit."""
    try:
        phys = int(pltpu.get_tpu_info().vmem_capacity_bytes)
    except Exception:
        phys = 64 << 20            # conservative fallback (v7x per-core VMEM)
    budget = min(phys // 2, 64 << 20)              # block budget (all buffers)
    limit = min(budget + (8 << 20), (phys * 3) // 4)  # scoped limit w/ headroom
    return budget, limit


def _pick_batch_block(B, per_batch_bytes, fixed_bytes, budget_bytes):
    """Largest divisor of B that fits the VMEM budget, keeping >= 2 grid steps
    (pipelining / both v7x TensorCores), preferring an even number of steps."""
    if B <= 1:
        return 1
    max_bb = max(1, (budget_bytes - fixed_bytes) // max(per_batch_bytes, 1))
    divisors = [d for d in range(1, B + 1) if B % d == 0 and d <= max_bb]
    if not divisors:
        return 1
    multi = [d for d in divisors if B // d >= 2]
    if multi:
        even = [d for d in multi if (B // d) % 2 == 0]
        return max(even) if even else max(multi)
    return max(divisors)


def scaled_dot_product_attention(Q, mask, attn_mask=None, mask_value=-1e9,
                                 out_dtype=None):
    """Q: [1, T, D] learned parameter, mask: [B, L, D] (K == V),
    attn_mask: optional bool [B, T, L]. Returns [B, T, D]."""
    B, L, D = mask.shape
    _, T, _ = Q.shape
    out_dtype = mask.dtype if out_dtype is None else out_dtype

    # Fold 1/sqrt(d_k) into the tiny shared Q once and match the K/V dtype so
    # the MXU sees homogeneous inputs.  The dominant HBM stream (mask, acting
    # as both K and V) is NOT cast in the wrapper: it is streamed in its native
    # dtype, avoiding an extra full HBM read+write pass just for a dtype change.
    q = (Q.astype(jnp.float32) * (1.0 / math.sqrt(D))).astype(mask.dtype)
    kv = mask

    # Derive the batch block from the VMEM budget (double-buffered blocks).
    budget, vmem_limit = _vmem_budget_and_limit()
    kv_bytes = L * D * jnp.dtype(kv.dtype).itemsize
    out_bytes = T * D * jnp.dtype(out_dtype).itemsize
    am_bytes = T * L if attn_mask is not None else 0
    per_batch = 2 * (kv_bytes + out_bytes + am_bytes)
    fixed = 2 * (T * D * jnp.dtype(q.dtype).itemsize)          # resident Q
    bb = _pick_batch_block(B, per_batch, fixed, budget)
    grid = (B // bb,)

    q_spec = pl.BlockSpec((1, T, D), lambda b: (0, 0, 0))      # fetched once, reused
    kv_spec = pl.BlockSpec((bb, L, D), lambda b: (b, 0, 0))
    out_spec = pl.BlockSpec((bb, T, D), lambda b: (b, 0, 0))
    out_shape = jax.ShapeDtypeStruct((B, T, D), out_dtype)
    cparams = pltpu.CompilerParams(
        dimension_semantics=("parallel",),
        vmem_limit_bytes=int(vmem_limit),
    )
    # TODO(synk): if an xprof profile on v7x shows only one TensorCore busy,
    # switch dimension_semantics to (pltpu.CORE_PARALLEL,).

    if attn_mask is None:
        kernel = functools.partial(_sdpa_kernel_nomask, bb=bb)
        return pl.pallas_call(
            kernel,
            out_shape=out_shape,
            grid_spec=pltpu.PrefetchScalarGridSpec(
                num_scalar_prefetch=0,
                grid=grid,
                in_specs=[q_spec, kv_spec],
                out_specs=out_spec,
            ),
            compiler_params=cparams,
        )(q, kv)

    am = attn_mask.astype(jnp.int8)
    am_spec = pl.BlockSpec((bb, T, L), lambda b: (b, 0, 0))
    kernel = functools.partial(_sdpa_kernel_masked, bb=bb, mask_value=mask_value)
    return pl.pallas_call(
        kernel,
        out_shape=out_shape,
        grid_spec=pltpu.PrefetchScalarGridSpec(
            num_scalar_prefetch=0,
            grid=grid,
            in_specs=[q_spec, kv_spec, am_spec],
            out_specs=out_spec,
        ),
        compiler_params=cparams,
    )(q, kv, am)


def _reference(Q, kv, attn_mask, mask_value=-1e9):
    # Full-precision reference of the PyTorch module (kv acts as both K and V).
    B = kv.shape[0]
    d_k = Q.shape[-1]
    q = jnp.broadcast_to(Q, (B,) + Q.shape[1:]).astype(jnp.float32)
    kv32 = kv.astype(jnp.float32)
    scores = jnp.einsum("btd,bld->btl", q, kv32) / jnp.sqrt(jnp.float32(d_k))
    if attn_mask is not None:
        scores = jnp.where(attn_mask, jnp.float32(mask_value), scores)
    attn = jax.nn.softmax(scores, axis=-1)
    return jnp.einsum("btl,bld->btd", attn, kv32)


if __name__ == "__main__":
    # Small-but-consistent shapes: the module hardcodes d_model = 4096.
    B = 2            # batch
    T = 8            # mask_token (number of learned query tokens)
    L = 128          # len_k (sequence length of `mask` input)
    D = 4096         # d_k / d_model (fixed by the module)

    key = jax.random.PRNGKey(0)
    kq, km, ka = jax.random.split(key, 3)

    Q = jax.random.normal(kq, (1, T, D), dtype=jnp.float32)
    mask = jax.random.normal(km, (B, L, D), dtype=jnp.float32)
    attn_mask = jax.random.bernoulli(ka, p=0.1, shape=(B, T, L))

    out_masked = scaled_dot_product_attention(Q, mask, attn_mask)
    out_nomask = scaled_dot_product_attention(Q, mask, None)
    out_masked, out_nomask = jax.block_until_ready((out_masked, out_nomask))

    ref_masked = _reference(Q, mask, attn_mask)
    ref_nomask = _reference(Q, mask, None)

    assert out_masked.shape == (B, T, D) and out_nomask.shape == (B, T, D)
    assert jnp.allclose(out_masked, ref_masked, atol=2e-2, rtol=2e-2), "masked mismatch"
    assert jnp.allclose(out_nomask, ref_nomask, atol=2e-2, rtol=2e-2), "no-mask mismatch"

    print("KERNEL_OK")
</pallas_src>

<mosaic_0001>
module attributes {stable_mosaic.version = 11 : i64} {
  func.func @_sdpa_kernel_masked(%arg0: i32, %arg1: memref<1x8x4096xf32, #tpu.memory_space<vmem>>, %arg2: memref<1x128x4096xf32, #tpu.memory_space<vmem>>, %arg3: memref<1x8x128xi8, #tpu.memory_space<vmem>>, %arg4: memref<1x8x4096xf32, #tpu.memory_space<vmem>>) attributes {dimension_semantics = [#tpu.dimension_semantics<parallel>], iteration_bounds = array<i64: 2>, scalar_prefetch = 0 : i64, scratch_operands = 0 : i64, tpu.core_type = #tpu.core_type<tc>, window_params = [{pipeline_mode = #tpu.pipeline_mode<synchronous>, transform_indices = @transform_0, window_bounds = array<i64: 1, 8, 4096>}, {transform_indices = @transform_1, window_bounds = array<i64: 1, 128, 4096>}, {transform_indices = @transform_2, window_bounds = array<i64: 1, 8, 128>}, {transform_indices = @transform_3, window_bounds = array<i64: 1, 8, 4096>}]} {
    %c0 = arith.constant 0 : index
    %c0_0 = arith.constant 0 : index
    %c0_1 = arith.constant 0 : index
    %0 = vector.load %arg1[%c0, %c0_0, %c0_1] : memref<1x8x4096xf32, #tpu.memory_space<vmem>>, vector<1x8x4096xf32>
    %1 = vector.shape_cast %0 : vector<1x8x4096xf32> to vector<8x4096xf32>
    %c0_2 = arith.constant 0 : index
    %c0_3 = arith.constant 0 : index
    %c0_4 = arith.constant 0 : index
    %2 = vector.load %arg3[%c0_2, %c0_3, %c0_4] : memref<1x8x128xi8, #tpu.memory_space<vmem>>, vector<1x8x128xi8>
    %3 = vector.shape_cast %2 : vector<1x8x128xi8> to vector<8x128xi8>
    %c0_5 = arith.constant 0 : index
    %c0_6 = arith.constant 0 : index
    %c0_7 = arith.constant 0 : index
    %4 = vector.load %arg2[%c0_5, %c0_6, %c0_7] : memref<1x128x4096xf32, #tpu.memory_space<vmem>>, vector<1x128x4096xf32>
    %5 = vector.shape_cast %4 : vector<1x128x4096xf32> to vector<128x4096xf32>
    %cst = arith.constant dense<0.000000e+00> : vector<8x128xf32>
    %6 = tpu.matmul %1, %5, %cst {dimension_numbers = #tpu.dot_dimension_numbers<[1], [1], [0], [0], [0, 0, 1, 0], [], []>} : vector<8x4096xf32>, vector<128x4096xf32>, vector<8x128xf32> -> vector<8x128xf32>
    %c0_i8 = arith.constant 0 : i8
    %7 = vector.broadcast %c0_i8 : i8 to vector<8x128xi8>
    %8 = arith.cmpi ne, %3, %7 : vector<8x128xi8>
    %cst_8 = arith.constant -1.000000e+09 : f32
    %9 = vector.broadcast %cst_8 : f32 to vector<8x128xf32>
    %10 = arith.select %8, %9, %6 : vector<8x128xi1>, vector<8x128xf32>
    %cst_9 = arith.constant dense<0xFF800000> : vector<8xf32>
    %11 = vector.multi_reduction <maximumf>, %10, %cst_9 [1] : vector<8x128xf32> to vector<8xf32>
    %12 = vector.shape_cast %11 : vector<8xf32> to vector<8x1xf32>
    %13 = vector.broadcast %12 : vector<8x1xf32> to vector<8x128xf32>
    %14 = arith.subf %10, %13 : vector<8x128xf32>
    %15 = math.exp %14 : vector<8x128xf32>
    %cst_10 = arith.constant dense<0.000000e+00> : vector<8xf32>
    %16 = vector.multi_reduction <add>, %15, %cst_10 [1] : vector<8x128xf32> to vector<8xf32>
    %17 = vector.shape_cast %16 : vector<8xf32> to vector<8x1xf32>
    %18 = vector.broadcast %17 : vector<8x1xf32> to vector<8x128xf32>
    %19 = arith.divf %15, %18 : vector<8x128xf32>
    %cst_11 = arith.constant dense<0.000000e+00> : vector<8x4096xf32>
    %20 = tpu.matmul %19, %5, %cst_11 {dimension_numbers = #tpu.dot_dimension_numbers<[1], [0], [0], [1], [0, 0, 1, 1], [], []>} : vector<8x128xf32>, vector<128x4096xf32>, vector<8x4096xf32> -> vector<8x4096xf32>
    %c0_12 = arith.constant 0 : index
    %c0_13 = arith.constant 0 : index
    %c0_14 = arith.constant 0 : index
    %21 = vector.load %arg4[%c0_12, %c0_13, %c0_14] : memref<1x8x4096xf32, #tpu.memory_space<vmem>>, vector<1x8x4096xf32>
    %22 = vector.shape_cast %21 : vector<1x8x4096xf32> to vector<8x4096xf32>
    %23 = vector.shape_cast %20 : vector<8x4096xf32> to vector<1x8x4096xf32>
    tpu.vector_store %arg4[%c0_12, %c0_13, %c0_14], %23 {strides = array<i32>} : memref<1x8x4096xf32, #tpu.memory_space<vmem>>, vector<1x8x4096xf32>,
    return
  }
  func.func @transform_0(%arg0: i32) -> (i32, i32, i32) {
    %c0_i32 = arith.constant 0 : i32
    %c0_i32_0 = arith.constant 0 : i32
    %c0_i32_1 = arith.constant 0 : i32
    %c0_i32_2 = arith.constant 0 : i32
    return %c0_i32, %c0_i32_0, %c0_i32_1 : i32, i32, i32
  }
  func.func @transform_1(%arg0: i32) -> (i32, i32, i32) {
    %c0_i32 = arith.constant 0 : i32
    %c0_i32_0 = arith.constant 0 : i32
    %c0_i32_1 = arith.constant 0 : i32
    return %arg0, %c0_i32, %c0_i32_0 : i32, i32, i32
  }
  func.func @transform_2(%arg0: i32) -> (i32, i32, i32) {
    %c0_i32 = arith.constant 0 : i32
    %c0_i32_0 = arith.constant 0 : i32
    %c0_i32_1 = arith.constant 0 : i32
    return %arg0, %c0_i32, %c0_i32_0 : i32, i32, i32
  }
  func.func @transform_3(%arg0: i32) -> (i32, i32, i32) {
    %c0_i32 = arith.constant 0 : i32
    %c0_i32_0 = arith.constant 0 : i32
    %c0_i32_1 = arith.constant 0 : i32
    return %arg0, %c0_i32, %c0_i32_0 : i32, i32, i32
  }
}

</mosaic_0001>

<llo_original>
// kernel: tpu_custom_call.1
$region0: #{tpu_custom_call.1}
  #allocation0 [shape = 'u32[]', space=smem, size = 0x4, offset = 0x4, fixed_abs, tag = 'smem constant byte address 0x4 - core index']
  #allocation1 [shape = 'u32[144,128]{1,0:T(1,128)}', space=vmem, size = 0x12000, scoped, tag = 'internal scratch']
  %s0 = inlined_call_operand.hbm [shape: f32[1,8,4096], index: 0, kind: input, shape index: {}]
  %s1 = inlined_call_operand.hbm [shape: f32[2,128,4096], index: 1, kind: input, shape index: {}]
  %s2 = inlined_call_operand.hbm [shape: s8[2,8,128], index: 2, kind: input, shape index: {}]
  %s3 = inlined_call_operand.hbm [shape: f32[2,8,4096], index: 3, kind: output, shape index: {}]
  %s4 = sld [smem:[#allocation0]]
  $region57: #{tpu_custom_call.1} parent=0
    _
  %s6 = ssub.s32 1, %s4
  %s7 = scalar_select 0, %s6, %s4
  $region1: #{tpu_custom_call.1} parent=0
    #allocation2 [shape = 'u8[131072]{0}', space=vmem, size = 0x20000, scoped, tag = 'input window, operand 0, single buffered']
    #allocation3 [shape = 's32[2]{0}', space=sflag, size = 0x8, scoped, tag = 'scoped memory for tpu_custom_call.1']
    #allocation4 [shape = 's32[2]{0}', space=sflag, size = 0x8, scoped, tag = 'scoped memory for tpu_custom_call.1']
    #allocation5 [shape = 'u8[4194304]{0}', space=vmem, size = 0x400000, scoped, tag = 'input window, operand 1']
    #allocation6 [shape = 's32[2]{0}', space=sflag, size = 0x8, scoped, tag = 'scoped memory for tpu_custom_call.1']
    #allocation7 [shape = 'u8[2048]{0}', space=vmem, size = 0x800, scoped, tag = 'input window, operand 2']
    #allocation8 [shape = 'u8[262144]{0}', space=vmem, size = 0x40000, scoped, tag = 'output window, operand 0']
    %8 = vsyncpa [#allocation3], 0
    %9 = vsyncpa [#allocation6], 0
    %s10 = scalar_lea.sflag [#allocation6], 1
    %11 = vsyncpa %s10, 0
    %12 = vsyncpa [#allocation4], 0
    %s13 = scalar_lea.sflag [#allocation4], 1
    %14 = vsyncpa %s13, 0
    loop: start=0, step=1, limit=4
    $region2: #{tpu_custom_call.1} parent=1 // loop_pre_header
      _
    $region3: #{tpu_custom_call.1} parent=1 // loop_header
      %s16 = sphi 0, %s20
      %p17 = scmp.ge.s32.totalorder %s16, 4
      %s24 = sphi 0, %s24
      %s26 = sphi 0, %s24
      %s27 = sphi 0, %s26
      %s41 = sphi 0, %s27
      %s47 = sphi 0, %s49
      %s50 = sphi 0, %s47
      %s51 = sphi 0, %s50
      %s67 = sphi 0, %s51
      %s73 = sphi 0, %s75
      %s76 = sphi 0, %s73
      %s77 = sphi 0, %s76
      %s93 = sphi 0, %s77
      %s99 = sphi 0, %s101
      %s102 = sphi 0, %s99
      %s103 = sphi 0, %s102
      %s119 = sphi 0, %s103
    $region4: #{tpu_custom_call.1} parent=1 // loop_header_branch
      %19 = sbr.rel (%p17) target = $region8
    $region5: #{tpu_custom_call.1} parent=1 // loop_body
      %s21 = ssub.s32 %s16, 1
      %s22 = ssub.s32 %s16, 2
      %s23 = sadd.s32 %s16, 1
      %s25 = sadd.s32 %s24, 1
      %p28 = scmp.eq.s32.totalorder %s16, 1
      %p29 = scmp.ne.s32.totalorder %s24, %s26
      %p30 = scmp.eq.s32.totalorder %s16, 0
      %p31 = por %p29, %p30
      %p32 = scmp.ne.s32.totalorder %s24, %s26
      %p33 = scmp.eq.s32.totalorder %s21, 1
      %p34 = por %p32, %p33
      %p35 = scmp.ne.s32.totalorder %s26, %s27
      %p36 = scmp.eq.s32.totalorder %s21, 0
      %p37 = por %p35, %p36
      %p38 = scmp.ne.s32.totalorder %s26, %s27
      %p39 = scmp.eq.s32.totalorder %s22, 1
      %p40 = por %p38, %p39
      %p42 = scmp.ne.s32.totalorder %s27, %s41
      %p43 = scmp.eq.s32.totalorder %s22, 0
      %p44 = por %p42, %p43
      %s45 = ssub.s32 %s16, %s23
      %p46 = scmp.eq.s32.totalorder %s45, 0
      %s48 = sadd.s32 %s47, 1
      %s49 = scalar_select %p46, %s47, %s48
      %p52 = pneg %p46
      %p53 = scmp.eq.s32.totalorder %s16, 1
      %p54 = por %p52, %p53
      %p55 = scmp.ne.s32.totalorder %s47, %s50
      %p56 = scmp.eq.s32.totalorder %s16, 0
      %p57 = por %p55, %p56
      %p58 = scmp.ne.s32.totalorder %s47, %s50
      %p59 = scmp.eq.s32.totalorder %s21, 1
      %p60 = por %p58, %p59
      %p61 = scmp.ne.s32.totalorder %s50, %s51
      %p62 = scmp.eq.s32.totalorder %s21, 0
      %p63 = por %p61, %p62
      %p64 = scmp.ne.s32.totalorder %s50, %s51
      %p65 = scmp.eq.s32.totalorder %s22, 1
      %p66 = por %p64, %p65
      %p68 = scmp.ne.s32.totalorder %s51, %s67
      %p69 = scmp.eq.s32.totalorder %s22, 0
      %p70 = por %p68, %p69
      %s71 = ssub.s32 %s16, %s23
      %p72 = scmp.eq.s32.totalorder %s71, 0
      %s74 = sadd.s32 %s73, 1
      %s75 = scalar_select %p72, %s73, %s74
      %p78 = pneg %p72
      %p79 = scmp.eq.s32.totalorder %s16, 1
      %p80 = por %p78, %p79
      %p81 = scmp.ne.s32.totalorder %s73, %s76
      %p82 = scmp.eq.s32.totalorder %s16, 0
      %p83 = por %p81, %p82
      %p84 = scmp.ne.s32.totalorder %s73, %s76
      %p85 = scmp.eq.s32.totalorder %s21, 1
      %p86 = por %p84, %p85
      %p87 = scmp.ne.s32.totalorder %s76, %s77
      %p88 = scmp.eq.s32.totalorder %s21, 0
      %p89 = por %p87, %p88
      %p90 = scmp.ne.s32.totalorder %s76, %s77
      %p91 = scmp.eq.s32.totalorder %s22, 1
      %p92 = por %p90, %p91
      %p94 = scmp.ne.s32.totalorder %s77, %s93
      %p95 = scmp.eq.s32.totalorder %s22, 0
      %p96 = por %p94, %p95
      %s97 = ssub.s32 %s16, %s23
      %p98 = scmp.eq.s32.totalorder %s97, 0
      %s100 = sadd.s32 %s99, 1
      %s101 = scalar_select %p98, %s99, %s100
      %p104 = pneg %p98
      %p105 = scmp.eq.s32.totalorder %s16, 1
      %p106 = por %p104, %p105
      %p107 = scmp.ne.s32.totalorder %s99, %s102
      %p108 = scmp.eq.s32.totalorder %s16, 0
      %p109 = por %p107, %p108
      %p110 = scmp.ne.s32.totalorder %s99, %s102
      %p111 = scmp.eq.s32.totalorder %s21, 1
      %p112 = por %p110, %p111
      %p113 = scmp.ne.s32.totalorder %s102, %s103
      %p114 = scmp.eq.s32.totalorder %s21, 0
      %p115 = por %p113, %p114
      %p116 = scmp.ne.s32.totalorder %s102, %s103
      %p117 = scmp.eq.s32.totalorder %s22, 1
      %p118 = por %p116, %p117
      %p120 = scmp.ne.s32.totalorder %s103, %s119
      %p121 = scmp.eq.s32.totalorder %s22, 0
      %p122 = por %p120, %p121
      %p123 = scmp.le.s32.totalorder 1, %s16
      %p124 = scmp.lt.s32.totalorder %s16, 3
      %p125 = pnand %p123, %p124
      %p126 = pneg %p125
      // Predicated region
      $region9: #{tpu_custom_call.1} parent=5 // pred_check
        _
      $region10: #{tpu_custom_call.1} parent=5 // pred_check_branch
        %128 = sbr.rel (%p125) target = $region12
      $region11: #{tpu_custom_call.1} parent=5 // pred_region
        %s129 = ssub.s32 %s16, 1
        // Predicated region
        $region13: #{tpu_custom_call.1} parent=11 // pred_check
          %p130 = pneg %p37
        $region14: #{tpu_custom_call.1} parent=11 // pred_check_branch
          %132 = sbr.rel (%p130) target = $region16
        $region15: #{tpu_custom_call.1} parent=11 // pred_region
          %s134 = ssub.s32 4096, 4096
          %135 = vsyncadd [#allocation3], %s134
          %s137 = sshll.u32 [#allocation2], 4
          %s138 = int_to_ptr.vmem [resolvable:$true] %s137
          %140 = dma.hbm_to_vmem [thread:$0]  %s0, 4096, %s138, [#allocation3]
        $region16: #{tpu_custom_call.1} parent=11 // pred_fallthru
          _
      $region12: #{tpu_custom_call.1} parent=5 // pred_fallthru
        _
      %p141 = scmp.lt.s32.totalorder %s16, 2
      // Predicated region
      $region17: #{tpu_custom_call.1} parent=5 // pred_check
        %p142 = pneg %p141
      $region18: #{tpu_custom_call.1} parent=5 // pred_check_branch
        %144 = sbr.rel (%p142) target = $region20
      $region19: #{tpu_custom_call.1} parent=5 // pred_region
        // Predicated region
        $region21: #{tpu_custom_call.1} parent=19 // pred_check
          %p145 = pneg %p57
        $region22: #{tpu_custom_call.1} parent=19 // pred_check_branch
          %147 = sbr.rel (%p145) target = $region24
        $region23: #{tpu_custom_call.1} parent=19 // pred_region
          %s148 = sand.u32 %s16, 1
          %s149 = scalar_lea.sflag [#allocation6], %s148
          %s150 = sand.u32 %s47, 1
          %s151 = smul.addr %s150, 4096
          %s152 = scalar_lea.vmem [#allocation5], %s151
          %s154 = ssub.s32 65536, 65536
          %155 = vsyncadd %s149, %s154
          %s156 = smul.addr %s16, 512
          %s157 = smul.addr %s156, 128
          %s158 = scalar_lea.hbm %s1, %s157
          %s159 = sshll.u32 %s152, 4
          %s160 = int_to_ptr.vmem [resolvable:$true] %s159
          %165 = dma.hbm_to_vmem [thread:$0]  %s158, 65536, %s160, %s149, 4096, 4096, 256
        $region24: #{tpu_custom_call.1} parent=19 // pred_fallthru
          _
        // Predicated region
        $region25: #{tpu_custom_call.1} parent=19 // pred_check
          %p166 = pneg %p83
        $region26: #{tpu_custom_call.1} parent=19 // pred_check_branch
          %168 = sbr.rel (%p166) target = $region28
        $region27: #{tpu_custom_call.1} parent=19 // pred_region
          %s169 = sand.u32 %s16, 1
          %s170 = scalar_lea.sflag [#allocation6], %s169
          %s171 = sand.u32 %s73, 1
          %s172 = smul.addr %s171, 2
          %s173 = scalar_lea.vmem [#allocation7], %s172
          %s175 = ssub.s32 32, 32
          %176 = vsyncadd %s170, %s175
          %s177 = smul.addr %s16, 32
          %s178 = scalar_lea.hbm %s2, %s177
          %s180 = sshll.u32 %s173, 4
          %s181 = int_to_ptr.vmem [resolvable:$true] %s180
          %183 = dma.hbm_to_vmem [thread:$0]  %s178, 32, %s181, %s170
        $region28: #{tpu_custom_call.1} parent=19 // pred_fallthru
          _
      $region20: #{tpu_custom_call.1} parent=5 // pred_fallthru
        _
      %p184 = scmp.le.s32.totalorder 1, %s16
      %p185 = scmp.lt.s32.totalorder %s16, 3
      %p186 = pnand %p184, %p185
      %p187 = pneg %p186
      // Predicated region
      $region29: #{tpu_custom_call.1} parent=5 // pred_check
        _
      $region30: #{tpu_custom_call.1} parent=5 // pred_check_branch
        %189 = sbr.rel (%p186) target = $region32
      $region31: #{tpu_custom_call.1} parent=5 // pred_region
        %s190 = ssub.s32 %s16, 1
        // Predicated region
        $region33: #{tpu_custom_call.1} parent=31 // pred_check
          %p191 = pneg %p37
        $region34: #{tpu_custom_call.1} parent=31 // pred_check_branch
          %193 = sbr.rel (%p191) target = $region36
        $region35: #{tpu_custom_call.1} parent=31 // pred_region
          %194 = dma.done [#allocation3], 4096
        $region36: #{tpu_custom_call.1} parent=31 // pred_fallthru
          _
        %s195 = sand.u32 %s21, 1
        %s196 = scalar_lea.sflag [#allocation6], %s195
        %s197 = sand.u32 %s50, 1
        %s198 = smul.addr %s197, 4096
        %s199 = scalar_lea.vmem [#allocation5], %s198
        // Predicated region
        $region37: #{tpu_custom_call.1} parent=31 // pred_check
          %p200 = pneg %p63
        $region38: #{tpu_custom_call.1} parent=31 // pred_check_branch
          %202 = sbr.rel (%p200) target = $region40
        $region39: #{tpu_custom_call.1} parent=31 // pred_region
          %203 = dma.done %s196, 65536
        $region40: #{tpu_custom_call.1} parent=31 // pred_fallthru
          _
        %s204 = sand.u32 %s21, 1
        %s205 = scalar_lea.sflag [#allocation6], %s204
        %s206 = sand.u32 %s76, 1
        %s207 = smul.addr %s206, 2
        %s208 = scalar_lea.vmem [#allocation7], %s207
        // Predicated region
        $region41: #{tpu_custom_call.1} parent=31 // pred_check
          %p209 = pneg %p89
        $region42: #{tpu_custom_call.1} parent=31 // pred_check_branch
          %211 = sbr.rel (%p209) target = $region44
        $region43: #{tpu_custom_call.1} parent=31 // pred_region
          %212 = dma.done %s205, 32
        $region44: #{tpu_custom_call.1} parent=31 // pred_fallthru
          _
        %p213 = pneg %p37
        %p214 = pneg %p34
        %s215 = sand.u32 %s21, 1
        %s216 = scalar_lea.sflag [#allocation6], %s215
        %s217 = sand.u32 %s50, 1
        %s218 = smul.addr %s217, 4096
        %s219 = scalar_lea.vmem [#allocation5], %s218
        %p220 = pneg %p63
        %p221 = pneg %p60
        %s222 = sand.u32 %s21, 1
        %s223 = scalar_lea.sflag [#allocation6], %s222
        %s224 = sand.u32 %s76, 1
        %s225 = smul.addr %s224, 2
        %s226 = scalar_lea.vmem [#allocation7], %s225
        %p227 = pneg %p89
        %p228 = pneg %p86
        %p229 = pneg %p115
        %p230 = pneg %p112
        %s231 = sand.u32 %s102, 1
        %s232 = scalar_lea.sflag [#allocation4], %s231
        %s233 = sand.u32 %s102, 1
        %s234 = smul.addr %s233, 256
        %s235 = scalar_lea.vmem [#allocation8], %s234
        %v238 = vld [vmem:[#allocation2] sm:$0xff]
        %v239 = vld [vmem:[#allocation2 + $0x8] sm:$0xff]
        %v240 = vld [vmem:[#allocation2 + $0x10] sm:$0xff]
        %v241 = vld [vmem:[#allocation2 + $0x18] sm:$0xff]
        %v242 = vld [vmem:[#allocation2 + $0x20] sm:$0xff]
        %v243 = vld [vmem:[#allocation2 + $0x28] sm:$0xff]
        %v244 = vld [vmem:[#allocation2 + $0x30] sm:$0xff]
        %v245 = vld [vmem:[#allocation2 + $0x38] sm:$0xff]
        %v246 = vld [vmem:[#allocation2 + $0x40] sm:$0xff]
        %v247 = vld [vmem:[#allocation2 + $0x48] sm:$0xff]
        %v248 = vld [vmem:[#allocation2 + $0x50] sm:$0xff]
        %v249 = vld [vmem:[#allocation2 + $0x58] sm:$0xff]
        %v250 = vld [vmem:[#allocation2 + $0x60] sm:$0xff]
        %v251 = vld [vmem:[#allocation2 + $0x68] sm:$0xff]
        %v252 = vld [vmem:[#allocation2 + $0x70] sm:$0xff]
        %v253 = vld [vmem:[#allocation2 + $0x78] sm:$0xff]
        %v254 = vld [vmem:[#allocation2 + $0x80] sm:$0xff]
        %v255 = vld [vmem:[#allocation2 + $0x88] sm:$0xff]
        %v256 = vld [vmem:[#allocation2 + $0x90] sm:$0xff]
        %v257 = vld [vmem:[#allocation2 + $0x98] sm:$0xff]
        %v258 = vld [vmem:[#allocation2 + $0xa0] sm:$0xff]
        %v259 = vld [vmem:[#allocation2 + $0xa8] sm:$0xff]
        %v260 = vld [vmem:[#allocation2 + $0xb0] sm:$0xff]
        %v261 = vld [vmem:[#allocation2 + $0xb8] sm:$0xff]
        %v262 = vld [vmem:[#allocation2 + $0xc0] sm:$0xff]
        %v263 = vld [vmem:[#allocation2 + $0xc8] sm:$0xff]
        %v264 = vld [vmem:[#allocation2 + $0xd0] sm:$0xff]
        %v265 = vld [vmem:[#allocation2 + $0xd8] sm:$0xff]
        %v266 = vld [vmem:[#allocation2 + $0xe0] sm:$0xff]
        %v267 = vld [vmem:[#allocation2 + $0xe8] sm:$0xff]
        %v268 = vld [vmem:[#allocation2 + $0xf0] sm:$0xff]
        %v269 = vld [vmem:[#allocation2 + $0xf8] sm:$0xff]
        %v270 = vld [vmem:[%s208] sm:$0x3]
        %v271 = vld [vmem:[%s199] sm:$0xff]
        %v272 = vld [vmem:[%s199 + $0x8] sm:$0xff]
        %v273 = vld [vmem:[%s199 + $0x10] sm:$0xff]
        %v274 = vld [vmem:[%s199 + $0x18] sm:$0xff]
        %v275 = vld [vmem:[%s199 + $0x20] sm:$0xff]
        %v276 = vld [vmem:[%s199 + $0x28] sm:$0xff]
        %v277 = vld [vmem:[%s199 + $0x30] sm:$0xff]
        %v278 = vld [vmem:[%s199 + $0x38] sm:$0xff]
        %v279 = vld [vmem:[%s199 + $0x40] sm:$0xff]
        %v280 = vld [vmem:[%s199 + $0x48] sm:$0xff]
        %v281 = vld [vmem:[%s199 + $0x50] sm:$0xff]
        %v282 = vld [vmem:[%s199 + $0x58] sm:$0xff]
        %v283 = vld [vmem:[%s199 + $0x60] sm:$0xff]
        %v284 = vld [vmem:[%s199 + $0x68] sm:$0xff]
        %v285 = vld [vmem:[%s199 + $0x70] sm:$0xff]
        %v286 = vld [vmem:[%s199 + $0x78] sm:$0xff]
        %v287 = vld [vmem:[%s199 + $0x80] sm:$0xff]
        %v288 = vld [vmem:[%s199 + $0x88] sm:$0xff]
        %v289 = vld [vmem:[%s199 + $0x90] sm:$0xff]
        %v290 = vld [vmem:[%s199 + $0x98] sm:$0xff]
        %v291 = vld [vmem:[%s199 + $0xa0] sm:$0xff]
        %v292 = vld [vmem:[%s199 + $0xa8] sm:$0xff]
        %v293 = vld [vmem:[%s199 + $0xb0] sm:$0xff]
        %v294 = vld [vmem:[%s199 + $0xb8] sm:$0xff]
        %v295 = vld [vmem:[%s199 + $0xc0] sm:$0xff]
        %v296 = vld [vmem:[%s199 + $0xc8] sm:$0xff]
        %v297 = vld [vmem:[%s199 + $0xd0] sm:$0xff]
        %v298 = vld [vmem:[%s199 + $0xd8] sm:$0xff]
        %v299 = vld [vmem:[%s199 + $0xe0] sm:$0xff]
        %v300 = vld [vmem:[%s199 + $0xe8] sm:$0xff]
        %v301 = vld [vmem:[%s199 + $0xf0] sm:$0xff]
        %v302 = vld [vmem:[%s199 + $0xf8] sm:$0xff]
        %v303 = vld [vmem:[%s199 + $0x100] sm:$0xff]
        %v304 = vld [vmem:[%s199 + $0x108] sm:$0xff]
        %v305 = vld [vmem:[%s199 + $0x110] sm:$0xff]
        %v306 = vld [vmem:[%s199 + $0x118] sm:$0xff]
        %v307 = vld [vmem:[%s199 + $0x120] sm:$0xff]
        %v308 = vld [vmem:[%s199 + $0x128] sm:$0xff]
        %v309 = vld [vmem:[%s199 + $0x130] sm:$0xff]
        %v310 = vld [vmem:[%s199 + $0x138] sm:$0xff]
        %v311 = vld [vmem:[%s199 + $0x140] sm:$0xff]
        %v312 = vld [vmem:[%s199 + $0x148] sm:$0xff]
        %v313 = vld [vmem:[%s199 + $0x150] sm:$0xff]
        %v314 = vld [vmem:[%s199 + $0x158] sm:$0xff]
        %v315 = vld [vmem:[%s199 + $0x160] sm:$0xff]
        %v316 = vld [vmem:[%s199 + $0x168] sm:$0xff]
        %v317 = vld [vmem:[%s199 + $0x170] sm:$0xff]
        %v318 = vld [vmem:[%s199 + $0x178] sm:$0xff]
        %v319 = vld [vmem:[%s199 + $0x180] sm:$0xff]
        %v320 = vld [vmem:[%s199 + $0x188] sm:$0xff]
        %v321 = vld [vmem:[%s199 + $0x190] sm:$0xff]
        %v322 = vld [vmem:[%s199 + $0x198] sm:$0xff]
        %v323 = vld [vmem:[%s199 + $0x1a0] sm:$0xff]
        %v324 = vld [vmem:[%s199 + $0x1a8] sm:$0xff]
        %v325 = vld [vmem:[%s199 + $0x1b0] sm:$0xff]
        %v326 = vld [vmem:[%s199 + $0x1b8] sm:$0xff]
        %v327 = vld [vmem:[%s199 + $0x1c0] sm:$0xff]
        %v328 = vld [vmem:[%s199 + $0x1c8] sm:$0xff]
        %v329 = vld [vmem:[%s199 + $0x1d0] sm:$0xff]
        %v330 = vld [vmem:[%s199 + $0x1d8] sm:$0xff]
        %v331 = vld [vmem:[%s199 + $0x1e0] sm:$0xff]
        %v332 = vld [vmem:[%s199 + $0x1e8] sm:$0xff]
        %v333 = vld [vmem:[%s199 + $0x1f0] sm:$0xff]
        %v334 = vld [vmem:[%s199 + $0x1f8] sm:$0xff]
        %v335 = vld [vmem:[%s199 + $0x200] sm:$0xff]
        %v336 = vld [vmem:[%s199 + $0x208] sm:$0xff]
        %v337 = vld [vmem:[%s199 + $0x210] sm:$0xff]
        %v338 = vld [vmem:[%s199 + $0x218] sm:$0xff]
        %v339 = vld [vmem:[%s199 + $0x220] sm:$0xff]
        %v340 = vld [vmem:[%s199 + $0x228] sm:$0xff]
        %v341 = vld [vmem:[%s199 + $0x230] sm:$0xff]
        %v342 = vld [vmem:[%s199 + $0x238] sm:$0xff]
        %v343 = vld [vmem:[%s199 + $0x240] sm:$0xff]
        %v344 = vld [vmem:[%s199 + $0x248] sm:$0xff]
        %v345 = vld [vmem:[%s199 + $0x250] sm:$0xff]
        %v346 = vld [vmem:[%s199 + $0x258] sm:$0xff]
        %v347 = vld [vmem:[%s199 + $0x260] sm:$0xff]
        %v348 = vld [vmem:[%s199 + $0x268] sm:$0xff]
        %v349 = vld [vmem:[%s199 + $0x270] sm:$0xff]
        %v350 = vld [vmem:[%s199 + $0x278] sm:$0xff]
        %v351 = vld [vmem:[%s199 + $0x280] sm:$0xff]
        %v352 = vld [vmem:[%s199 + $0x288] sm:$0xff]
        %v353 = vld [vmem:[%s199 + $0x290] sm:$0xff]
        %v354 = vld [vmem:[%s199 + $0x298] sm:$0xff]
        %v355 = vld [vmem:[%s199 + $0x2a0] sm:$0xff]
        %v356 = vld [vmem:[%s199 + $0x2a8] sm:$0xff]
        %v357 = vld [vmem:[%s199 + $0x2b0] sm:$0xff]
        %v358 = vld [vmem:[%s199 + $0x2b8] sm:$0xff]
        %v359 = vld [vmem:[%s199 + $0x2c0] sm:$0xff]
        %v360 = vld [vmem:[%s199 + $0x2c8] sm:$0xff]
        %v361 = vld [vmem:[%s199 + $0x2d0] sm:$0xff]
        %v362 = vld [vmem:[%s199 + $0x2d8] sm:$0xff]
        %v363 = vld [vmem:[%s199 + $0x2e0] sm:$0xff]
        %v364 = vld [vmem:[%s199 + $0x2e8] sm:$0xff]
        %v365 = vld [vmem:[%s199 + $0x2f0] sm:$0xff]
        %v366 = vld [vmem:[%s199 + $0x2f8] sm:$0xff]
        %v367 = vld [vmem:[%s199 + $0x300] sm:$0xff]
        %v368 = vld [vmem:[%s199 + $0x308] sm:$0xff]
        %v369 = vld [vmem:[%s199 + $0x310] sm:$0xff]
        %v370 = vld [vmem:[%s199 + $0x318] sm:$0xff]
        %v371 = vld [vmem:[%s199 + $0x320] sm:$0xff]
        %v372 = vld [vmem:[%s199 + $0x328] sm:$0xff]
        %v373 = vld [vmem:[%s199 + $0x330] sm:$0xff]
        %v374 = vld [vmem:[%s199 + $0x338] sm:$0xff]
        %v375 = vld [vmem:[%s199 + $0x340] sm:$0xff]
        %v376 = vld [vmem:[%s199 + $0x348] sm:$0xff]
        %v377 = vld [vmem:[%s199 + $0x350] sm:$0xff]
        %v378 = vld [vmem:[%s199 + $0x358] sm:$0xff]
        %v379 = vld [vmem:[%s199 + $0x360] sm:$0xff]
        %v380 = vld [vmem:[%s199 + $0x368] sm:$0xff]
        %v381 = vld [vmem:[%s199 + $0x370] sm:$0xff]
        %v382 = vld [vmem:[%s199 + $0x378] sm:$0xff]
        %v383 = vld [vmem:[%s199 + $0x380] sm:$0xff]
        %v384 = vld [vmem:[%s199 + $0x388] sm:$0xff]
        %v385 = vld [vmem:[%s199 + $0x390] sm:$0xff]
        %v386 = vld [vmem:[%s199 + $0x398] sm:$0xff]
        %v387 = vld [vmem:[%s199 + $0x3a0] sm:$0xff]
        %v388 = vld [vmem:[%s199 + $0x3a8] sm:$0xff]
        %v389 = vld [vmem:[%s199 + $0x3b0] sm:$0xff]
        %v390 = vld [vmem:[%s199 + $0x3b8] sm:$0xff]
        %v391 = vld [vmem:[%s199 + $0x3c0] sm:$0xff]
        %v392 = vld [vmem:[%s199 + $0x3c8] sm:$0xff]
        %v393 = vld [vmem:[%s199 + $0x3d0] sm:$0xff]
        %v394 = vld [vmem:[%s199 + $0x3d8] sm:$0xff]
        %v395 = vld [vmem:[%s199 + $0x3e0] sm:$0xff]
        %v396 = vld [vmem:[%s199 + $0x3e8] sm:$0xff]
        %v397 = vld [vmem:[%s199 + $0x3f0] sm:$0xff]
        %v398 = vld [vmem:[%s199 + $0x3f8] sm:$0xff]
        %v399 = vld [vmem:[%s199 + $0x400] sm:$0xff]
        %v400 = vld [vmem:[%s199 + $0x408] sm:$0xff]
        %v401 = vld [vmem:[%s199 + $0x410] sm:$0xff]
        %v402 = vld [vmem:[%s199 + $0x418] sm:$0xff]
        %v403 = vld [vmem:[%s199 + $0x420] sm:$0xff]
        %v404 = vld [vmem:[%s199 + $0x428] sm:$0xff]
        %v405 = vld [vmem:[%s199 + $0x430] sm:$0xff]
        %v406 = vld [vmem:[%s199 + $0x438] sm:$0xff]
        %v407 = vld [vmem:[%s199 + $0x440] sm:$0xff]
        %v408 = vld [vmem:[%s199 + $0x448] sm:$0xff]
        %v409 = vld [vmem:[%s199 + $0x450] sm:$0xff]
        %v410 = vld [vmem:[%s199 + $0x458] sm:$0xff]
        %v411 = vld [vmem:[%s199 + $0x460] sm:$0xff]
        %v412 = vld [vmem:[%s199 + $0x468] sm:$0xff]
        %v413 = vld [vmem:[%s199 + $0x470] sm:$0xff]
        %v414 = vld [vmem:[%s199 + $0x478] sm:$0xff]
        %v415 = vld [vmem:[%s199 + $0x480] sm:$0xff]
        %v416 = vld [vmem:[%s199 + $0x488] sm:$0xff]
        %v417 = vld [vmem:[%s199 + $0x490] sm:$0xff]
        %v418 = vld [vmem:[%s199 + $0x498] sm:$0xff]
        %v419 = vld [vmem:[%s199 + $0x4a0] sm:$0xff]
        %v420 = vld [vmem:[%s199 + $0x4a8] sm:$0xff]
        %v421 = vld [vmem:[%s199 + $0x4b0] sm:$0xff]
        %v422 = vld [vmem:[%s199 + $0x4b8] sm:$0xff]
        %v423 = vld [vmem:[%s199 + $0x4c0] sm:$0xff]
        %v424 = vld [vmem:[%s199 + $0x4c8] sm:$0xff]
        %v425 = vld [vmem:[%s199 + $0x4d0] sm:$0xff]
        %v426 = vld [vmem:[%s199 + $0x4d8] sm:$0xff]
        %v427 = vld [vmem:[%s199 + $0x4e0] sm:$0xff]
        %v428 = vld [vmem:[%s199 + $0x4e8] sm:$0xff]
        %v429 = vld [vmem:[%s199 + $0x4f0] sm:$0xff]
        %v430 = vld [vmem:[%s199 + $0x4f8] sm:$0xff]
        %v431 = vld [vmem:[%s199 + $0x500] sm:$0xff]
        %v432 = vld [vmem:[%s199 + $0x508] sm:$0xff]
        %v433 = vld [vmem:[%s199 + $0x510] sm:$0xff]
        %v434 = vld [vmem:[%s199 + $0x518] sm:$0xff]
        %v435 = vld [vmem:[%s199 + $0x520] sm:$0xff]
        %v436 = vld [vmem:[%s199 + $0x528] sm:$0xff]
        %v437 = vld [vmem:[%s199 + $0x530] sm:$0xff]
        %v438 = vld [vmem:[%s199 + $0x538] sm:$0xff]
        %v439 = vld [vmem:[%s199 + $0x540] sm:$0xff]
        %v440 = vld [vmem:[%s199 + $0x548] sm:$0xff]
        %v441 = vld [vmem:[%s199 + $0x550] sm:$0xff]
        %v442 = vld [vmem:[%s199 + $0x558] sm:$0xff]
        %v443 = vld [vmem:[%s199 + $0x560] sm:$0xff]
        %v444 = vld [vmem:[%s199 + $0x568] sm:$0xff]
        %v445 = vld [vmem:[%s199 + $0x570] sm:$0xff]
        %v446 = vld [vmem:[%s199 + $0x578] sm:$0xff]
        %v447 = vld [vmem:[%s199 + $0x580] sm:$0xff]
        %v448 = vld [vmem:[%s199 + $0x588] sm:$0xff]
        %v449 = vld [vmem:[%s199 + $0x590] sm:$0xff]
        %v450 = vld [vmem:[%s199 + $0x598] sm:$0xff]
        %v451 = vld [vmem:[%s199 + $0x5a0] sm:$0xff]
        %v452 = vld [vmem:[%s199 + $0x5a8] sm:$0xff]
        %v453 = vld [vmem:[%s199 + $0x5b0] sm:$0xff]
        %v454 = vld [vmem:[%s199 + $0x5b8] sm:$0xff]
        %v455 = vld [vmem:[%s199 + $0x5c0] sm:$0xff]
        %v456 = vld [vmem:[%s199 + $0x5c8] sm:$0xff]
        %v457 = vld [vmem:[%s199 + $0x5d0] sm:$0xff]
        %v458 = vld [vmem:[%s199 + $0x5d8] sm:$0xff]
        %v459 = vld [vmem:[%s199 + $0x5e0] sm:$0xff]
        %v460 = vld [vmem:[%s199 + $0x5e8] sm:$0xff]
        %v461 = vld [vmem:[%s199 + $0x5f0] sm:$0xff]
        %v462 = vld [vmem:[%s199 + $0x5f8] sm:$0xff]
        %v463 = vld [vmem:[%s199 + $0x600] sm:$0xff]
        %v464 = vld [vmem:[%s199 + $0x608] sm:$0xff]
        %v465 = vld [vmem:[%s199 + $0x610] sm:$0xff]
        %v466 = vld [vmem:[%s199 + $0x618] sm:$0xff]
        %v467 = vld [vmem:[%s199 + $0x620] sm:$0xff]
        %v468 = vld [vmem:[%s199 + $0x628] sm:$0xff]
        %v469 = vld [vmem:[%s199 + $0x630] sm:$0xff]
        %v470 = vld [vmem:[%s199 + $0x638] sm:$0xff]
        %v471 = vld [vmem:[%s199 + $0x640] sm:$0xff]
        %v472 = vld [vmem:[%s199 + $0x648] sm:$0xff]
        %v473 = vld [vmem:[%s199 + $0x650] sm:$0xff]
        %v474 = vld [vmem:[%s199 + $0x658] sm:$0xff]
        %v475 = vld [vmem:[%s199 + $0x660] sm:$0xff]
        %v476 = vld [vmem:[%s199 + $0x668] sm:$0xff]
        %v477 = vld [vmem:[%s199 + $0x670] sm:$0xff]
        %v478 = vld [vmem:[%s199 + $0x678] sm:$0xff]
        %v479 = vld [vmem:[%s199 + $0x680] sm:$0xff]
        %v480 = vld [vmem:[%s199 + $0x688] sm:$0xff]
        %v481 = vld [vmem:[%s199 + $0x690] sm:$0xff]
        %v482 = vld [vmem:[%s199 + $0x698] sm:$0xff]
        %v483 = vld [vmem:[%s199 + $0x6a0] sm:$0xff]
        %v484 = vld [vmem:[%s199 + $0x6a8] sm:$0xff]
        %v485 = vld [vmem:[%s199 + $0x6b0] sm:$0xff]
        %v486 = vld [vmem:[%s199 + $0x6b8] sm:$0xff]
        %v487 = vld [vmem:[%s199 + $0x6c0] sm:$0xff]
        %v488 = vld [vmem:[%s199 + $0x6c8] sm:$0xff]
        %v489 = vld [vmem:[%s199 + $0x6d0] sm:$0xff]
        %v490 = vld [vmem:[%s199 + $0x6d8] sm:$0xff]
        %v491 = vld [vmem:[%s199 + $0x6e0] sm:$0xff]
        %v492 = vld [vmem:[%s199 + $0x6e8] sm:$0xff]
        %v493 = vld [vmem:[%s199 + $0x6f0] sm:$0xff]
        %v494 = vld [vmem:[%s199 + $0x6f8] sm:$0xff]
        %v495 = vld [vmem:[%s199 + $0x700] sm:$0xff]
        %v496 = vld [vmem:[%s199 + $0x708] sm:$0xff]
        %v497 = vld [vmem:[%s199 + $0x710] sm:$0xff]
        %v498 = vld [vmem:[%s199 + $0x718] sm:$0xff]
        %v499 = vld [vmem:[%s199 + $0x720] sm:$0xff]
        %v500 = vld [vmem:[%s199 + $0x728] sm:$0xff]
        %v501 = vld [vmem:[%s199 + $0x730] sm:$0xff]
        %v502 = vld [vmem:[%s199 + $0x738] sm:$0xff]
        %v503 = vld [vmem:[%s199 + $0x740] sm:$0xff]
        %v504 = vld [vmem:[%s199 + $0x748] sm:$0xff]
        %v505 = vld [vmem:[%s199 + $0x750] sm:$0xff]
        %v506 = vld [vmem:[%s199 + $0x758] sm:$0xff]
        %v507 = vld [vmem:[%s199 + $0x760] sm:$0xff]
        %v508 = vld [vmem:[%s199 + $0x768] sm:$0xff]
        %v509 = vld [vmem:[%s199 + $0x770] sm:$0xff]
        %v510 = vld [vmem:[%s199 + $0x778] sm:$0xff]
        %v511 = vld [vmem:[%s199 + $0x780] sm:$0xff]
        %v512 = vld [vmem:[%s199 + $0x788] sm:$0xff]
        %v513 = vld [vmem:[%s199 + $0x790] sm:$0xff]
        %v514 = vld [vmem:[%s199 + $0x798] sm:$0xff]
        %v515 = vld [vmem:[%s199 + $0x7a0] sm:$0xff]
        %v516 = vld [vmem:[%s199 + $0x7a8] sm:$0xff]
        %v517 = vld [vmem:[%s199 + $0x7b0] sm:$0xff]
        %v518 = vld [vmem:[%s199 + $0x7b8] sm:$0xff]
        %v519 = vld [vmem:[%s199 + $0x7c0] sm:$0xff]
        %v520 = vld [vmem:[%s199 + $0x7c8] sm:$0xff]
        %v521 = vld [vmem:[%s199 + $0x7d0] sm:$0xff]
        %v522 = vld [vmem:[%s199 + $0x7d8] sm:$0xff]
        %v523 = vld [vmem:[%s199 + $0x7e0] sm:$0xff]
        %v524 = vld [vmem:[%s199 + $0x7e8] sm:$0xff]
        %v525 = vld [vmem:[%s199 + $0x7f0] sm:$0xff]
        %v526 = vld [vmem:[%s199 + $0x7f8] sm:$0xff]
        %v527 = vld [vmem:[%s199 + $0x800] sm:$0xff]
        %v528 = vld [vmem:[%s199 + $0x808] sm:$0xff]
        %v529 = vld [vmem:[%s199 + $0x810] sm:$0xff]
        %v530 = vld [vmem:[%s199 + $0x818] sm:$0xff]
        %v531 = vld [vmem:[%s199 + $0x820] sm:$0xff]
        %v532 = vld [vmem:[%s199 + $0x828] sm:$0xff]
        %v533 = vld [vmem:[%s199 + $0x830] sm:$0xff]
        %v534 = vld [vmem:[%s199 + $0x838] sm:$0xff]
        %v535 = vld [vmem:[%s199 + $0x840] sm:$0xff]
        %v536 = vld [vmem:[%s199 + $0x848] sm:$0xff]
        %v537 = vld [vmem:[%s199 + $0x850] sm:$0xff]
        %v538 = vld [vmem:[%s199 + $0x858] sm:$0xff]
        %v539 = vld [vmem:[%s199 + $0x860] sm:$0xff]
        %v540 = vld [vmem:[%s199 + $0x868] sm:$0xff]
        %v541 = vld [vmem:[%s199 + $0x870] sm:$0xff]
        %v542 = vld [vmem:[%s199 + $0x878] sm:$0xff]
        %v543 = vld [vmem:[%s199 + $0x880] sm:$0xff]
        %v544 = vld [vmem:[%s199 + $0x888] sm:$0xff]
        %v545 = vld [vmem:[%s199 + $0x890] sm:$0xff]
        %v546 = vld [vmem:[%s199 + $0x898] sm:$0xff]
        %v547 = vld [vmem:[%s199 + $0x8a0] sm:$0xff]
        %v548 = vld [vmem:[%s199 + $0x8a8] sm:$0xff]
        %v549 = vld [vmem:[%s199 + $0x8b0] sm:$0xff]
        %v550 = vld [vmem:[%s199 + $0x8b8] sm:$0xff]
        %v551 = vld [vmem:[%s199 + $0x8c0] sm:$0xff]
        %v552 = vld [vmem:[%s199 + $0x8c8] sm:$0xff]
        %v553 = vld [vmem:[%s199 + $0x8d0] sm:$0xff]
        %v554 = vld [vmem:[%s199 + $0x8d8] sm:$0xff]
        %v555 = vld [vmem:[%s199 + $0x8e0] sm:$0xff]
        %v556 = vld [vmem:[%s199 + $0x8e8] sm:$0xff]
        %v557 = vld [vmem:[%s199 + $0x8f0] sm:$0xff]
        %v558 = vld [vmem:[%s199 + $0x8f8] sm:$0xff]
        %v559 = vld [vmem:[%s199 + $0x900] sm:$0xff]
        %v560 = vld [vmem:[%s199 + $0x908] sm:$0xff]
        %v561 = vld [vmem:[%s199 + $0x910] sm:$0xff]
        %v562 = vld [vmem:[%s199 + $0x918] sm:$0xff]
        %v563 = vld [vmem:[%s199 + $0x920] sm:$0xff]
        %v564 = vld [vmem:[%s199 + $0x928] sm:$0xff]
        %v565 = vld [vmem:[%s199 + $0x930] sm:$0xff]
        %v566 = vld [vmem:[%s199 + $0x938] sm:$0xff]
        %v567 = vld [vmem:[%s199 + $0x940] sm:$0xff]
        %v568 = vld [vmem:[%s199 + $0x948] sm:$0xff]
        %v569 = vld [vmem:[%s199 + $0x950] sm:$0xff]
        %v570 = vld [vmem:[%s199 + $0x958] sm:$0xff]
        %v571 = vld [vmem:[%s199 + $0x960] sm:$0xff]
        %v572 = vld [vmem:[%s199 + $0x968] sm:$0xff]
        %v573 = vld [vmem:[%s199 + $0x970] sm:$0xff]
        %v574 = vld [vmem:[%s199 + $0x978] sm:$0xff]
        %v575 = vld [vmem:[%s199 + $0x980] sm:$0xff]
        %v576 = vld [vmem:[%s199 + $0x988] sm:$0xff]
        %v577 = vld [vmem:[%s199 + $0x990] sm:$0xff]
        %v578 = vld [vmem:[%s199 + $0x998] sm:$0xff]
        %v579 = vld [vmem:[%s199 + $0x9a0] sm:$0xff]
        %v580 = vld [vmem:[%s199 + $0x9a8] sm:$0xff]
        %v581 = vld [vmem:[%s199 + $0x9b0] sm:$0xff]
        %v582 = vld [vmem:[%s199 + $0x9b8] sm:$0xff]
        %v583 = vld [vmem:[%s199 + $0x9c0] sm:$0xff]
        %v584 = vld [vmem:[%s199 + $0x9c8] sm:$0xff]
        %v585 = vld [vmem:[%s199 + $0x9d0] sm:$0xff]
        %v586 = vld [vmem:[%s199 + $0x9d8] sm:$0xff]
        %v587 = vld [vmem:[%s199 + $0x9e0] sm:$0xff]
        %v588 = vld [vmem:[%s199 + $0x9e8] sm:$0xff]
        %v589 = vld [vmem:[%s199 + $0x9f0] sm:$0xff]
        %v590 = vld [vmem:[%s199 + $0x9f8] sm:$0xff]
        %v591 = vld [vmem:[%s199 + $0xa00] sm:$0xff]
        %v592 = vld [vmem:[%s199 + $0xa08] sm:$0xff]
        %v593 = vld [vmem:[%s199 + $0xa10] sm:$0xff]
        %v594 = vld [vmem:[%s199 + $0xa18] sm:$0xff]
        %v595 = vld [vmem:[%s199 + $0xa20] sm:$0xff]
        %v596 = vld [vmem:[%s199 + $0xa28] sm:$0xff]
        %v597 = vld [vmem:[%s199 + $0xa30] sm:$0xff]
        %v598 = vld [vmem:[%s199 + $0xa38] sm:$0xff]
        %v599 = vld [vmem:[%s199 + $0xa40] sm:$0xff]
        %v600 = vld [vmem:[%s199 + $0xa48] sm:$0xff]
        %v601 = vld [vmem:[%s199 + $0xa50] sm:$0xff]
        %v602 = vld [vmem:[%s199 + $0xa58] sm:$0xff]
        %v603 = vld [vmem:[%s199 + $0xa60] sm:$0xff]
        %v604 = vld [vmem:[%s199 + $0xa68] sm:$0xff]
        %v605 = vld [vmem:[%s199 + $0xa70] sm:$0xff]
        %v606 = vld [vmem:[%s199 + $0xa78] sm:$0xff]
        %v607 = vld [vmem:[%s199 + $0xa80] sm:$0xff]
        %v608 = vld [vmem:[%s199 + $0xa88] sm:$0xff]
        %v609 = vld [vmem:[%s199 + $0xa90] sm:$0xff]
        %v610 = vld [vmem:[%s199 + $0xa98] sm:$0xff]
        %v611 = vld [vmem:[%s199 + $0xaa0] sm:$0xff]
        %v612 = vld [vmem:[%s199 + $0xaa8] sm:$0xff]
        %v613 = vld [vmem:[%s199 + $0xab0] sm:$0xff]
        %v614 = vld [vmem:[%s199 + $0xab8] sm:$0xff]
        %v615 = vld [vmem:[%s199 + $0xac0] sm:$0xff]
        %v616 = vld [vmem:[%s199 + $0xac8] sm:$0xff]
        %v617 = vld [vmem:[%s199 + $0xad0] sm:$0xff]
        %v618 = vld [vmem:[%s199 + $0xad8] sm:$0xff]
        %v619 = vld [vmem:[%s199 + $0xae0] sm:$0xff]
        %v620 = vld [vmem:[%s199 + $0xae8] sm:$0xff]
        %v621 = vld [vmem:[%s199 + $0xaf0] sm:$0xff]
        %v622 = vld [vmem:[%s199 + $0xaf8] sm:$0xff]
        %v623 = vld [vmem:[%s199 + $0xb00] sm:$0xff]
        %v624 = vld [vmem:[%s199 + $0xb08] sm:$0xff]
        %v625 = vld [vmem:[%s199 + $0xb10] sm:$0xff]
        %v626 = vld [vmem:[%s199 + $0xb18] sm:$0xff]
        %v627 = vld [vmem:[%s199 + $0xb20] sm:$0xff]
        %v628 = vld [vmem:[%s199 + $0xb28] sm:$0xff]
        %v629 = vld [vmem:[%s199 + $0xb30] sm:$0xff]
        %v630 = vld [vmem:[%s199 + $0xb38] sm:$0xff]
        %v631 = vld [vmem:[%s199 + $0xb40] sm:$0xff]
        %v632 = vld [vmem:[%s199 + $0xb48] sm:$0xff]
        %v633 = vld [vmem:[%s199 + $0xb50] sm:$0xff]
        %v634 = vld [vmem:[%s199 + $0xb58] sm:$0xff]
        %v635 = vld [vmem:[%s199 + $0xb60] sm:$0xff]
        %v636 = vld [vmem:[%s199 + $0xb68] sm:$0xff]
        %v637 = vld [vmem:[%s199 + $0xb70] sm:$0xff]
        %v638 = vld [vmem:[%s199 + $0xb78] sm:$0xff]
        %v639 = vld [vmem:[%s199 + $0xb80] sm:$0xff]
        %v640 = vld [vmem:[%s199 + $0xb88] sm:$0xff]
        %v641 = vld [vmem:[%s199 + $0xb90] sm:$0xff]
        %v642 = vld [vmem:[%s199 + $0xb98] sm:$0xff]
        %v643 = vld [vmem:[%s199 + $0xba0] sm:$0xff]
        %v644 = vld [vmem:[%s199 + $0xba8] sm:$0xff]
        %v645 = vld [vmem:[%s199 + $0xbb0] sm:$0xff]
        %v646 = vld [vmem:[%s199 + $0xbb8] sm:$0xff]
        %v647 = vld [vmem:[%s199 + $0xbc0] sm:$0xff]
        %v648 = vld [vmem:[%s199 + $0xbc8] sm:$0xff]
        %v649 = vld [vmem:[%s199 + $0xbd0] sm:$0xff]
        %v650 = vld [vmem:[%s199 + $0xbd8] sm:$0xff]
        %v651 = vld [vmem:[%s199 + $0xbe0] sm:$0xff]
        %v652 = vld [vmem:[%s199 + $0xbe8] sm:$0xff]
        %v653 = vld [vmem:[%s199 + $0xbf0] sm:$0xff]
        %v654 = vld [vmem:[%s199 + $0xbf8] sm:$0xff]
        %v655 = vld [vmem:[%s199 + $0xc00] sm:$0xff]
        %v656 = vld [vmem:[%s199 + $0xc08] sm:$0xff]
        %v657 = vld [vmem:[%s199 + $0xc10] sm:$0xff]
        %v658 = vld [vmem:[%s199 + $0xc18] sm:$0xff]
        %v659 = vld [vmem:[%s199 + $0xc20] sm:$0xff]
        %v660 = vld [vmem:[%s199 + $0xc28] sm:$0xff]
        %v661 = vld [vmem:[%s199 + $0xc30] sm:$0xff]
        %v662 = vld [vmem:[%s199 + $0xc38] sm:$0xff]
        %v663 = vld [vmem:[%s199 + $0xc40] sm:$0xff]
        %v664 = vld [vmem:[%s199 + $0xc48] sm:$0xff]
        %v665 = vld [vmem:[%s199 + $0xc50] sm:$0xff]
        %v666 = vld [vmem:[%s199 + $0xc58] sm:$0xff]
        %v667 = vld [vmem:[%s199 + $0xc60] sm:$0xff]
        %v668 = vld [vmem:[%s199 + $0xc68] sm:$0xff]
        %v669 = vld [vmem:[%s199 + $0xc70] sm:$0xff]
        %v670 = vld [vmem:[%s199 + $0xc78] sm:$0xff]
        %v671 = vld [vmem:[%s199 + $0xc80] sm:$0xff]
        %v672 = vld [vmem:[%s199 + $0xc88] sm:$0xff]
        %v673 = vld [vmem:[%s199 + $0xc90] sm:$0xff]
        %v674 = vld [vmem:[%s199 + $0xc98] sm:$0xff]
        %v675 = vld [vmem:[%s199 + $0xca0] sm:$0xff]
        %v676 = vld [vmem:[%s199 + $0xca8] sm:$0xff]
        %v677 = vld [vmem:[%s199 + $0xcb0] sm:$0xff]
        %v678 = vld [vmem:[%s199 + $0xcb8] sm:$0xff]
        %v679 = vld [vmem:[%s199 + $0xcc0] sm:$0xff]
        %v680 = vld [vmem:[%s199 + $0xcc8] sm:$0xff]
        %v681 = vld [vmem:[%s199 + $0xcd0] sm:$0xff]
        %v682 = vld [vmem:[%s199 + $0xcd8] sm:$0xff]
        %v683 = vld [vmem:[%s199 + $0xce0] sm:$0xff]
        %v684 = vld [vmem:[%s199 + $0xce8] sm:$0xff]
        %v685 = vld [vmem:[%s199 + $0xcf0] sm:$0xff]
        %v686 = vld [vmem:[%s199 + $0xcf8] sm:$0xff]
        %v687 = vld [vmem:[%s199 + $0xd00] sm:$0xff]
        %v688 = vld [vmem:[%s199 + $0xd08] sm:$0xff]
        %v689 = vld [vmem:[%s199 + $0xd10] sm:$0xff]
        %v690 = vld [vmem:[%s199 + $0xd18] sm:$0xff]
        %v691 = vld [vmem:[%s199 + $0xd20] sm:$0xff]
        %v692 = vld [vmem:[%s199 + $0xd28] sm:$0xff]
        %v693 = vld [vmem:[%s199 + $0xd30] sm:$0xff]
        %v694 = vld [vmem:[%s199 + $0xd38] sm:$0xff]
        %v695 = vld [vmem:[%s199 + $0xd40] sm:$0xff]
        %v696 = vld [vmem:[%s199 + $0xd48] sm:$0xff]
        %v697 = vld [vmem:[%s199 + $0xd50] sm:$0xff]
        %v698 = vld [vmem:[%s199 + $0xd58] sm:$0xff]
        %v699 = vld [vmem:[%s199 + $0xd60] sm:$0xff]
        %v700 = vld [vmem:[%s199 + $0xd68] sm:$0xff]
        %v701 = vld [vmem:[%s199 + $0xd70] sm:$0xff]
        %v702 = vld [vmem:[%s199 + $0xd78] sm:$0xff]
        %v703 = vld [vmem:[%s199 + $0xd80] sm:$0xff]
        %v704 = vld [vmem:[%s199 + $0xd88] sm:$0xff]
        %v705 = vld [vmem:[%s199 + $0xd90] sm:$0xff]
        %v706 = vld [vmem:[%s199 + $0xd98] sm:$0xff]
        %v707 = vld [vmem:[%s199 + $0xda0] sm:$0xff]
        %v708 = vld [vmem:[%s199 + $0xda8] sm:$0xff]
        %v709 = vld [vmem:[%s199 + $0xdb0] sm:$0xff]
        %v710 = vld [vmem:[%s199 + $0xdb8] sm:$0xff]
        %v711 = vld [vmem:[%s199 + $0xdc0] sm:$0xff]
        %v712 = vld [vmem:[%s199 + $0xdc8] sm:$0xff]
        %v713 = vld [vmem:[%s199 + $0xdd0] sm:$0xff]
        %v714 = vld [vmem:[%s199 + $0xdd8] sm:$0xff]
        %v715 = vld [vmem:[%s199 + $0xde0] sm:$0xff]
        %v716 = vld [vmem:[%s199 + $0xde8] sm:$0xff]
        %v717 = vld [vmem:[%s199 + $0xdf0] sm:$0xff]
        %v718 = vld [vmem:[%s199 + $0xdf8] sm:$0xff]
        %v719 = vld [vmem:[%s199 + $0xe00] sm:$0xff]
        %v720 = vld [vmem:[%s199 + $0xe08] sm:$0xff]
        %v721 = vld [vmem:[%s199 + $0xe10] sm:$0xff]
        %v722 = vld [vmem:[%s199 + $0xe18] sm:$0xff]
        %v723 = vld [vmem:[%s199 + $0xe20] sm:$0xff]
        %v724 = vld [vmem:[%s199 + $0xe28] sm:$0xff]
        %v725 = vld [vmem:[%s199 + $0xe30] sm:$0xff]
        %v726 = vld [vmem:[%s199 + $0xe38] sm:$0xff]
        %v727 = vld [vmem:[%s199 + $0xe40] sm:$0xff]
        %v728 = vld [vmem:[%s199 + $0xe48] sm:$0xff]
        %v729 = vld [vmem:[%s199 + $0xe50] sm:$0xff]
        %v730 = vld [vmem:[%s199 + $0xe58] sm:$0xff]
        %v731 = vld [vmem:[%s199 + $0xe60] sm:$0xff]
        %v732 = vld [vmem:[%s199 + $0xe68] sm:$0xff]
        %v733 = vld [vmem:[%s199 + $0xe70] sm:$0xff]
        %v734 = vld [vmem:[%s199 + $0xe78] sm:$0xff]
        %v735 = vld [vmem:[%s199 + $0xe80] sm:$0xff]
        %v736 = vld [vmem:[%s199 + $0xe88] sm:$0xff]
        %v737 = vld [vmem:[%s199 + $0xe90] sm:$0xff]
        %v738 = vld [vmem:[%s199 + $0xe98] sm:$0xff]
        %v739 = vld [vmem:[%s199 + $0xea0] sm:$0xff]
        %v740 = vld [vmem:[%s199 + $0xea8] sm:$0xff]
        %v741 = vld [vmem:[%s199 + $0xeb0] sm:$0xff]
        %v742 = vld [vmem:[%s199 + $0xeb8] sm:$0xff]
        %v743 = vld [vmem:[%s199 + $0xec0] sm:$0xff]
        %v744 = vld [vmem:[%s199 + $0xec8] sm:$0xff]
        %v745 = vld [vmem:[%s199 + $0xed0] sm:$0xff]
        %v746 = vld [vmem:[%s199 + $0xed8] sm:$0xff]
        %v747 = vld [vmem:[%s199 + $0xee0] sm:$0xff]
        %v748 = vld [vmem:[%s199 + $0xee8] sm:$0xff]
        %v749 = vld [vmem:[%s199 + $0xef0] sm:$0xff]
        %v750 = vld [vmem:[%s199 + $0xef8] sm:$0xff]
        %v751 = vld [vmem:[%s199 + $0xf00] sm:$0xff]
        %v752 = vld [vmem:[%s199 + $0xf08] sm:$0xff]
        %v753 = vld [vmem:[%s199 + $0xf10] sm:$0xff]
        %v754 = vld [vmem:[%s199 + $0xf18] sm:$0xff]
        %v755 = vld [vmem:[%s199 + $0xf20] sm:$0xff]
        %v756 = vld [vmem:[%s199 + $0xf28] sm:$0xff]
        %v757 = vld [vmem:[%s199 + $0xf30] sm:$0xff]
        %v758 = vld [vmem:[%s199 + $0xf38] sm:$0xff]
        %v759 = vld [vmem:[%s199 + $0xf40] sm:$0xff]
        %v760 = vld [vmem:[%s199 + $0xf48] sm:$0xff]
        %v761 = vld [vmem:[%s199 + $0xf50] sm:$0xff]
        %v762 = vld [vmem:[%s199 + $0xf58] sm:$0xff]
        %v763 = vld [vmem:[%s199 + $0xf60] sm:$0xff]
        %v764 = vld [vmem:[%s199 + $0xf68] sm:$0xff]
        %v765 = vld [vmem:[%s199 + $0xf70] sm:$0xff]
        %v766 = vld [vmem:[%s199 + $0xf78] sm:$0xff]
        %v767 = vld [vmem:[%s199 + $0xf80] sm:$0xff]
        %v768 = vld [vmem:[%s199 + $0xf88] sm:$0xff]
        %v769 = vld [vmem:[%s199 + $0xf90] sm:$0xff]
        %v770 = vld [vmem:[%s199 + $0xf98] sm:$0xff]
        %v771 = vld [vmem:[%s199 + $0xfa0] sm:$0xff]
        %v772 = vld [vmem:[%s199 + $0xfa8] sm:$0xff]
        %v773 = vld [vmem:[%s199 + $0xfb0] sm:$0xff]
        %v774 = vld [vmem:[%s199 + $0xfb8] sm:$0xff]
        %v775 = vld [vmem:[%s199 + $0xfc0] sm:$0xff]
        %v776 = vld [vmem:[%s199 + $0xfc8] sm:$0xff]
        %v777 = vld [vmem:[%s199 + $0xfd0] sm:$0xff]
        %v778 = vld [vmem:[%s199 + $0xfd8] sm:$0xff]
        %v779 = vld [vmem:[%s199 + $0xfe0] sm:$0xff]
        %v780 = vld [vmem:[%s199 + $0xfe8] sm:$0xff]
        %v781 = vld [vmem:[%s199 + $0xff0] sm:$0xff]
        %v782 = vld [vmem:[%s199 + $0xff8] sm:$0xff]
        %783 = vmatprep.subr.mxu0 %v272
        %784 = vmatpush1.xpose.msra.mxu0 %v271
        %785 = vmatprep.subr.mxu0 %v304
        %786 = vmatpush1.xpose.msra.mxu0 %v303
        %787 = vmatprep.subr.mxu0 %v336
        %788 = vmatpush1.xpose.msra.mxu0 %v335
        %789 = vmatprep.subr.mxu0 %v368
        %790 = vmatpush1.xpose.msra.mxu0 %v367
        %791 = vmatprep.subr.mxu0 %v400
        %792 = vmatpush1.xpose.msra.mxu0 %v399
        %793 = vmatprep.subr.mxu0 %v432
        %794 = vmatpush1.xpose.msra.mxu0 %v431
        %795 = vmatprep.subr.mxu0 %v464
        %796 = vmatpush1.xpose.msra.mxu0 %v463
        %797 = vmatprep.subr.mxu0 %v496
        %798 = vmatpush1.xpose.msra.mxu0 %v495
        %799 = vmatprep.subr.mxu0 %v528
        %800 = vmatpush1.xpose.msra.mxu0 %v527
        %801 = vmatprep.subr.mxu0 %v560
        %802 = vmatpush1.xpose.msra.mxu0 %v559
        %803 = vmatprep.subr.mxu0 %v592
        %804 = vmatpush1.xpose.msra.mxu0 %v591
        %805 = vmatprep.subr.mxu0 %v624
        %806 = vmatpush1.xpose.msra.mxu0 %v623
        %807 = vmatprep.subr.mxu0 %v656
        %808 = vmatpush1.xpose.msra.mxu0 %v655
        %809 = vmatprep.subr.mxu0 %v688
        %810 = vmatpush1.xpose.msra.mxu0 %v687
        %811 = vmatprep.subr.mxu0 %v720
        %812 = vmatpush1.xpose.msra.mxu0 %v719
        %813 = vmatprep.subr.mxu0 %v752
        %814 = vmatpush1.xpose.msra.mxu0 %v751
        %815 = vmatprep.subr.mxu0 0.0
        %816 = vmatpush1.xpose.msra.mxu0 0.0
        %817 = vmatprep.subr.mxu0 0.0
        %818 = vmatpush1.xpose.msra.mxu0 0.0
        %819 = vmatprep.subr.mxu0 0.0
        %820 = vmatpush1.xpose.msra.mxu0 0.0
        %821 = vmatprep.subr.mxu0 0.0
        %822 = vmatpush1.xpose.msra.mxu0 0.0
        %823 = vmatprep.subr.mxu0 0.0
        %824 = vmatpush1.xpose.msra.mxu0 0.0
        %825 = vmatprep.subr.mxu0 0.0
        %826 = vmatpush1.xpose.msra.mxu0 0.0
        %827 = vmatprep.subr.mxu0 0.0
        %828 = vmatpush1.xpose.msra.mxu0 0.0
        %829 = vmatprep.subr.mxu0 0.0
        %830 = vmatpush1.xpose.msra.mxu0 0.0
        %831 = vmatprep.subr.mxu0 0.0
        %832 = vmatpush1.xpose.msra.mxu0 0.0
        %833 = vmatprep.subr.mxu0 0.0
        %834 = vmatpush1.xpose.msra.mxu0 0.0
        %835 = vmatprep.subr.mxu0 0.0
        %836 = vmatpush1.xpose.msra.mxu0 0.0
        %837 = vmatprep.subr.mxu0 0.0
        %838 = vmatpush1.xpose.msra.mxu0 0.0
        %839 = vmatprep.subr.mxu0 0.0
        %840 = vmatpush1.xpose.msra.mxu0 0.0
        %841 = vmatprep.subr.mxu0 0.0
        %842 = vmatpush1.xpose.msra.mxu0 0.0
        %843 = vmatprep.subr.mxu0 0.0
        %844 = vmatpush1.xpose.msra.mxu0 0.0
        %845 = vmatprep.subr.mxu0 0.0
        %846 = vmatpush1.xpose.msra.mxu0 0.0
        %847 = vmatprep.mubr.f32.mxu0 %v239
        %848 = vmatmul.mubr.f32.gmra.mrb[0].mxu0 %v238
        %v849 = vpop.f32.mrb[0].mxu0
        %v850 = vadd.f32 0.0, %v849
        %v851 = vpop.f32.mrb[0].mxu0
        %852 = vdwg.mxu0
        %853 = vmatprep.subr.mxu0 %v274
        %854 = vmatpush1.xpose.msra.mxu0 %v273
        %855 = vmatprep.subr.mxu0 %v306
        %856 = vmatpush1.xpose.msra.mxu0 %v305
        %857 = vmatprep.subr.mxu0 %v338
        %858 = vmatpush1.xpose.msra.mxu0 %v337
        %859 = vmatprep.subr.mxu0 %v370
        %860 = vmatpush1.xpose.msra.mxu0 %v369
        %861 = vmatprep.subr.mxu0 %v402
        %862 = vmatpush1.xpose.msra.mxu0 %v401
        %863 = vmatprep.subr.mxu0 %v434
        %864 = vmatpush1.xpose.msra.mxu0 %v433
        %865 = vmatprep.subr.mxu0 %v466
        %866 = vmatpush1.xpose.msra.mxu0 %v465
        %867 = vmatprep.subr.mxu0 %v498
        %868 = vmatpush1.xpose.msra.mxu0 %v497
        %869 = vmatprep.subr.mxu0 %v530
        %870 = vmatpush1.xpose.msra.mxu0 %v529
        %871 = vmatprep.subr.mxu0 %v562
        %872 = vmatpush1.xpose.msra.mxu0 %v561
        %873 = vmatprep.subr.mxu0 %v594
        %874 = vmatpush1.xpose.msra.mxu0 %v593
        %875 = vmatprep.subr.mxu0 %v626
        %876 = vmatpush1.xpose.msra.mxu0 %v625
        %877 = vmatprep.subr.mxu0 %v658
        %878 = vmatpush1.xpose.msra.mxu0 %v657
        %879 = vmatprep.subr.mxu0 %v690
        %880 = vmatpush1.xpose.msra.mxu0 %v689
        %881 = vmatprep.subr.mxu0 %v722
        %882 = vmatpush1.xpose.msra.mxu0 %v721
        %883 = vmatprep.subr.mxu0 %v754
        %884 = vmatpush1.xpose.msra.mxu0 %v753
        %885 = vmatprep.subr.mxu0 0.0
        %886 = vmatpush1.xpose.msra.mxu0 0.0
        %887 = vmatprep.subr.mxu0 0.0
        %888 = vmatpush1.xpose.msra.mxu0 0.0
        %889 = vmatprep.subr.mxu0 0.0
        %890 = vmatpush1.xpose.msra.mxu0 0.0
        %891 = vmatprep.subr.mxu0 0.0
        %892 = vmatpush1.xpose.msra.mxu0 0.0
        %893 = vmatprep.subr.mxu0 0.0
        %894 = vmatpush1.xpose.msra.mxu0 0.0
        %895 = vmatprep.subr.mxu0 0.0
        %896 = vmatpush1.xpose.msra.mxu0 0.0
        %897 = vmatprep.subr.mxu0 0.0
        %898 = vmatpush1.xpose.msra.mxu0 0.0
        %899 = vmatprep.subr.mxu0 0.0
        %900 = vmatpush1.xpose.msra.mxu0 0.0
        %901 = vmatprep.subr.mxu0 0.0
        %902 = vmatpush1.xpose.msra.mxu0 0.0
        %903 = vmatprep.subr.mxu0 0.0
        %904 = vmatpush1.xpose.msra.mxu0 0.0
        %905 = vmatprep.subr.mxu0 0.0
        %906 = vmatpush1.xpose.msra.mxu0 0.0
        %907 = vmatprep.subr.mxu0 0.0
        %908 = vmatpush1.xpose.msra.mxu0 0.0
        %909 = vmatprep.subr.mxu0 0.0
        %910 = vmatpush1.xpose.msra.mxu0 0.0
        %911 = vmatprep.subr.mxu0 0.0
        %912 = vmatpush1.xpose.msra.mxu0 0.0
        %913 = vmatprep.subr.mxu0 0.0
        %914 = vmatpush1.xpose.msra.mxu0 0.0
        %915 = vmatprep.subr.mxu0 0.0
        %916 = vmatpush1.xpose.msra.mxu0 0.0
        %917 = vmatprep.mubr.f32.mxu0 %v241
        %918 = vmatmul.mubr.f32.gmra.mrb[0].mxu0 %v240
        %v919 = vpop.f32.mrb[0].mxu0
        %v920 = vadd.f32 %v850, %v919
        %v921 = vpop.f32.mrb[0].mxu0
        %922 = vdwg.mxu0
        %923 = vmatprep.subr.mxu0 %v276
        %924 = vmatpush1.xpose.msra.mxu0 %v275
        %925 = vmatprep.subr.mxu0 %v308
        %926 = vmatpush1.xpose.msra.mxu0 %v307
        %927 = vmatprep.subr.mxu0 %v340
        %928 = vmatpush1.xpose.msra.mxu0 %v339
        %929 = vmatprep.subr.mxu0 %v372
        %930 = vmatpush1.xpose.msra.mxu0 %v371
        %931 = vmatprep.subr.mxu0 %v404
        %932 = vmatpush1.xpose.msra.mxu0 %v403
        %933 = vmatprep.subr.mxu0 %v436
        %934 = vmatpush1.xpose.msra.mxu0 %v435
        %935 = vmatprep.subr.mxu0 %v468
        %936 = vmatpush1.xpose.msra.mxu0 %v467
        %937 = vmatprep.subr.mxu0 %v500
        %938 = vmatpush1.xpose.msra.mxu0 %v499
        %939 = vmatprep.subr.mxu0 %v532
        %940 = vmatpush1.xpose.msra.mxu0 %v531
        %941 = vmatprep.subr.mxu0 %v564
        %942 = vmatpush1.xpose.msra.mxu0 %v563
        %943 = vmatprep.subr.mxu0 %v596
        %944 = vmatpush1.xpose.msra.mxu0 %v595
        %945 = vmatprep.subr.mxu0 %v628
        %946 = vmatpush1.xpose.msra.mxu0 %v627
        %947 = vmatprep.subr.mxu0 %v660
        %948 = vmatpush1.xpose.msra.mxu0 %v659
        %949 = vmatprep.subr.mxu0 %v692
        %950 = vmatpush1.xpose.msra.mxu0 %v691
        %951 = vmatprep.subr.mxu0 %v724
        %952 = vmatpush1.xpose.msra.mxu0 %v723
        %953 = vmatprep.subr.mxu0 %v756
        %954 = vmatpush1.xpose.msra.mxu0 %v755
        %955 = vmatprep.subr.mxu0 0.0
        %956 = vmatpush1.xpose.msra.mxu0 0.0
        %957 = vmatprep.subr.mxu0 0.0
        %958 = vmatpush1.xpose.msra.mxu0 0.0
        %959 = vmatprep.subr.mxu0 0.0
        %960 = vmatpush1.xpose.msra.mxu0 0.0
        %961 = vmatprep.subr.mxu0 0.0
        %962 = vmatpush1.xpose.msra.mxu0 0.0
        %963 = vmatprep.subr.mxu0 0.0
        %964 = vmatpush1.xpose.msra.mxu0 0.0
        %965 = vmatprep.subr.mxu0 0.0
        %966 = vmatpush1.xpose.msra.mxu0 0.0
        %967 = vmatprep.subr.mxu0 0.0
        %968 = vmatpush1.xpose.msra.mxu0 0.0
        %969 = vmatprep.subr.mxu0 0.0
        %970 = vmatpush1.xpose.msra.mxu0 0.0
        %971 = vmatprep.subr.mxu0 0.0
        %972 = vmatpush1.xpose.msra.mxu0 0.0
        %973 = vmatprep.subr.mxu0 0.0
        %974 = vmatpush1.xpose.msra.mxu0 0.0
        %975 = vmatprep.subr.mxu0 0.0
        %976 = vmatpush1.xpose.msra.mxu0 0.0
        %977 = vmatprep.subr.mxu0 0.0
        %978 = vmatpush1.xpose.msra.mxu0 0.0
        %979 = vmatprep.subr.mxu0 0.0
        %980 = vmatpush1.xpose.msra.mxu0 0.0
        %981 = vmatprep.subr.mxu0 0.0
        %982 = vmatpush1.xpose.msra.mxu0 0.0
        %983 = vmatprep.subr.mxu0 0.0
        %984 = vmatpush1.xpose.msra.mxu0 0.0
        %985 = vmatprep.subr.mxu0 0.0
        %986 = vmatpush1.xpose.msra.mxu0 0.0
        %987 = vmatprep.mubr.f32.mxu0 %v243
        %988 = vmatmul.mubr.f32.gmra.mrb[0].mxu0 %v242
        %v989 = vpop.f32.mrb[0].mxu0
        %v990 = vadd.f32 %v920, %v989
        %v991 = vpop.f32.mrb[0].mxu0
        %992 = vdwg.mxu0
        %993 = vmatprep.subr.mxu0 %v278
        %994 = vmatpush1.xpose.msra.mxu0 %v277
        %995 = vmatprep.subr.mxu0 %v310
        %996 = vmatpush1.xpose.msra.mxu0 %v309
        %997 = vmatprep.subr.mxu0 %v342
        %998 = vmatpush1.xpose.msra.mxu0 %v341
        %999 = vmatprep.subr.mxu0 %v374
        %1000 = vmatpush1.xpose.msra.mxu0 %v373
        %1001 = vmatprep.subr.mxu0 %v406
        %1002 = vmatpush1.xpose.msra.mxu0 %v405
        %1003 = vmatprep.subr.mxu0 %v438
        %1004 = vmatpush1.xpose.msra.mxu0 %v437
        %1005 = vmatprep.subr.mxu0 %v470
        %1006 = vmatpush1.xpose.msra.mxu0 %v469
        %1007 = vmatprep.subr.mxu0 %v502
        %1008 = vmatpush1.xpose.msra.mxu0 %v501
        %1009 = vmatprep.subr.mxu0 %v534
        %1010 = vmatpush1.xpose.msra.mxu0 %v533
        %1011 = vmatprep.subr.mxu0 %v566
        %1012 = vmatpush1.xpose.msra.mxu0 %v565
        %1013 = vmatprep.subr.mxu0 %v598
        %1014 = vmatpush1.xpose.msra.mxu0 %v597
        %1015 = vmatprep.subr.mxu0 %v630
        %1016 = vmatpush1.xpose.msra.mxu0 %v629
        %1017 = vmatprep.subr.mxu0 %v662
        %1018 = vmatpush1.xpose.msra.mxu0 %v661
        %1019 = vmatprep.subr.mxu0 %v694
        %1020 = vmatpush1.xpose.msra.mxu0 %v693
        %1021 = vmatprep.subr.mxu0 %v726
        %1022 = vmatpush1.xpose.msra.mxu0 %v725
        %1023 = vmatprep.subr.mxu0 %v758
        %1024 = vmatpush1.xpose.msra.mxu0 %v757
        %1025 = vmatprep.subr.mxu0 0.0
        %1026 = vmatpush1.xpose.msra.mxu0 0.0
        %1027 = vmatprep.subr.mxu0 0.0
        %1028 = vmatpush1.xpose.msra.mxu0 0.0
        %1029 = vmatprep.subr.mxu0 0.0
        %1030 = vmatpush1.xpose.msra.mxu0 0.0
        %1031 = vmatprep.subr.mxu0 0.0
        %1032 = vmatpush1.xpose.msra.mxu0 0.0
        %1033 = vmatprep.subr.mxu0 0.0
        %1034 = vmatpush1.xpose.msra.mxu0 0.0
        %1035 = vmatprep.subr.mxu0 0.0
        %1036 = vmatpush1.xpose.msra.mxu0 0.0
        %1037 = vmatprep.subr.mxu0 0.0
        %1038 = vmatpush1.xpose.msra.mxu0 0.0
        %1039 = vmatprep.subr.mxu0 0.0
        %1040 = vmatpush1.xpose.msra.mxu0 0.0
        %1041 = vmatprep.subr.mxu0 0.0
        %1042 = vmatpush1.xpose.msra.mxu0 0.0
        %1043 = vmatprep.subr.mxu0 0.0
        %1044 = vmatpush1.xpose.msra.mxu0 0.0
        %1045 = vmatprep.subr.mxu0 0.0
        %1046 = vmatpush1.xpose.msra.mxu0 0.0
        %1047 = vmatprep.subr.mxu0 0.0
        %1048 = vmatpush1.xpose.msra.mxu0 0.0
        %1049 = vmatprep.subr.mxu0 0.0
        %1050 = vmatpush1.xpose.msra.mxu0 0.0
        %1051 = vmatprep.subr.mxu0 0.0
        %1052 = vmatpush1.xpose.msra.mxu0 0.0
        %1053 = vmatprep.subr.mxu0 0.0
        %1054 = vmatpush1.xpose.msra.mxu0 0.0
        %1055 = vmatprep.subr.mxu0 0.0
        %1056 = vmatpush1.xpose.msra.mxu0 0.0
        %1057 = vmatprep.mubr.f32.mxu0 %v245
        %1058 = vmatmul.mubr.f32.gmra.mrb[0].mxu0 %v244
        %v1059 = vpop.f32.mrb[0].mxu0
        %v1060 = vadd.f32 %v990, %v1059
        %v1061 = vpop.f32.mrb[0].mxu0
        %1062 = vdwg.mxu0
        %1063 = vmatprep.subr.mxu0 %v280
        %1064 = vmatpush1.xpose.msra.mxu0 %v279
        %1065 = vmatprep.subr.mxu0 %v312
        %1066 = vmatpush1.xpose.msra.mxu0 %v311
        %1067 = vmatprep.subr.mxu0 %v344
        %1068 = vmatpush1.xpose.msra.mxu0 %v343
        %1069 = vmatprep.subr.mxu0 %v376
        %1070 = vmatpush1.xpose.msra.mxu0 %v375
        %1071 = vmatprep.subr.mxu0 %v408
        %1072 = vmatpush1.xpose.msra.mxu0 %v407
        %1073 = vmatprep.subr.mxu0 %v440
        %1074 = vmatpush1.xpose.msra.mxu0 %v439
        %1075 = vmatprep.subr.mxu0 %v472
        %1076 = vmatpush1.xpose.msra.mxu0 %v471
        %1077 = vmatprep.subr.mxu0 %v504
        %1078 = vmatpush1.xpose.msra.mxu0 %v503
        %1079 = vmatprep.subr.mxu0 %v536
        %1080 = vmatpush1.xpose.msra.mxu0 %v535
        %1081 = vmatprep.subr.mxu0 %v568
        %1082 = vmatpush1.xpose.msra.mxu0 %v567
        %1083 = vmatprep.subr.mxu0 %v600
        %1084 = vmatpush1.xpose.msra.mxu0 %v599
        %1085 = vmatprep.subr.mxu0 %v632
        %1086 = vmatpush1.xpose.msra.mxu0 %v631
        %1087 = vmatprep.subr.mxu0 %v664
        %1088 = vmatpush1.xpose.msra.mxu0 %v663
        %1089 = vmatprep.subr.mxu0 %v696
        %1090 = vmatpush1.xpose.msra.mxu0 %v695
        %1091 = vmatprep.subr.mxu0 %v728
        %1092 = vmatpush1.xpose.msra.mxu0 %v727
        %1093 = vmatprep.subr.mxu0 %v760
        %1094 = vmatpush1.xpose.msra.mxu0 %v759
        %1095 = vmatprep.subr.mxu0 0.0
        %1096 = vmatpush1.xpose.msra.mxu0 0.0
        %1097 = vmatprep.subr.mxu0 0.0
        %1098 = vmatpush1.xpose.msra.mxu0 0.0
        %1099 = vmatprep.subr.mxu0 0.0
        %1100 = vmatpush1.xpose.msra.mxu0 0.0
        %1101 = vmatprep.subr.mxu0 0.0
        %1102 = vmatpush1.xpose.msra.mxu0 0.0
        %1103 = vmatprep.subr.mxu0 0.0
        %1104 = vmatpush1.xpose.msra.mxu0 0.0
        %1105 = vmatprep.subr.mxu0 0.0
        %1106 = vmatpush1.xpose.msra.mxu0 0.0
        %1107 = vmatprep.subr.mxu0 0.0
        %1108 = vmatpush1.xpose.msra.mxu0 0.0
        %1109 = vmatprep.subr.mxu0 0.0
        %1110 = vmatpush1.xpose.msra.mxu0 0.0
        %1111 = vmatprep.subr.mxu0 0.0
        %1112 = vmatpush1.xpose.msra.mxu0 0.0
        %1113 = vmatprep.subr.mxu0 0.0
        %1114 = vmatpush1.xpose.msra.mxu0 0.0
        %1115 = vmatprep.subr.mxu0 0.0
        %1116 = vmatpush1.xpose.msra.mxu0 0.0
        %1117 = vmatprep.subr.mxu0 0.0
        %1118 = vmatpush1.xpose.msra.mxu0 0.0
        %1119 = vmatprep.subr.mxu0 0.0
        %1120 = vmatpush1.xpose.msra.mxu0 0.0
        %1121 = vmatprep.subr.mxu0 0.0
        %1122 = vmatpush1.xpose.msra.mxu0 0.0
        %1123 = vmatprep.subr.mxu0 0.0
        %1124 = vmatpush1.xpose.msra.mxu0 0.0
        %1125 = vmatprep.subr.mxu0 0.0
        %1126 = vmatpush1.xpose.msra.mxu0 0.0
        %1127 = vmatprep.mubr.f32.mxu0 %v247
        %1128 = vmatmul.mubr.f32.gmra.mrb[0].mxu0 %v246
        %v1129 = vpop.f32.mrb[0].mxu0
        %v1130 = vadd.f32 %v1060, %v1129
        %v1131 = vpop.f32.mrb[0].mxu0
        %1132 = vdwg.mxu0
        %1133 = vmatprep.subr.mxu0 %v282
        %1134 = vmatpush1.xpose.msra.mxu0 %v281
        %1135 = vmatprep.subr.mxu0 %v314
        %1136 = vmatpush1.xpose.msra.mxu0 %v313
        %1137 = vmatprep.subr.mxu0 %v346
        %1138 = vmatpush1.xpose.msra.mxu0 %v345
        %1139 = vmatprep.subr.mxu0 %v378
        %1140 = vmatpush1.xpose.msra.mxu0 %v377
        %1141 = vmatprep.subr.mxu0 %v410
        %1142 = vmatpush1.xpose.msra.mxu0 %v409
        %1143 = vmatprep.subr.mxu0 %v442
        %1144 = vmatpush1.xpose.msra.mxu0 %v441
        %1145 = vmatprep.subr.mxu0 %v474
        %1146 = vmatpush1.xpose.msra.mxu0 %v473
        %1147 = vmatprep.subr.mxu0 %v506
        %1148 = vmatpush1.xpose.msra.mxu0 %v505
        %1149 = vmatprep.subr.mxu0 %v538
        %1150 = vmatpush1.xpose.msra.mxu0 %v537
        %1151 = vmatprep.subr.mxu0 %v570
        %1152 = vmatpush1.xpose.msra.mxu0 %v569
        %1153 = vmatprep.subr.mxu0 %v602
        %1154 = vmatpush1.xpose.msra.mxu0 %v601
        %1155 = vmatprep.subr.mxu0 %v634
        %1156 = vmatpush1.xpose.msra.mxu0 %v633
        %1157 = vmatprep.subr.mxu0 %v666
        %1158 = vmatpush1.xpose.msra.mxu0 %v665
        %1159 = vmatprep.subr.mxu0 %v698
        %1160 = vmatpush1.xpose.msra.mxu0 %v697
        %1161 = vmatprep.subr.mxu0 %v730
        %1162 = vmatpush1.xpose.msra.mxu0 %v729
        %1163 = vmatprep.subr.mxu0 %v762
        %1164 = vmatpush1.xpose.msra.mxu0 %v761
        %1165 = vmatprep.subr.mxu0 0.0
        %1166 = vmatpush1.xpose.msra.mxu0 0.0
        %1167 = vmatprep.subr.mxu0 0.0
        %1168 = vmatpush1.xpose.msra.mxu0 0.0
        %1169 = vmatprep.subr.mxu0 0.0
        %1170 = vmatpush1.xpose.msra.mxu0 0.0
        %1171 = vmatprep.subr.mxu0 0.0
        %1172 = vmatpush1.xpose.msra.mxu0 0.0
        %1173 = vmatprep.subr.mxu0 0.0
        %1174 = vmatpush1.xpose.msra.mxu0 0.0
        %1175 = vmatprep.subr.mxu0 0.0
        %1176 = vmatpush1.xpose.msra.mxu0 0.0
        %1177 = vmatprep.subr.mxu0 0.0
        %1178 = vmatpush1.xpose.msra.mxu0 0.0
        %1179 = vmatprep.subr.mxu0 0.0
        %1180 = vmatpush1.xpose.msra.mxu0 0.0
        %1181 = vmatprep.subr.mxu0 0.0
        %1182 = vmatpush1.xpose.msra.mxu0 0.0
        %1183 = vmatprep.subr.mxu0 0.0
        %1184 = vmatpush1.xpose.msra.mxu0 0.0
        %1185 = vmatprep.subr.mxu0 0.0
        %1186 = vmatpush1.xpose.msra.mxu0 0.0
        %1187 = vmatprep.subr.mxu0 0.0
        %1188 = vmatpush1.xpose.msra.mxu0 0.0
        %1189 = vmatprep.subr.mxu0 0.0
        %1190 = vmatpush1.xpose.msra.mxu0 0.0
        %1191 = vmatprep.subr.mxu0 0.0
        %1192 = vmatpush1.xpose.msra.mxu0 0.0
        %1193 = vmatprep.subr.mxu0 0.0
        %1194 = vmatpush1.xpose.msra.mxu0 0.0
        %1195 = vmatprep.subr.mxu0 0.0
        %1196 = vmatpush1.xpose.msra.mxu0 0.0
        %1197 = vmatprep.mubr.f32.mxu0 %v249
        %1198 = vmatmul.mubr.f32.gmra.mrb[0].mxu0 %v248
        %v1199 = vpop.f32.mrb[0].mxu0
        %v1200 = vadd.f32 %v1130, %v1199
        %v1201 = vpop.f32.mrb[0].mxu0
        %1202 = vdwg.mxu0
        %1203 = vmatprep.subr.mxu0 %v284
        %1204 = vmatpush1.xpose.msra.mxu0 %v283
        %1205 = vmatprep.subr.mxu0 %v316
        %1206 = vmatpush1.xpose.msra.mxu0 %v315
        %1207 = vmatprep.subr.mxu0 %v348
        %1208 = vmatpush1.xpose.msra.mxu0 %v347
        %1209 = vmatprep.subr.mxu0 %v380
        %1210 = vmatpush1.xpose.msra.mxu0 %v379
        %1211 = vmatprep.subr.mxu0 %v412
        %1212 = vmatpush1.xpose.msra.mxu0 %v411
        %1213 = vmatprep.subr.mxu0 %v444
        %1214 = vmatpush1.xpose.msra.mxu0 %v443
        %1215 = vmatprep.subr.mxu0 %v476
        %1216 = vmatpush1.xpose.msra.mxu0 %v475
        %1217 = vmatprep.subr.mxu0 %v508
        %1218 = vmatpush1.xpose.msra.mxu0 %v507
        %1219 = vmatprep.subr.mxu0 %v540
        %1220 = vmatpush1.xpose.msra.mxu0 %v539
        %1221 = vmatprep.subr.mxu0 %v572
        %1222 = vmatpush1.xpose.msra.mxu0 %v571
        %1223 = vmatprep.subr.mxu0 %v604
        %1224 = vmatpush1.xpose.msra.mxu0 %v603
        %1225 = vmatprep.subr.mxu0 %v636
        %1226 = vmatpush1.xpose.msra.mxu0 %v635
        %1227 = vmatprep.subr.mxu0 %v668
        %1228 = vmatpush1.xpose.msra.mxu0 %v667
        %1229 = vmatprep.subr.mxu0 %v700
        %1230 = vmatpush1.xpose.msra.mxu0 %v699
        %1231 = vmatprep.subr.mxu0 %v732
        %1232 = vmatpush1.xpose.msra.mxu0 %v731
        %1233 = vmatprep.subr.mxu0 %v764
        %1234 = vmatpush1.xpose.msra.mxu0 %v763
        %1235 = vmatprep.subr.mxu0 0.0
        %1236 = vmatpush1.xpose.msra.mxu0 0.0
        %1237 = vmatprep.subr.mxu0 0.0
        %1238 = vmatpush1.xpose.msra.mxu0 0.0
        %1239 = vmatprep.subr.mxu0 0.0
        %1240 = vmatpush1.xpose.msra.mxu0 0.0
        %1241 = vmatprep.subr.mxu0 0.0
        %1242 = vmatpush1.xpose.msra.mxu0 0.0
        %1243 = vmatprep.subr.mxu0 0.0
        %1244 = vmatpush1.xpose.msra.mxu0 0.0
        %1245 = vmatprep.subr.mxu0 0.0
        %1246 = vmatpush1.xpose.msra.mxu0 0.0
        %1247 = vmatprep.subr.mxu0 0.0
        %1248 = vmatpush1.xpose.msra.mxu0 0.0
        %1249 = vmatprep.subr.mxu0 0.0
        %1250 = vmatpush1.xpose.msra.mxu0 0.0
        %1251 = vmatprep.subr.mxu0 0.0
        %1252 = vmatpush1.xpose.msra.mxu0 0.0
        %1253 = vmatprep.subr.mxu0 0.0
        %1254 = vmatpush1.xpose.msra.mxu0 0.0
        %1255 = vmatprep.subr.mxu0 0.0
        %1256 = vmatpush1.xpose.msra.mxu0 0.0
        %1257 = vmatprep.subr.mxu0 0.0
        %1258 = vmatpush1.xpose.msra.mxu0 0.0
        %1259 = vmatprep.subr.mxu0 0.0
        %1260 = vmatpush1.xpose.msra.mxu0 0.0
        %1261 = vmatprep.subr.mxu0 0.0
        %1262 = vmatpush1.xpose.msra.mxu0 0.0
        %1263 = vmatprep.subr.mxu0 0.0
        %1264 = vmatpush1.xpose.msra.mxu0 0.0
        %1265 = vmatprep.subr.mxu0 0.0
        %1266 = vmatpush1.xpose.msra.mxu0 0.0
        %1267 = vmatprep.mubr.f32.mxu0 %v251
        %1268 = vmatmul.mubr.f32.gmra.mrb[0].mxu0 %v250
        %v1269 = vpop.f32.mrb[0].mxu0
        %v1270 = vadd.f32 %v1200, %v1269
        %v1271 = vpop.f32.mrb[0].mxu0
        %1272 = vdwg.mxu0
        %1273 = vmatprep.subr.mxu0 %v286
        %1274 = vmatpush1.xpose.msra.mxu0 %v285
        %1275 = vmatprep.subr.mxu0 %v318
        %1276 = vmatpush1.xpose.msra.mxu0 %v317
        %1277 = vmatprep.subr.mxu0 %v350
        %1278 = vmatpush1.xpose.msra.mxu0 %v349
        %1279 = vmatprep.subr.mxu0 %v382
        %1280 = vmatpush1.xpose.msra.mxu0 %v381
        %1281 = vmatprep.subr.mxu0 %v414
        %1282 = vmatpush1.xpose.msra.mxu0 %v413
        %1283 = vmatprep.subr.mxu0 %v446
        %1284 = vmatpush1.xpose.msra.mxu0 %v445
        %1285 = vmatprep.subr.mxu0 %v478
        %1286 = vmatpush1.xpose.msra.mxu0 %v477
        %1287 = vmatprep.subr.mxu0 %v510
        %1288 = vmatpush1.xpose.msra.mxu0 %v509
        %1289 = vmatprep.subr.mxu0 %v542
        %1290 = vmatpush1.xpose.msra.mxu0 %v541
        %1291 = vmatprep.subr.mxu0 %v574
        %1292 = vmatpush1.xpose.msra.mxu0 %v573
        %1293 = vmatprep.subr.mxu0 %v606
        %1294 = vmatpush1.xpose.msra.mxu0 %v605
        %1295 = vmatprep.subr.mxu0 %v638
        %1296 = vmatpush1.xpose.msra.mxu0 %v637
        %1297 = vmatprep.subr.mxu0 %v670
        %1298 = vmatpush1.xpose.msra.mxu0 %v669
        %1299 = vmatprep.subr.mxu0 %v702
        %1300 = vmatpush1.xpose.msra.mxu0 %v701
        %1301 = vmatprep.subr.mxu0 %v734
        %1302 = vmatpush1.xpose.msra.mxu0 %v733
        %1303 = vmatprep.subr.mxu0 %v766
        %1304 = vmatpush1.xpose.msra.mxu0 %v765
        %1305 = vmatprep.subr.mxu0 0.0
        %1306 = vmatpush1.xpose.msra.mxu0 0.0
        %1307 = vmatprep.subr.mxu0 0.0
        %1308 = vmatpush1.xpose.msra.mxu0 0.0
        %1309 = vmatprep.subr.mxu0 0.0
        %1310 = vmatpush1.xpose.msra.mxu0 0.0
        %1311 = vmatprep.subr.mxu0 0.0
        %1312 = vmatpush1.xpose.msra.mxu0 0.0
        %1313 = vmatprep.subr.mxu0 0.0
        %1314 = vmatpush1.xpose.msra.mxu0 0.0
        %1315 = vmatprep.subr.mxu0 0.0
        %1316 = vmatpush1.xpose.msra.mxu0 0.0
        %1317 = vmatprep.subr.mxu0 0.0
        %1318 = vmatpush1.xpose.msra.mxu0 0.0
        %1319 = vmatprep.subr.mxu0 0.0
        %1320 = vmatpush1.xpose.msra.mxu0 0.0
        %1321 = vmatprep.subr.mxu0 0.0
        %1322 = vmatpush1.xpose.msra.mxu0 0.0
        %1323 = vmatprep.subr.mxu0 0.0
        %1324 = vmatpush1.xpose.msra.mxu0 0.0
        %1325 = vmatprep.subr.mxu0 0.0
        %1326 = vmatpush1.xpose.msra.mxu0 0.0
        %1327 = vmatprep.subr.mxu0 0.0
        %1328 = vmatpush1.xpose.msra.mxu0 0.0
        %1329 = vmatprep.subr.mxu0 0.0
        %1330 = vmatpush1.xpose.msra.mxu0 0.0
        %1331 = vmatprep.subr.mxu0 0.0
        %1332 = vmatpush1.xpose.msra.mxu0 0.0
        %1333 = vmatprep.subr.mxu0 0.0
        %1334 = vmatpush1.xpose.msra.mxu0 0.0
        %1335 = vmatprep.subr.mxu0 0.0
        %1336 = vmatpush1.xpose.msra.mxu0 0.0
        %1337 = vmatprep.mubr.f32.mxu0 %v253
        %1338 = vmatmul.mubr.f32.gmra.mrb[0].mxu0 %v252
        %v1339 = vpop.f32.mrb[0].mxu0
        %v1340 = vadd.f32 %v1270, %v1339
        %v1341 = vpop.f32.mrb[0].mxu0
        %1342 = vdwg.mxu0
        %1343 = vmatprep.subr.mxu0 %v288
        %1344 = vmatpush1.xpose.msra.mxu0 %v287
        %1345 = vmatprep.subr.mxu0 %v320
        %1346 = vmatpush1.xpose.msra.mxu0 %v319
        %1347 = vmatprep.subr.mxu0 %v352
        %1348 = vmatpush1.xpose.msra.mxu0 %v351
        %1349 = vmatprep.subr.mxu0 %v384
        %1350 = vmatpush1.xpose.msra.mxu0 %v383
        %1351 = vmatprep.subr.mxu0 %v416
        %1352 = vmatpush1.xpose.msra.mxu0 %v415
        %1353 = vmatprep.subr.mxu0 %v448
        %1354 = vmatpush1.xpose.msra.mxu0 %v447
        %1355 = vmatprep.subr.mxu0 %v480
        %1356 = vmatpush1.xpose.msra.mxu0 %v479
        %1357 = vmatprep.subr.mxu0 %v512
        %1358 = vmatpush1.xpose.msra.mxu0 %v511
        %1359 = vmatprep.subr.mxu0 %v544
        %1360 = vmatpush1.xpose.msra.mxu0 %v543
        %1361 = vmatprep.subr.mxu0 %v576
        %1362 = vmatpush1.xpose.msra.mxu0 %v575
        %1363 = vmatprep.subr.mxu0 %v608
        %1364 = vmatpush1.xpose.msra.mxu0 %v607
        %1365 = vmatprep.subr.mxu0 %v640
        %1366 = vmatpush1.xpose.msra.mxu0 %v639
        %1367 = vmatprep.subr.mxu0 %v672
        %1368 = vmatpush1.xpose.msra.mxu0 %v671
        %1369 = vmatprep.subr.mxu0 %v704
        %1370 = vmatpush1.xpose.msra.mxu0 %v703
        %1371 = vmatprep.subr.mxu0 %v736
        %1372 = vmatpush1.xpose.msra.mxu0 %v735
        %1373 = vmatprep.subr.mxu0 %v768
        %1374 = vmatpush1.xpose.msra.mxu0 %v767
        %1375 = vmatprep.subr.mxu0 0.0
        %1376 = vmatpush1.xpose.msra.mxu0 0.0
        %1377 = vmatprep.subr.mxu0 0.0
        %1378 = vmatpush1.xpose.msra.mxu0 0.0
        %1379 = vmatprep.subr.mxu0 0.0
        %1380 = vmatpush1.xpose.msra.mxu0 0.0
        %1381 = vmatprep.subr.mxu0 0.0
        %1382 = vmatpush1.xpose.msra.mxu0 0.0
        %1383 = vmatprep.subr.mxu0 0.0
        %1384 = vmatpush1.xpose.msra.mxu0 0.0
        %1385 = vmatprep.subr.mxu0 0.0
        %1386 = vmatpush1.xpose.msra.mxu0 0.0
        %1387 = vmatprep.subr.mxu0 0.0
        %1388 = vmatpush1.xpose.msra.mxu0 0.0
        %1389 = vmatprep.subr.mxu0 0.0
        %1390 = vmatpush1.xpose.msra.mxu0 0.0
        %1391 = vmatprep.subr.mxu0 0.0
        %1392 = vmatpush1.xpose.msra.mxu0 0.0
        %1393 = vmatprep.subr.mxu0 0.0
        %1394 = vmatpush1.xpose.msra.mxu0 0.0
        %1395 = vmatprep.subr.mxu0 0.0
        %1396 = vmatpush1.xpose.msra.mxu0 0.0
        %1397 = vmatprep.subr.mxu0 0.0
        %1398 = vmatpush1.xpose.msra.mxu0 0.0
        %1399 = vmatprep.subr.mxu0 0.0
        %1400 = vmatpush1.xpose.msra.mxu0 0.0
        %1401 = vmatprep.subr.mxu0 0.0
        %1402 = vmatpush1.xpose.msra.mxu0 0.0
        %1403 = vmatprep.subr.mxu0 0.0
        %1404 = vmatpush1.xpose.msra.mxu0 0.0
        %1405 = vmatprep.subr.mxu0 0.0
        %1406 = vmatpush1.xpose.msra.mxu0 0.0
        %1407 = vmatprep.mubr.f32.mxu0 %v255
        %1408 = vmatmul.mubr.f32.gmra.mrb[0].mxu0 %v254
        %v1409 = vpop.f32.mrb[0].mxu0
        %v1410 = vadd.f32 %v1340, %v1409
        %v1411 = vpop.f32.mrb[0].mxu0
        %1412 = vdwg.mxu0
        %1413 = vmatprep.subr.mxu0 %v290
        %1414 = vmatpush1.xpose.msra.mxu0 %v289
        %1415 = vmatprep.subr.mxu0 %v322
        %1416 = vmatpush1.xpose.msra.mxu0 %v321
        %1417 = vmatprep.subr.mxu0 %v354
        %1418 = vmatpush1.xpose.msra.mxu0 %v353
        %1419 = vmatprep.subr.mxu0 %v386
        %1420 = vmatpush1.xpose.msra.mxu0 %v385
        %1421 = vmatprep.subr.mxu0 %v418
        %1422 = vmatpush1.xpose.msra.mxu0 %v417
        %1423 = vmatprep.subr.mxu0 %v450
        %1424 = vmatpush1.xpose.msra.mxu0 %v449
        %1425 = vmatprep.subr.mxu0 %v482
        %1426 = vmatpush1.xpose.msra.mxu0 %v481
        %1427 = vmatprep.subr.mxu0 %v514
        %1428 = vmatpush1.xpose.msra.mxu0 %v513
        %1429 = vmatprep.subr.mxu0 %v546
        %1430 = vmatpush1.xpose.msra.mxu0 %v545
        %1431 = vmatprep.subr.mxu0 %v578
        %1432 = vmatpush1.xpose.msra.mxu0 %v577
        %1433 = vmatprep.subr.mxu0 %v610
        %1434 = vmatpush1.xpose.msra.mxu0 %v609
        %1435 = vmatprep.subr.mxu0 %v642
        %1436 = vmatpush1.xpose.msra.mxu0 %v641
        %1437 = vmatprep.subr.mxu0 %v674
        %1438 = vmatpush1.xpose.msra.mxu0 %v673
        %1439 = vmatprep.subr.mxu0 %v706
        %1440 = vmatpush1.xpose.msra.mxu0 %v705
        %1441 = vmatprep.subr.mxu0 %v738
        %1442 = vmatpush1.xpose.msra.mxu0 %v737
        %1443 = vmatprep.subr.mxu0 %v770
        %1444 = vmatpush1.xpose.msra.mxu0 %v769
        %1445 = vmatprep.subr.mxu0 0.0
        %1446 = vmatpush1.xpose.msra.mxu0 0.0
        %1447 = vmatprep.subr.mxu0 0.0
        %1448 = vmatpush1.xpose.msra.mxu0 0.0
        %1449 = vmatprep.subr.mxu0 0.0
        %1450 = vmatpush1.xpose.msra.mxu0 0.0
        %1451 = vmatprep.subr.mxu0 0.0
        %1452 = vmatpush1.xpose.msra.mxu0 0.0
        %1453 = vmatprep.subr.mxu0 0.0
        %1454 = vmatpush1.xpose.msra.mxu0 0.0
        %1455 = vmatprep.subr.mxu0 0.0
        %1456 = vmatpush1.xpose.msra.mxu0 0.0
        %1457 = vmatprep.subr.mxu0 0.0
        %1458 = vmatpush1.xpose.msra.mxu0 0.0
        %1459 = vmatprep.subr.mxu0 0.0
        %1460 = vmatpush1.xpose.msra.mxu0 0.0
        %1461 = vmatprep.subr.mxu0 0.0
        %1462 = vmatpush1.xpose.msra.mxu0 0.0
        %1463 = vmatprep.subr.mxu0 0.0
        %1464 = vmatpush1.xpose.msra.mxu0 0.0
        %1465 = vmatprep.subr.mxu0 0.0
        %1466 = vmatpush1.xpose.msra.mxu0 0.0
        %1467 = vmatprep.subr.mxu0 0.0
        %1468 = vmatpush1.xpose.msra.mxu0 0.0
        %1469 = vmatprep.subr.mxu0 0.0
        %1470 = vmatpush1.xpose.msra.mxu0 0.0
        %1471 = vmatprep.subr.mxu0 0.0
        %1472 = vmatpush1.xpose.msra.mxu0 0.0
        %1473 = vmatprep.subr.mxu0 0.0
        %1474 = vmatpush1.xpose.msra.mxu0 0.0
        %1475 = vmatprep.subr.mxu0 0.0
        %1476 = vmatpush1.xpose.msra.mxu0 0.0
        %1477 = vmatprep.mubr.f32.mxu0 %v257
        %1478 = vmatmul.mubr.f32.gmra.mrb[0].mxu0 %v256
        %v1479 = vpop.f32.mrb[0].mxu0
        %v1480 = vadd.f32 %v1410, %v1479
        %v1481 = vpop.f32.mrb[0].mxu0
        %1482 = vdwg.mxu0
        %1483 = vmatprep.subr.mxu0 %v292
        %1484 = vmatpush1.xpose.msra.mxu0 %v291
        %1485 = vmatprep.subr.mxu0 %v324
        %1486 = vmatpush1.xpose.msra.mxu0 %v323
        %1487 = vmatprep.subr.mxu0 %v356
        %1488 = vmatpush1.xpose.msra.mxu0 %v355
        %1489 = vmatprep.subr.mxu0 %v388
        %1490 = vmatpush1.xpose.msra.mxu0 %v387
        %1491 = vmatprep.subr.mxu0 %v420
        %1492 = vmatpush1.xpose.msra.mxu0 %v419
        %1493 = vmatprep.subr.mxu0 %v452
        %1494 = vmatpush1.xpose.msra.mxu0 %v451
        %1495 = vmatprep.subr.mxu0 %v484
        %1496 = vmatpush1.xpose.msra.mxu0 %v483
        %1497 = vmatprep.subr.mxu0 %v516
        %1498 = vmatpush1.xpose.msra.mxu0 %v515
        %1499 = vmatprep.subr.mxu0 %v548
        %1500 = vmatpush1.xpose.msra.mxu0 %v547
        %1501 = vmatprep.subr.mxu0 %v580
        %1502 = vmatpush1.xpose.msra.mxu0 %v579
        %1503 = vmatprep.subr.mxu0 %v612
        %1504 = vmatpush1.xpose.msra.mxu0 %v611
        %1505 = vmatprep.subr.mxu0 %v644
        %1506 = vmatpush1.xpose.msra.mxu0 %v643
        %1507 = vmatprep.subr.mxu0 %v676
        %1508 = vmatpush1.xpose.msra.mxu0 %v675
        %1509 = vmatprep.subr.mxu0 %v708
        %1510 = vmatpush1.xpose.msra.mxu0 %v707
        %1511 = vmatprep.subr.mxu0 %v740
        %1512 = vmatpush1.xpose.msra.mxu0 %v739
        %1513 = vmatprep.subr.mxu0 %v772
        %1514 = vmatpush1.xpose.msra.mxu0 %v771
        %1515 = vmatprep.subr.mxu0 0.0
        %1516 = vmatpush1.xpose.msra.mxu0 0.0
        %1517 = vmatprep.subr.mxu0 0.0
        %1518 = vmatpush1.xpose.msra.mxu0 0.0
        %1519 = vmatprep.subr.mxu0 0.0
        %1520 = vmatpush1.xpose.msra.mxu0 0.0
        %1521 = vmatprep.subr.mxu0 0.0
        %1522 = vmatpush1.xpose.msra.mxu0 0.0
        %1523 = vmatprep.subr.mxu0 0.0
        %1524 = vmatpush1.xpose.msra.mxu0 0.0
        %1525 = vmatprep.subr.mxu0 0.0
        %1526 = vmatpush1.xpose.msra.mxu0 0.0
        %1527 = vmatprep.subr.mxu0 0.0
        %1528 = vmatpush1.xpose.msra.mxu0 0.0
        %1529 = vmatprep.subr.mxu0 0.0
        %1530 = vmatpush1.xpose.msra.mxu0 0.0
        %1531 = vmatprep.subr.mxu0 0.0
        %1532 = vmatpush1.xpose.msra.mxu0 0.0
        %1533 = vmatprep.subr.mxu0 0.0
        %1534 = vmatpush1.xpose.msra.mxu0 0.0
        %1535 = vmatprep.subr.mxu0 0.0
        %1536 = vmatpush1.xpose.msra.mxu0 0.0
        %1537 = vmatprep.subr.mxu0 0.0
        %1538 = vmatpush1.xpose.msra.mxu0 0.0
        %1539 = vmatprep.subr.mxu0 0.0
        %1540 = vmatpush1.xpose.msra.mxu0 0.0
        %1541 = vmatprep.subr.mxu0 0.0
        %1542 = vmatpush1.xpose.msra.mxu0 0.0
        %1543 = vmatprep.subr.mxu0 0.0
        %1544 = vmatpush1.xpose.msra.mxu0 0.0
        %1545 = vmatprep.subr.mxu0 0.0
        %1546 = vmatpush1.xpose.msra.mxu0 0.0
        %1547 = vmatprep.mubr.f32.mxu0 %v259
        %1548 = vmatmul.mubr.f32.gmra.mrb[0].mxu0 %v258
        %v1549 = vpop.f32.mrb[0].mxu0
        %v1550 = vadd.f32 %v1480, %v1549
        %v1551 = vpop.f32.mrb[0].mxu0
        %1552 = vdwg.mxu0
        %1553 = vmatprep.subr.mxu0 %v294
        %1554 = vmatpush1.xpose.msra.mxu0 %v293
        %1555 = vmatprep.subr.mxu0 %v326
        %1556 = vmatpush1.xpose.msra.mxu0 %v325
        %1557 = vmatprep.subr.mxu0 %v358
        %1558 = vmatpush1.xpose.msra.mxu0 %v357
        %1559 = vmatprep.subr.mxu0 %v390
        %1560 = vmatpush1.xpose.msra.mxu0 %v389
        %1561 = vmatprep.subr.mxu0 %v422
        %1562 = vmatpush1.xpose.msra.mxu0 %v421
        %1563 = vmatprep.subr.mxu0 %v454
        %1564 = vmatpush1.xpose.msra.mxu0 %v453
        %1565 = vmatprep.subr.mxu0 %v486
        %1566 = vmatpush1.xpose.msra.mxu0 %v485
        %1567 = vmatprep.subr.mxu0 %v518
        %1568 = vmatpush1.xpose.msra.mxu0 %v517
        %1569 = vmatprep.subr.mxu0 %v550
        %1570 = vmatpush1.xpose.msra.mxu0 %v549
        %1571 = vmatprep.subr.mxu0 %v582
        %1572 = vmatpush1.xpose.msra.mxu0 %v581
        %1573 = vmatprep.subr.mxu0 %v614
        %1574 = vmatpush1.xpose.msra.mxu0 %v613
        %1575 = vmatprep.subr.mxu0 %v646
        %1576 = vmatpush1.xpose.msra.mxu0 %v645
        %1577 = vmatprep.subr.mxu0 %v678
        %1578 = vmatpush1.xpose.msra.mxu0 %v677
        %1579 = vmatprep.subr.mxu0 %v710
        %1580 = vmatpush1.xpose.msra.mxu0 %v709
        %1581 = vmatprep.subr.mxu0 %v742
        %1582 = vmatpush1.xpose.msra.mxu0 %v741
        %1583 = vmatprep.subr.mxu0 %v774
        %1584 = vmatpush1.xpose.msra.mxu0 %v773
        %1585 = vmatprep.subr.mxu0 0.0
        %1586 = vmatpush1.xpose.msra.mxu0 0.0
        %1587 = vmatprep.subr.mxu0 0.0
        %1588 = vmatpush1.xpose.msra.mxu0 0.0
        %1589 = vmatprep.subr.mxu0 0.0
        %1590 = vmatpush1.xpose.msra.mxu0 0.0
        %1591 = vmatprep.subr.mxu0 0.0
        %1592 = vmatpush1.xpose.msra.mxu0 0.0
        %1593 = vmatprep.subr.mxu0 0.0
        %1594 = vmatpush1.xpose.msra.mxu0 0.0
        %1595 = vmatprep.subr.mxu0 0.0
        %1596 = vmatpush1.xpose.msra.mxu0 0.0
        %1597 = vmatprep.subr.mxu0 0.0
        %1598 = vmatpush1.xpose.msra.mxu0 0.0
        %1599 = vmatprep.subr.mxu0 0.0
        %1600 = vmatpush1.xpose.msra.mxu0 0.0
        %1601 = vmatprep.subr.mxu0 0.0
        %1602 = vmatpush1.xpose.msra.mxu0 0.0
        %1603 = vmatprep.subr.mxu0 0.0
        %1604 = vmatpush1.xpose.msra.mxu0 0.0
        %1605 = vmatprep.subr.mxu0 0.0
        %1606 = vmatpush1.xpose.msra.mxu0 0.0
        %1607 = vmatprep.subr.mxu0 0.0
        %1608 = vmatpush1.xpose.msra.mxu0 0.0
        %1609 = vmatprep.subr.mxu0 0.0
        %1610 = vmatpush1.xpose.msra.mxu0 0.0
        %1611 = vmatprep.subr.mxu0 0.0
        %1612 = vmatpush1.xpose.msra.mxu0 0.0
        %1613 = vmatprep.subr.mxu0 0.0
        %1614 = vmatpush1.xpose.msra.mxu0 0.0
        %1615 = vmatprep.subr.mxu0 0.0
        %1616 = vmatpush1.xpose.msra.mxu0 0.0
        %1617 = vmatprep.mubr.f32.mxu0 %v261
        %1618 = vmatmul.mubr.f32.gmra.mrb[0].mxu0 %v260
        %v1619 = vpop.f32.mrb[0].mxu0
        %v1620 = vadd.f32 %v1550, %v1619
        %v1621 = vpop.f32.mrb[0].mxu0
        %1622 = vdwg.mxu0
        %1623 = vmatprep.subr.mxu0 %v296
        %1624 = vmatpush1.xpose.msra.mxu0 %v295
        %1625 = vmatprep.subr.mxu0 %v328
        %1626 = vmatpush1.xpose.msra.mxu0 %v327
        %1627 = vmatprep.subr.mxu0 %v360
        %1628 = vmatpush1.xpose.msra.mxu0 %v359
        %1629 = vmatprep.subr.mxu0 %v392
        %1630 = vmatpush1.xpose.msra.mxu0 %v391
        %1631 = vmatprep.subr.mxu0 %v424
        %1632 = vmatpush1.xpose.msra.mxu0 %v423
        %1633 = vmatprep.subr.mxu0 %v456
        %1634 = vmatpush1.xpose.msra.mxu0 %v455
        %1635 = vmatprep.subr.mxu0 %v488
        %1636 = vmatpush1.xpose.msra.mxu0 %v487
        %1637 = vmatprep.subr.mxu0 %v520
        %1638 = vmatpush1.xpose.msra.mxu0 %v519
        %1639 = vmatprep.subr.mxu0 %v552
        %1640 = vmatpush1.xpose.msra.mxu0 %v551
        %1641 = vmatprep.subr.mxu0 %v584
        %1642 = vmatpush1.xpose.msra.mxu0 %v583
        %1643 = vmatprep.subr.mxu0 %v616
        %1644 = vmatpush1.xpose.msra.mxu0 %v615
        %1645 = vmatprep.subr.mxu0 %v648
        %1646 = vmatpush1.xpose.msra.mxu0 %v647
        %1647 = vmatprep.subr.mxu0 %v680
        %1648 = vmatpush1.xpose.msra.mxu0 %v679
        %1649 = vmatprep.subr.mxu0 %v712
        %1650 = vmatpush1.xpose.msra.mxu0 %v711
        %1651 = vmatprep.subr.mxu0 %v744
        %1652 = vmatpush1.xpose.msra.mxu0 %v743
        %1653 = vmatprep.subr.mxu0 %v776
        %1654 = vmatpush1.xpose.msra.mxu0 %v775
        %1655 = vmatprep.subr.mxu0 0.0
        %1656 = vmatpush1.xpose.msra.mxu0 0.0
        %1657 = vmatprep.subr.mxu0 0.0
        %1658 = vmatpush1.xpose.msra.mxu0 0.0
        %1659 = vmatprep.subr.mxu0 0.0
        %1660 = vmatpush1.xpose.msra.mxu0 0.0
        %1661 = vmatprep.subr.mxu0 0.0
        %1662 = vmatpush1.xpose.msra.mxu0 0.0
        %1663 = vmatprep.subr.mxu0 0.0
        %1664 = vmatpush1.xpose.msra.mxu0 0.0
        %1665 = vmatprep.subr.mxu0 0.0
        %1666 = vmatpush1.xpose.msra.mxu0 0.0
        %1667 = vmatprep.subr.mxu0 0.0
        %1668 = vmatpush1.xpose.msra.mxu0 0.0
        %1669 = vmatprep.subr.mxu0 0.0
        %1670 = vmatpush1.xpose.msra.mxu0 0.0
        %1671 = vmatprep.subr.mxu0 0.0
        %1672 = vmatpush1.xpose.msra.mxu0 0.0
        %1673 = vmatprep.subr.mxu0 0.0
        %1674 = vmatpush1.xpose.msra.mxu0 0.0
        %1675 = vmatprep.subr.mxu0 0.0
        %1676 = vmatpush1.xpose.msra.mxu0 0.0
        %1677 = vmatprep.subr.mxu0 0.0
        %1678 = vmatpush1.xpose.msra.mxu0 0.0
        %1679 = vmatprep.subr.mxu0 0.0
        %1680 = vmatpush1.xpose.msra.mxu0 0.0
        %1681 = vmatprep.subr.mxu0 0.0
        %1682 = vmatpush1.xpose.msra.mxu0 0.0
        %1683 = vmatprep.subr.mxu0 0.0
        %1684 = vmatpush1.xpose.msra.mxu0 0.0
        %1685 = vmatprep.subr.mxu0 0.0
        %1686 = vmatpush1.xpose.msra.mxu0 0.0
        %1687 = vmatprep.mubr.f32.mxu0 %v263
        %1688 = vmatmul.mubr.f32.gmra.mrb[0].mxu0 %v262
        %v1689 = vpop.f32.mrb[0].mxu0
        %v1690 = vadd.f32 %v1620, %v1689
        %v1691 = vpop.f32.mrb[0].mxu0
        %1692 = vdwg.mxu0
        %1693 = vmatprep.subr.mxu0 %v298
        %1694 = vmatpush1.xpose.msra.mxu0 %v297
        %1695 = vmatprep.subr.mxu0 %v330
        %1696 = vmatpush1.xpose.msra.mxu0 %v329
        %1697 = vmatprep.subr.mxu0 %v362
        %1698 = vmatpush1.xpose.msra.mxu0 %v361
        %1699 = vmatprep.subr.mxu0 %v394
        %1700 = vmatpush1.xpose.msra.mxu0 %v393
        %1701 = vmatprep.subr.mxu0 %v426
        %1702 = vmatpush1.xpose.msra.mxu0 %v425
        %1703 = vmatprep.subr.mxu0 %v458
        %1704 = vmatpush1.xpose.msra.mxu0 %v457
        %1705 = vmatprep.subr.mxu0 %v490
        %1706 = vmatpush1.xpose.msra.mxu0 %v489
        %1707 = vmatprep.subr.mxu0 %v522
        %1708 = vmatpush1.xpose.msra.mxu0 %v521
        %1709 = vmatprep.subr.mxu0 %v554
        %1710 = vmatpush1.xpose.msra.mxu0 %v553
        %1711 = vmatprep.subr.mxu0 %v586
        %1712 = vmatpush1.xpose.msra.mxu0 %v585
        %1713 = vmatprep.subr.mxu0 %v618
        %1714 = vmatpush1.xpose.msra.mxu0 %v617
        %1715 = vmatprep.subr.mxu0 %v650
        %1716 = vmatpush1.xpose.msra.mxu0 %v649
        %1717 = vmatprep.subr.mxu0 %v682
        %1718 = vmatpush1.xpose.msra.mxu0 %v681
        %1719 = vmatprep.subr.mxu0 %v714
        %1720 = vmatpush1.xpose.msra.mxu0 %v713
        %1721 = vmatprep.subr.mxu0 %v746
        %1722 = vmatpush1.xpose.msra.mxu0 %v745
        %1723 = vmatprep.subr.mxu0 %v778
        %1724 = vmatpush1.xpose.msra.mxu0 %v777
        %1725 = vmatprep.subr.mxu0 0.0
        %1726 = vmatpush1.xpose.msra.mxu0 0.0
        %1727 = vmatprep.subr.mxu0 0.0
        %1728 = vmatpush1.xpose.msra.mxu0 0.0
        %1729 = vmatprep.subr.mxu0 0.0
        %1730 = vmatpush1.xpose.msra.mxu0 0.0
        %1731 = vmatprep.subr.mxu0 0.0
        %1732 = vmatpush1.xpose.msra.mxu0 0.0
        %1733 = vmatprep.subr.mxu0 0.0
        %1734 = vmatpush1.xpose.msra.mxu0 0.0
        %1735 = vmatprep.subr.mxu0 0.0
        %1736 = vmatpush1.xpose.msra.mxu0 0.0
        %1737 = vmatprep.subr.mxu0 0.0
        %1738 = vmatpush1.xpose.msra.mxu0 0.0
        %1739 = vmatprep.subr.mxu0 0.0
        %1740 = vmatpush1.xpose.msra.mxu0 0.0
        %1741 = vmatprep.subr.mxu0 0.0
        %1742 = vmatpush1.xpose.msra.mxu0 0.0
        %1743 = vmatprep.subr.mxu0 0.0
        %1744 = vmatpush1.xpose.msra.mxu0 0.0
        %1745 = vmatprep.subr.mxu0 0.0
        %1746 = vmatpush1.xpose.msra.mxu0 0.0
        %1747 = vmatprep.subr.mxu0 0.0
        %1748 = vmatpush1.xpose.msra.mxu0 0.0
        %1749 = vmatprep.subr.mxu0 0.0
        %1750 = vmatpush1.xpose.msra.mxu0 0.0
        %1751 = vmatprep.subr.mxu0 0.0
        %1752 = vmatpush1.xpose.msra.mxu0 0.0
        %1753 = vmatprep.subr.mxu0 0.0
        %1754 = vmatpush1.xpose.msra.mxu0 0.0
        %1755 = vmatprep.subr.mxu0 0.0
        %1756 = vmatpush1.xpose.msra.mxu0 0.0
        %1757 = vmatprep.mubr.f32.mxu0 %v265
        %1758 = vmatmul.mubr.f32.gmra.mrb[0].mxu0 %v264
        %v1759 = vpop.f32.mrb[0].mxu0
        %v1760 = vadd.f32 %v1690, %v1759
        %v1761 = vpop.f32.mrb[0].mxu0
        %1762 = vdwg.mxu0
        %1763 = vmatprep.subr.mxu0 %v300
        %1764 = vmatpush1.xpose.msra.mxu0 %v299
        %1765 = vmatprep.subr.mxu0 %v332
        %1766 = vmatpush1.xpose.msra.mxu0 %v331
        %1767 = vmatprep.subr.mxu0 %v364
        %1768 = vmatpush1.xpose.msra.mxu0 %v363
        %1769 = vmatprep.subr.mxu0 %v396
        %1770 = vmatpush1.xpose.msra.mxu0 %v395
        %1771 = vmatprep.subr.mxu0 %v428
        %1772 = vmatpush1.xpose.msra.mxu0 %v427
        %1773 = vmatprep.subr.mxu0 %v460
        %1774 = vmatpush1.xpose.msra.mxu0 %v459
        %1775 = vmatprep.subr.mxu0 %v492
        %1776 = vmatpush1.xpose.msra.mxu0 %v491
        %1777 = vmatprep.subr.mxu0 %v524
        %1778 = vmatpush1.xpose.msra.mxu0 %v523
        %1779 = vmatprep.subr.mxu0 %v556
        %1780 = vmatpush1.xpose.msra.mxu0 %v555
        %1781 = vmatprep.subr.mxu0 %v588
        %1782 = vmatpush1.xpose.msra.mxu0 %v587
        %1783 = vmatprep.subr.mxu0 %v620
        %1784 = vmatpush1.xpose.msra.mxu0 %v619
        %1785 = vmatprep.subr.mxu0 %v652
        %1786 = vmatpush1.xpose.msra.mxu0 %v651
        %1787 = vmatprep.subr.mxu0 %v684
        %1788 = vmatpush1.xpose.msra.mxu0 %v683
        %1789 = vmatprep.subr.mxu0 %v716
        %1790 = vmatpush1.xpose.msra.mxu0 %v715
        %1791 = vmatprep.subr.mxu0 %v748
        %1792 = vmatpush1.xpose.msra.mxu0 %v747
        %1793 = vmatprep.subr.mxu0 %v780
        %1794 = vmatpush1.xpose.msra.mxu0 %v779
        %1795 = vmatprep.subr.mxu0 0.0
        %1796 = vmatpush1.xpose.msra.mxu0 0.0
        %1797 = vmatprep.subr.mxu0 0.0
        %1798 = vmatpush1.xpose.msra.mxu0 0.0
        %1799 = vmatprep.subr.mxu0 0.0
        %1800 = vmatpush1.xpose.msra.mxu0 0.0
        %1801 = vmatprep.subr.mxu0 0.0
        %1802 = vmatpush1.xpose.msra.mxu0 0.0
        %1803 = vmatprep.subr.mxu0 0.0
        %1804 = vmatpush1.xpose.msra.mxu0 0.0
        %1805 = vmatprep.subr.mxu0 0.0
        %1806 = vmatpush1.xpose.msra.mxu0 0.0
        %1807 = vmatprep.subr.mxu0 0.0
        %1808 = vmatpush1.xpose.msra.mxu0 0.0
        %1809 = vmatprep.subr.mxu0 0.0
        %1810 = vmatpush1.xpose.msra.mxu0 0.0
        %1811 = vmatprep.subr.mxu0 0.0
        %1812 = vmatpush1.xpose.msra.mxu0 0.0
        %1813 = vmatprep.subr.mxu0 0.0
        %1814 = vmatpush1.xpose.msra.mxu0 0.0
        %1815 = vmatprep.subr.mxu0 0.0
        %1816 = vmatpush1.xpose.msra.mxu0 0.0
        %1817 = vmatprep.subr.mxu0 0.0
        %1818 = vmatpush1.xpose.msra.mxu0 0.0
        %1819 = vmatprep.subr.mxu0 0.0
        %1820 = vmatpush1.xpose.msra.mxu0 0.0
        %1821 = vmatprep.subr.mxu0 0.0
        %1822 = vmatpush1.xpose.msra.mxu0 0.0
        %1823 = vmatprep.subr.mxu0 0.0
        %1824 = vmatpush1.xpose.msra.mxu0 0.0
        %1825 = vmatprep.subr.mxu0 0.0
        %1826 = vmatpush1.xpose.msra.mxu0 0.0
        %1827 = vmatprep.mubr.f32.mxu0 %v267
        %1828 = vmatmul.mubr.f32.gmra.mrb[0].mxu0 %v266
        %v1829 = vpop.f32.mrb[0].mxu0
        %v1830 = vadd.f32 %v1760, %v1829
        %v1831 = vpop.f32.mrb[0].mxu0
        %1832 = vdwg.mxu0
        %1833 = vmatprep.subr.mxu0 %v302
        %1834 = vmatpush1.xpose.msra.mxu0 %v301
        %1835 = vmatprep.subr.mxu0 %v334
        %1836 = vmatpush1.xpose.msra.mxu0 %v333
        %1837 = vmatprep.subr.mxu0 %v366
        %1838 = vmatpush1.xpose.msra.mxu0 %v365
        %1839 = vmatprep.subr.mxu0 %v398
        %1840 = vmatpush1.xpose.msra.mxu0 %v397
        %1841 = vmatprep.subr.mxu0 %v430
        %1842 = vmatpush1.xpose.msra.mxu0 %v429
        %1843 = vmatprep.subr.mxu0 %v462
        %1844 = vmatpush1.xpose.msra.mxu0 %v461
        %1845 = vmatprep.subr.mxu0 %v494
        %1846 = vmatpush1.xpose.msra.mxu0 %v493
        %1847 = vmatprep.subr.mxu0 %v526
        %1848 = vmatpush1.xpose.msra.mxu0 %v525
        %1849 = vmatprep.subr.mxu0 %v558
        %1850 = vmatpush1.xpose.msra.mxu0 %v557
        %1851 = vmatprep.subr.mxu0 %v590
        %1852 = vmatpush1.xpose.msra.mxu0 %v589
        %1853 = vmatprep.subr.mxu0 %v622
        %1854 = vmatpush1.xpose.msra.mxu0 %v621
        %1855 = vmatprep.subr.mxu0 %v654
        %1856 = vmatpush1.xpose.msra.mxu0 %v653
        %1857 = vmatprep.subr.mxu0 %v686
        %1858 = vmatpush1.xpose.msra.mxu0 %v685
        %1859 = vmatprep.subr.mxu0 %v718
        %1860 = vmatpush1.xpose.msra.mxu0 %v717
        %1861 = vmatprep.subr.mxu0 %v750
        %1862 = vmatpush1.xpose.msra.mxu0 %v749
        %1863 = vmatprep.subr.mxu0 %v782
        %1864 = vmatpush1.xpose.msra.mxu0 %v781
        %1865 = vmatprep.subr.mxu0 0.0
        %1866 = vmatpush1.xpose.msra.mxu0 0.0
        %1867 = vmatprep.subr.mxu0 0.0
        %1868 = vmatpush1.xpose.msra.mxu0 0.0
        %1869 = vmatprep.subr.mxu0 0.0
        %1870 = vmatpush1.xpose.msra.mxu0 0.0
        %1871 = vmatprep.subr.mxu0 0.0
        %1872 = vmatpush1.xpose.msra.mxu0 0.0
        %1873 = vmatprep.subr.mxu0 0.0
        %1874 = vmatpush1.xpose.msra.mxu0 0.0
        %1875 = vmatprep.subr.mxu0 0.0
        %1876 = vmatpush1.xpose.msra.mxu0 0.0
        %1877 = vmatprep.subr.mxu0 0.0
        %1878 = vmatpush1.xpose.msra.mxu0 0.0
        %1879 = vmatprep.subr.mxu0 0.0
        %1880 = vmatpush1.xpose.msra.mxu0 0.0
        %1881 = vmatprep.subr.mxu0 0.0
        %1882 = vmatpush1.xpose.msra.mxu0 0.0
        %1883 = vmatprep.subr.mxu0 0.0
        %1884 = vmatpush1.xpose.msra.mxu0 0.0
        %1885 = vmatprep.subr.mxu0 0.0
        %1886 = vmatpush1.xpose.msra.mxu0 0.0
        %1887 = vmatprep.subr.mxu0 0.0
        %1888 = vmatpush1.xpose.msra.mxu0 0.0
        %1889 = vmatprep.subr.mxu0 0.0
        %1890 = vmatpush1.xpose.msra.mxu0 0.0
        %1891 = vmatprep.subr.mxu0 0.0
        %1892 = vmatpush1.xpose.msra.mxu0 0.0
        %1893 = vmatprep.subr.mxu0 0.0
        %1894 = vmatpush1.xpose.msra.mxu0 0.0
        %1895 = vmatprep.subr.mxu0 0.0
        %1896 = vmatpush1.xpose.msra.mxu0 0.0
        %1897 = vmatprep.mubr.f32.mxu0 %v269
        %1898 = vmatmul.mubr.f32.gmra.mrb[0].mxu0 %v268
        %v1899 = vpop.f32.mrb[0].mxu0
        %v1900 = vadd.f32 %v1830, %v1899
        %v1901 = vpop.f32.mrb[0].mxu0
        %1902 = vdwg.mxu0
        %vm1903 = vnez %v270
        %v1904 = vsel %vm1903, 16843009, 0
        %v1905 = vunpack.c.0.s8 %v1904
        %vm1906 = vcmp.ne.s32.totalorder %v1905, 0
        %v1907 = vsel %vm1906, -1e+09, %v1900
        %1908 = vmax.xlane.f32.xlu0 %v1907
        %v1909 = vpop.xlane.xlu0 %1908
        %v1910 = vsub.f32 %v1907, %v1909
        %v1911 = vmul.f32 %v1910, 1.442695
        %v1912 = vpow.pop %v1911
        %1913 = vadd.xlane.f32.xlu0 %v1912
        %v1914 = vpop.xlane.xlu0 %1913
        %v1915 = vrcp.pop %v1914
        %v1916 = vmul.f32 %v1912, %v1915
        %1917 = vmatprep.subr.mxu0 %v272
        %1918 = vmatpush1.msra.mxu0 %v271
        %1919 = vmatprep.subr.mxu0 %v304
        %1920 = vmatpush1.msra.mxu0 %v303
        %1921 = vmatprep.subr.mxu0 %v336
        %1922 = vmatpush1.msra.mxu0 %v335
        %1923 = vmatprep.subr.mxu0 %v368
        %1924 = vmatpush1.msra.mxu0 %v367
        %1925 = vmatprep.subr.mxu0 %v400
        %1926 = vmatpush1.msra.mxu0 %v399
        %1927 = vmatprep.subr.mxu0 %v432
        %1928 = vmatpush1.msra.mxu0 %v431
        %1929 = vmatprep.subr.mxu0 %v464
        %1930 = vmatpush1.msra.mxu0 %v463
        %1931 = vmatprep.subr.mxu0 %v496
        %1932 = vmatpush1.msra.mxu0 %v495
        %1933 = vmatprep.subr.mxu0 %v528
        %1934 = vmatpush1.msra.mxu0 %v527
        %1935 = vmatprep.subr.mxu0 %v560
        %1936 = vmatpush1.msra.mxu0 %v559
        %1937 = vmatprep.subr.mxu0 %v592
        %1938 = vmatpush1.msra.mxu0 %v591
        %1939 = vmatprep.subr.mxu0 %v624
        %1940 = vmatpush1.msra.mxu0 %v623
        %1941 = vmatprep.subr.mxu0 %v656
        %1942 = vmatpush1.msra.mxu0 %v655
        %1943 = vmatprep.subr.mxu0 %v688
        %1944 = vmatpush1.msra.mxu0 %v687
        %1945 = vmatprep.subr.mxu0 %v720
        %1946 = vmatpush1.msra.mxu0 %v719
        %1947 = vmatprep.subr.mxu0 %v752
        %1948 = vmatpush1.msra.mxu0 %v751
        %1949 = vmatprep.subr.mxu0 0.0
        %1950 = vmatpush1.msra.mxu0 0.0
        %1951 = vmatprep.subr.mxu0 0.0
        %1952 = vmatpush1.msra.mxu0 0.0
        %1953 = vmatprep.subr.mxu0 0.0
        %1954 = vmatpush1.msra.mxu0 0.0
        %1955 = vmatprep.subr.mxu0 0.0
        %1956 = vmatpush1.msra.mxu0 0.0
        %1957 = vmatprep.subr.mxu0 0.0
        %1958 = vmatpush1.msra.mxu0 0.0
        %1959 = vmatprep.subr.mxu0 0.0
        %1960 = vmatpush1.msra.mxu0 0.0
        %1961 = vmatprep.subr.mxu0 0.0
        %1962 = vmatpush1.msra.mxu0 0.0
        %1963 = vmatprep.subr.mxu0 0.0
        %1964 = vmatpush1.msra.mxu0 0.0
        %1965 = vmatprep.subr.mxu0 0.0
        %1966 = vmatpush1.msra.mxu0 0.0
        %1967 = vmatprep.subr.mxu0 0.0
        %1968 = vmatpush1.msra.mxu0 0.0
        %1969 = vmatprep.subr.mxu0 0.0
        %1970 = vmatpush1.msra.mxu0 0.0
        %1971 = vmatprep.subr.mxu0 0.0
        %1972 = vmatpush1.msra.mxu0 0.0
        %1973 = vmatprep.subr.mxu0 0.0
        %1974 = vmatpush1.msra.mxu0 0.0
        %1975 = vmatprep.subr.mxu0 0.0
        %1976 = vmatpush1.msra.mxu0 0.0
        %1977 = vmatprep.subr.mxu0 0.0
        %1978 = vmatpush1.msra.mxu0 0.0
        %1979 = vmatprep.subr.mxu0 0.0
        %1980 = vmatpush1.msra.mxu0 0.0
        %1981 = vmatprep.mubr.f32.mxu0 0.0
        %1982 = vmatmul.mubr.f32.gmra.mrb[0].mxu0 %v1916
        %v1983 = vpop.f32.mrb[0].mxu0
        %v1984 = vadd.f32 0.0, %v1983
        %v1985 = vpop.f32.mrb[0].mxu0
        %v1986 = vadd.f32 0.0, %v1985
        %1987 = vdwg.mxu0
        %1988 = vmatprep.subr.mxu0 %v274
        %1989 = vmatpush1.msra.mxu0 %v273
        %1990 = vmatprep.subr.mxu0 %v306
        %1991 = vmatpush1.msra.mxu0 %v305
        %1992 = vmatprep.subr.mxu0 %v338
        %1993 = vmatpush1.msra.mxu0 %v337
        %1994 = vmatprep.subr.mxu0 %v370
        %1995 = vmatpush1.msra.mxu0 %v369
        %1996 = vmatprep.subr.mxu0 %v402
        %1997 = vmatpush1.msra.mxu0 %v401
        %1998 = vmatprep.subr.mxu0 %v434
        %1999 = vmatpush1.msra.mxu0 %v433
        %2000 = vmatprep.subr.mxu0 %v466
        %2001 = vmatpush1.msra.mxu0 %v465
        %2002 = vmatprep.subr.mxu0 %v498
        %2003 = vmatpush1.msra.mxu0 %v497
        %2004 = vmatprep.subr.mxu0 %v530
        %2005 = vmatpush1.msra.mxu0 %v529
        %2006 = vmatprep.subr.mxu0 %v562
        %2007 = vmatpush1.msra.mxu0 %v561
        %2008 = vmatprep.subr.mxu0 %v594
        %2009 = vmatpush1.msra.mxu0 %v593
        %2010 = vmatprep.subr.mxu0 %v626
        %2011 = vmatpush1.msra.mxu0 %v625
        %2012 = vmatprep.subr.mxu0 %v658
        %2013 = vmatpush1.msra.mxu0 %v657
        %2014 = vmatprep.subr.mxu0 %v690
        %2015 = vmatpush1.msra.mxu0 %v689
        %2016 = vmatprep.subr.mxu0 %v722
        %2017 = vmatpush1.msra.mxu0 %v721
        %2018 = vmatprep.subr.mxu0 %v754
        %2019 = vmatpush1.msra.mxu0 %v753
        %2020 = vmatprep.subr.mxu0 0.0
        %2021 = vmatpush1.msra.mxu0 0.0
        %2022 = vmatprep.subr.mxu0 0.0
        %2023 = vmatpush1.msra.mxu0 0.0
        %2024 = vmatprep.subr.mxu0 0.0
        %2025 = vmatpush1.msra.mxu0 0.0
        %2026 = vmatprep.subr.mxu0 0.0
        %2027 = vmatpush1.msra.mxu0 0.0
        %2028 = vmatprep.subr.mxu0 0.0
        %2029 = vmatpush1.msra.mxu0 0.0
        %2030 = vmatprep.subr.mxu0 0.0
        %2031 = vmatpush1.msra.mxu0 0.0
        %2032 = vmatprep.subr.mxu0 0.0
        %2033 = vmatpush1.msra.mxu0 0.0
        %2034 = vmatprep.subr.mxu0 0.0
        %2035 = vmatpush1.msra.mxu0 0.0
        %2036 = vmatprep.subr.mxu0 0.0
        %2037 = vmatpush1.msra.mxu0 0.0
        %2038 = vmatprep.subr.mxu0 0.0
        %2039 = vmatpush1.msra.mxu0 0.0
        %2040 = vmatprep.subr.mxu0 0.0
        %2041 = vmatpush1.msra.mxu0 0.0
        %2042 = vmatprep.subr.mxu0 0.0
        %2043 = vmatpush1.msra.mxu0 0.0
        %2044 = vmatprep.subr.mxu0 0.0
        %2045 = vmatpush1.msra.mxu0 0.0
        %2046 = vmatprep.subr.mxu0 0.0
        %2047 = vmatpush1.msra.mxu0 0.0
        %2048 = vmatprep.subr.mxu0 0.0
        %2049 = vmatpush1.msra.mxu0 0.0
        %2050 = vmatprep.subr.mxu0 0.0
        %2051 = vmatpush1.msra.mxu0 0.0
        %2052 = vmatprep.mubr.f32.mxu0 0.0
        %2053 = vmatmul.mubr.f32.gmra.mrb[0].mxu0 %v1916
        %v2054 = vpop.f32.mrb[0].mxu0
        %v2055 = vadd.f32 0.0, %v2054
        %v2056 = vpop.f32.mrb[0].mxu0
        %v2057 = vadd.f32 0.0, %v2056
        %2058 = vdwg.mxu0
        %2059 = vmatprep.subr.mxu0 %v276
        %2060 = vmatpush1.msra.mxu0 %v275
        %2061 = vmatprep.subr.mxu0 %v308
        %2062 = vmatpush1.msra.mxu0 %v307
        %2063 = vmatprep.subr.mxu0 %v340
        %2064 = vmatpush1.msra.mxu0 %v339
        %2065 = vmatprep.subr.mxu0 %v372
        %2066 = vmatpush1.msra.mxu0 %v371
        %2067 = vmatprep.subr.mxu0 %v404
        %2068 = vmatpush1.msra.mxu0 %v403
        %2069 = vmatprep.subr.mxu0 %v436
        %2070 = vmatpush1.msra.mxu0 %v435
        %2071 = vmatprep.subr.mxu0 %v468
        %2072 = vmatpush1.msra.mxu0 %v467
        %2073 = vmatprep.subr.mxu0 %v500
        %2074 = vmatpush1.msra.mxu0 %v499
        %2075 = vmatprep.subr.mxu0 %v532
        %2076 = vmatpush1.msra.mxu0 %v531
        %2077 = vmatprep.subr.mxu0 %v564
        %2078 = vmatpush1.msra.mxu0 %v563
        %2079 = vmatprep.subr.mxu0 %v596
        %2080 = vmatpush1.msra.mxu0 %v595
        %2081 = vmatprep.subr.mxu0 %v628
        %2082 = vmatpush1.msra.mxu0 %v627
        %2083 = vmatprep.subr.mxu0 %v660
        %2084 = vmatpush1.msra.mxu0 %v659
        %2085 = vmatprep.subr.mxu0 %v692
        %2086 = vmatpush1.msra.mxu0 %v691
        %2087 = vmatprep.subr.mxu0 %v724
        %2088 = vmatpush1.msra.mxu0 %v723
        %2089 = vmatprep.subr.mxu0 %v756
        %2090 = vmatpush1.msra.mxu0 %v755
        %2091 = vmatprep.subr.mxu0 0.0
        %2092 = vmatpush1.msra.mxu0 0.0
        %2093 = vmatprep.subr.mxu0 0.0
        %2094 = vmatpush1.msra.mxu0 0.0
        %2095 = vmatprep.subr.mxu0 0.0
        %2096 = vmatpush1.msra.mxu0 0.0
        %2097 = vmatprep.subr.mxu0 0.0
        %2098 = vmatpush1.msra.mxu0 0.0
        %2099 = vmatprep.subr.mxu0 0.0
        %2100 = vmatpush1.msra.mxu0 0.0
        %2101 = vmatprep.subr.mxu0 0.0
        %2102 = vmatpush1.msra.mxu0 0.0
        %2103 = vmatprep.subr.mxu0 0.0
        %2104 = vmatpush1.msra.mxu0 0.0
        %2105 = vmatprep.subr.mxu0 0.0
        %2106 = vmatpush1.msra.mxu0 0.0
        %2107 = vmatprep.subr.mxu0 0.0
        %2108 = vmatpush1.msra.mxu0 0.0
        %2109 = vmatprep.subr.mxu0 0.0
        %2110 = vmatpush1.msra.mxu0 0.0
        %2111 = vmatprep.subr.mxu0 0.0
        %2112 = vmatpush1.msra.mxu0 0.0
        %2113 = vmatprep.subr.mxu0 0.0
        %2114 = vmatpush1.msra.mxu0 0.0
        %2115 = vmatprep.subr.mxu0 0.0
        %2116 = vmatpush1.msra.mxu0 0.0
        %2117 = vmatprep.subr.mxu0 0.0
        %2118 = vmatpush1.msra.mxu0 0.0
        %2119 = vmatprep.subr.mxu0 0.0
        %2120 = vmatpush1.msra.mxu0 0.0
        %2121 = vmatprep.subr.mxu0 0.0
        %2122 = vmatpush1.msra.mxu0 0.0
        %2123 = vmatprep.mubr.f32.mxu0 0.0
        %2124 = vmatmul.mubr.f32.gmra.mrb[0].mxu0 %v1916
        %v2125 = vpop.f32.mrb[0].mxu0
        %v2126 = vadd.f32 0.0, %v2125
        %v2127 = vpop.f32.mrb[0].mxu0
        %v2128 = vadd.f32 0.0, %v2127
        %2129 = vdwg.mxu0
        %2130 = vmatprep.subr.mxu0 %v278
        %2131 = vmatpush1.msra.mxu0 %v277
        %2132 = vmatprep.subr.mxu0 %v310
        %2133 = vmatpush1.msra.mxu0 %v309
        %2134 = vmatprep.subr.mxu0 %v342
        %2135 = vmatpush1.msra.mxu0 %v341
        %2136 = vmatprep.subr.mxu0 %v374
        %2137 = vmatpush1.msra.mxu0 %v373
        %2138 = vmatprep.subr.mxu0 %v406
        %2139 = vmatpush1.msra.mxu0 %v405
        %2140 = vmatprep.subr.mxu0 %v438
        %2141 = vmatpush1.msra.mxu0 %v437
        %2142 = vmatprep.subr.mxu0 %v470
        %2143 = vmatpush1.msra.mxu0 %v469
        %2144 = vmatprep.subr.mxu0 %v502
        %2145 = vmatpush1.msra.mxu0 %v501
        %2146 = vmatprep.subr.mxu0 %v534
        %2147 = vmatpush1.msra.mxu0 %v533
        %2148 = vmatprep.subr.mxu0 %v566
        %2149 = vmatpush1.msra.mxu0 %v565
        %2150 = vmatprep.subr.mxu0 %v598
        %2151 = vmatpush1.msra.mxu0 %v597
        %2152 = vmatprep.subr.mxu0 %v630
        %2153 = vmatpush1.msra.mxu0 %v629
        %2154 = vmatprep.subr.mxu0 %v662
        %2155 = vmatpush1.msra.mxu0 %v661
        %2156 = vmatprep.subr.mxu0 %v694
        %2157 = vmatpush1.msra.mxu0 %v693
        %2158 = vmatprep.subr.mxu0 %v726
        %2159 = vmatpush1.msra.mxu0 %v725
        %2160 = vmatprep.subr.mxu0 %v758
        %2161 = vmatpush1.msra.mxu0 %v757
        %2162 = vmatprep.subr.mxu0 0.0
        %2163 = vmatpush1.msra.mxu0 0.0
        %2164 = vmatprep.subr.mxu0 0.0
        %2165 = vmatpush1.msra.mxu0 0.0
        %2166 = vmatprep.subr.mxu0 0.0
        %2167 = vmatpush1.msra.mxu0 0.0
        %2168 = vmatprep.subr.mxu0 0.0
        %2169 = vmatpush1.msra.mxu0 0.0
        %2170 = vmatprep.subr.mxu0 0.0
        %2171 = vmatpush1.msra.mxu0 0.0
        %2172 = vmatprep.subr.mxu0 0.0
        %2173 = vmatpush1.msra.mxu0 0.0
        %2174 = vmatprep.subr.mxu0 0.0
        %2175 = vmatpush1.msra.mxu0 0.0
        %2176 = vmatprep.subr.mxu0 0.0
        %2177 = vmatpush1.msra.mxu0 0.0
        %2178 = vmatprep.subr.mxu0 0.0
        %2179 = vmatpush1.msra.mxu0 0.0
        %2180 = vmatprep.subr.mxu0 0.0
        %2181 = vmatpush1.msra.mxu0 0.0
        %2182 = vmatprep.subr.mxu0 0.0
        %2183 = vmatpush1.msra.mxu0 0.0
        %2184 = vmatprep.subr.mxu0 0.0
        %2185 = vmatpush1.msra.mxu0 0.0
        %2186 = vmatprep.subr.mxu0 0.0
        %2187 = vmatpush1.msra.mxu0 0.0
        %2188 = vmatprep.subr.mxu0 0.0
        %2189 = vmatpush1.msra.mxu0 0.0
        %2190 = vmatprep.subr.mxu0 0.0
        %2191 = vmatpush1.msra.mxu0 0.0
        %2192 = vmatprep.subr.mxu0 0.0
        %2193 = vmatpush1.msra.mxu0 0.0
        %2194 = vmatprep.mubr.f32.mxu0 0.0
        %2195 = vmatmul.mubr.f32.gmra.mrb[0].mxu0 %v1916
        %v2196 = vpop.f32.mrb[0].mxu0
        %v2197 = vadd.f32 0.0, %v2196
        %v2198 = vpop.f32.mrb[0].mxu0
        %v2199 = vadd.f32 0.0, %v2198
        %2200 = vdwg.mxu0
        %2201 = vmatprep.subr.mxu0 %v280
        %2202 = vmatpush1.msra.mxu0 %v279
        %2203 = vmatprep.subr.mxu0 %v312
        %2204 = vmatpush1.msra.mxu0 %v311
        %2205 = vmatprep.subr.mxu0 %v344
        %2206 = vmatpush1.msra.mxu0 %v343
        %2207 = vmatprep.subr.mxu0 %v376
        %2208 = vmatpush1.msra.mxu0 %v375
        %2209 = vmatprep.subr.mxu0 %v408
        %2210 = vmatpush1.msra.mxu0 %v407
        %2211 = vmatprep.subr.mxu0 %v440
        %2212 = vmatpush1.msra.mxu0 %v439
        %2213 = vmatprep.subr.mxu0 %v472
        %2214 = vmatpush1.msra.mxu0 %v471
        %2215 = vmatprep.subr.mxu0 %v504
        %2216 = vmatpush1.msra.mxu0 %v503
        %2217 = vmatprep.subr.mxu0 %v536
        %2218 = vmatpush1.msra.mxu0 %v535
        %2219 = vmatprep.subr.mxu0 %v568
        %2220 = vmatpush1.msra.mxu0 %v567
        %2221 = vmatprep.subr.mxu0 %v600
        %2222 = vmatpush1.msra.mxu0 %v599
        %2223 = vmatprep.subr.mxu0 %v632
        %2224 = vmatpush1.msra.mxu0 %v631
        %2225 = vmatprep.subr.mxu0 %v664
        %2226 = vmatpush1.msra.mxu0 %v663
        %2227 = vmatprep.subr.mxu0 %v696
        %2228 = vmatpush1.msra.mxu0 %v695
        %2229 = vmatprep.subr.mxu0 %v728
        %2230 = vmatpush1.msra.mxu0 %v727
        %2231 = vmatprep.subr.mxu0 %v760
        %2232 = vmatpush1.msra.mxu0 %v759
        %2233 = vmatprep.subr.mxu0 0.0
        %2234 = vmatpush1.msra.mxu0 0.0
        %2235 = vmatprep.subr.mxu0 0.0
        %2236 = vmatpush1.msra.mxu0 0.0
        %2237 = vmatprep.subr.mxu0 0.0
        %2238 = vmatpush1.msra.mxu0 0.0
        %2239 = vmatprep.subr.mxu0 0.0
        %2240 = vmatpush1.msra.mxu0 0.0
        %2241 = vmatprep.subr.mxu0 0.0
        %2242 = vmatpush1.msra.mxu0 0.0
        %2243 = vmatprep.subr.mxu0 0.0
        %2244 = vmatpush1.msra.mxu0 0.0
        %2245 = vmatprep.subr.mxu0 0.0
        %2246 = vmatpush1.msra.mxu0 0.0
        %2247 = vmatprep.subr.mxu0 0.0
        %2248 = vmatpush1.msra.mxu0 0.0
        %2249 = vmatprep.subr.mxu0 0.0
        %2250 = vmatpush1.msra.mxu0 0.0
        %2251 = vmatprep.subr.mxu0 0.0
        %2252 = vmatpush1.msra.mxu0 0.0
        %2253 = vmatprep.subr.mxu0 0.0
        %2254 = vmatpush1.msra.mxu0 0.0
        %2255 = vmatprep.subr.mxu0 0.0
        %2256 = vmatpush1.msra.mxu0 0.0
        %2257 = vmatprep.subr.mxu0 0.0
        %2258 = vmatpush1.msra.mxu0 0.0
        %2259 = vmatprep.subr.mxu0 0.0
        %2260 = vmatpush1.msra.mxu0 0.0
        %2261 = vmatprep.subr.mxu0 0.0
        %2262 = vmatpush1.msra.mxu0 0.0
        %2263 = vmatprep.subr.mxu0 0.0
        %2264 = vmatpush1.msra.mxu0 0.0
        %2265 = vmatprep.mubr.f32.mxu0 0.0
        %2266 = vmatmul.mubr.f32.gmra.mrb[0].mxu0 %v1916
        %v2267 = vpop.f32.mrb[0].mxu0
        %v2268 = vadd.f32 0.0, %v2267
        %v2269 = vpop.f32.mrb[0].mxu0
        %v2270 = vadd.f32 0.0, %v2269
        %2271 = vdwg.mxu0
        %2272 = vmatprep.subr.mxu0 %v282
        %2273 = vmatpush1.msra.mxu0 %v281
        %2274 = vmatprep.subr.mxu0 %v314
        %2275 = vmatpush1.msra.mxu0 %v313
        %2276 = vmatprep.subr.mxu0 %v346
        %2277 = vmatpush1.msra.mxu0 %v345
        %2278 = vmatprep.subr.mxu0 %v378
        %2279 = vmatpush1.msra.mxu0 %v377
        %2280 = vmatprep.subr.mxu0 %v410
        %2281 = vmatpush1.msra.mxu0 %v409
        %2282 = vmatprep.subr.mxu0 %v442
        %2283 = vmatpush1.msra.mxu0 %v441
        %2284 = vmatprep.subr.mxu0 %v474
        %2285 = vmatpush1.msra.mxu0 %v473
        %2286 = vmatprep.subr.mxu0 %v506
        %2287 = vmatpush1.msra.mxu0 %v505
        %2288 = vmatprep.subr.mxu0 %v538
        %2289 = vmatpush1.msra.mxu0 %v537
        %2290 = vmatprep.subr.mxu0 %v570
        %2291 = vmatpush1.msra.mxu0 %v569
        %2292 = vmatprep.subr.mxu0 %v602
        %2293 = vmatpush1.msra.mxu0 %v601
        %2294 = vmatprep.subr.mxu0 %v634
        %2295 = vmatpush1.msra.mxu0 %v633
        %2296 = vmatprep.subr.mxu0 %v666
        %2297 = vmatpush1.msra.mxu0 %v665
        %2298 = vmatprep.subr.mxu0 %v698
        %2299 = vmatpush1.msra.mxu0 %v697
        %2300 = vmatprep.subr.mxu0 %v730
        %2301 = vmatpush1.msra.mxu0 %v729
        %2302 = vmatprep.subr.mxu0 %v762
        %2303 = vmatpush1.msra.mxu0 %v761
        %2304 = vmatprep.subr.mxu0 0.0
        %2305 = vmatpush1.msra.mxu0 0.0
        %2306 = vmatprep.subr.mxu0 0.0
        %2307 = vmatpush1.msra.mxu0 0.0
        %2308 = vmatprep.subr.mxu0 0.0
        %2309 = vmatpush1.msra.mxu0 0.0
        %2310 = vmatprep.subr.mxu0 0.0
        %2311 = vmatpush1.msra.mxu0 0.0
        %2312 = vmatprep.subr.mxu0 0.0
        %2313 = vmatpush1.msra.mxu0 0.0
        %2314 = vmatprep.subr.mxu0 0.0
        %2315 = vmatpush1.msra.mxu0 0.0
        %2316 = vmatprep.subr.mxu0 0.0
        %2317 = vmatpush1.msra.mxu0 0.0
        %2318 = vmatprep.subr.mxu0 0.0
        %2319 = vmatpush1.msra.mxu0 0.0
        %2320 = vmatprep.subr.mxu0 0.0
        %2321 = vmatpush1.msra.mxu0 0.0
        %2322 = vmatprep.subr.mxu0 0.0
        %2323 = vmatpush1.msra.mxu0 0.0
        %2324 = vmatprep.subr.mxu0 0.0
        %2325 = vmatpush1.msra.mxu0 0.0
        %2326 = vmatprep.subr.mxu0 0.0
        %2327 = vmatpush1.msra.mxu0 0.0
        %2328 = vmatprep.subr.mxu0 0.0
        %2329 = vmatpush1.msra.mxu0 0.0
        %2330 = vmatprep.subr.mxu0 0.0
        %2331 = vmatpush1.msra.mxu0 0.0
        %2332 = vmatprep.subr.mxu0 0.0
        %2333 = vmatpush1.msra.mxu0 0.0
        %2334 = vmatprep.subr.mxu0 0.0
        %2335 = vmatpush1.msra.mxu0 0.0
        %2336 = vmatprep.mubr.f32.mxu0 0.0
        %2337 = vmatmul.mubr.f32.gmra.mrb[0].mxu0 %v1916
        %v2338 = vpop.f32.mrb[0].mxu0
        %v2339 = vadd.f32 0.0, %v2338
        %v2340 = vpop.f32.mrb[0].mxu0
        %v2341 = vadd.f32 0.0, %v2340
        %2342 = vdwg.mxu0
        %2343 = vmatprep.subr.mxu0 %v284
        %2344 = vmatpush1.msra.mxu0 %v283
        %2345 = vmatprep.subr.mxu0 %v316
        %2346 = vmatpush1.msra.mxu0 %v315
        %2347 = vmatprep.subr.mxu0 %v348
        %2348 = vmatpush1.msra.mxu0 %v347
        %2349 = vmatprep.subr.mxu0 %v380
        %2350 = vmatpush1.msra.mxu0 %v379
        %2351 = vmatprep.subr.mxu0 %v412
        %2352 = vmatpush1.msra.mxu0 %v411
        %2353 = vmatprep.subr.mxu0 %v444
        %2354 = vmatpush1.msra.mxu0 %v443
        %2355 = vmatprep.subr.mxu0 %v476
        %2356 = vmatpush1.msra.mxu0 %v475
        %2357 = vmatprep.subr.mxu0 %v508
        %2358 = vmatpush1.msra.mxu0 %v507
        %2359 = vmatprep.subr.mxu0 %v540
        %2360 = vmatpush1.msra.mxu0 %v539
        %2361 = vmatprep.subr.mxu0 %v572
        %2362 = vmatpush1.msra.mxu0 %v571
        %2363 = vmatprep.subr.mxu0 %v604
        %2364 = vmatpush1.msra.mxu0 %v603
        %2365 = vmatprep.subr.mxu0 %v636
        %2366 = vmatpush1.msra.mxu0 %v635
        %2367 = vmatprep.subr.mxu0 %v668
        %2368 = vmatpush1.msra.mxu0 %v667
        %2369 = vmatprep.subr.mxu0 %v700
        %2370 = vmatpush1.msra.mxu0 %v699
        %2371 = vmatprep.subr.mxu0 %v732
        %2372 = vmatpush1.msra.mxu0 %v731
        %2373 = vmatprep.subr.mxu0 %v764
        %2374 = vmatpush1.msra.mxu0 %v763
        %2375 = vmatprep.subr.mxu0 0.0
        %2376 = vmatpush1.msra.mxu0 0.0
        %2377 = vmatprep.subr.mxu0 0.0
        %2378 = vmatpush1.msra.mxu0 0.0
        %2379 = vmatprep.subr.mxu0 0.0
        %2380 = vmatpush1.msra.mxu0 0.0
        %2381 = vmatprep.subr.mxu0 0.0
        %2382 = vmatpush1.msra.mxu0 0.0
        %2383 = vmatprep.subr.mxu0 0.0
        %2384 = vmatpush1.msra.mxu0 0.0
        %2385 = vmatprep.subr.mxu0 0.0
        %2386 = vmatpush1.msra.mxu0 0.0
        %2387 = vmatprep.subr.mxu0 0.0
        %2388 = vmatpush1.msra.mxu0 0.0
        %2389 = vmatprep.subr.mxu0 0.0
        %2390 = vmatpush1.msra.mxu0 0.0
        %2391 = vmatprep.subr.mxu0 0.0
        %2392 = vmatpush1.msra.mxu0 0.0
        %2393 = vmatprep.subr.mxu0 0.0
        %2394 = vmatpush1.msra.mxu0 0.0
        %2395 = vmatprep.subr.mxu0 0.0
        %2396 = vmatpush1.msra.mxu0 0.0
        %2397 = vmatprep.subr.mxu0 0.0
        %2398 = vmatpush1.msra.mxu0 0.0
        %2399 = vmatprep.subr.mxu0 0.0
        %2400 = vmatpush1.msra.mxu0 0.0
        %2401 = vmatprep.subr.mxu0 0.0
        %2402 = vmatpush1.msra.mxu0 0.0
        %2403 = vmatprep.subr.mxu0 0.0
        %2404 = vmatpush1.msra.mxu0 0.0
        %2405 = vmatprep.subr.mxu0 0.0
        %2406 = vmatpush1.msra.mxu0 0.0
        %2407 = vmatprep.mubr.f32.mxu0 0.0
        %2408 = vmatmul.mubr.f32.gmra.mrb[0].mxu0 %v1916
        %v2409 = vpop.f32.mrb[0].mxu0
        %v2410 = vadd.f32 0.0, %v2409
        %v2411 = vpop.f32.mrb[0].mxu0
        %v2412 = vadd.f32 0.0, %v2411
        %2413 = vdwg.mxu0
        %2414 = vmatprep.subr.mxu0 %v286
        %2415 = vmatpush1.msra.mxu0 %v285
        %2416 = vmatprep.subr.mxu0 %v318
        %2417 = vmatpush1.msra.mxu0 %v317
        %2418 = vmatprep.subr.mxu0 %v350
        %2419 = vmatpush1.msra.mxu0 %v349
        %2420 = vmatprep.subr.mxu0 %v382
        %2421 = vmatpush1.msra.mxu0 %v381
        %2422 = vmatprep.subr.mxu0 %v414
        %2423 = vmatpush1.msra.mxu0 %v413
        %2424 = vmatprep.subr.mxu0 %v446
        %2425 = vmatpush1.msra.mxu0 %v445
        %2426 = vmatprep.subr.mxu0 %v478
        %2427 = vmatpush1.msra.mxu0 %v477
        %2428 = vmatprep.subr.mxu0 %v510
        %2429 = vmatpush1.msra.mxu0 %v509
        %2430 = vmatprep.subr.mxu0 %v542
        %2431 = vmatpush1.msra.mxu0 %v541
        %2432 = vmatprep.subr.mxu0 %v574
        %2433 = vmatpush1.msra.mxu0 %v573
        %2434 = vmatprep.subr.mxu0 %v606
        %2435 = vmatpush1.msra.mxu0 %v605
        %2436 = vmatprep.subr.mxu0 %v638
        %2437 = vmatpush1.msra.mxu0 %v637
        %2438 = vmatprep.subr.mxu0 %v670
        %2439 = vmatpush1.msra.mxu0 %v669
        %2440 = vmatprep.subr.mxu0 %v702
        %2441 = vmatpush1.msra.mxu0 %v701
        %2442 = vmatprep.subr.mxu0 %v734
        %2443 = vmatpush1.msra.mxu0 %v733
        %2444 = vmatprep.subr.mxu0 %v766
        %2445 = vmatpush1.msra.mxu0 %v765
        %2446 = vmatprep.subr.mxu0 0.0
        %2447 = vmatpush1.msra.mxu0 0.0
        %2448 = vmatprep.subr.mxu0 0.0
        %2449 = vmatpush1.msra.mxu0 0.0
        %2450 = vmatprep.subr.mxu0 0.0
        %2451 = vmatpush1.msra.mxu0 0.0
        %2452 = vmatprep.subr.mxu0 0.0
        %2453 = vmatpush1.msra.mxu0 0.0
        %2454 = vmatprep.subr.mxu0 0.0
        %2455 = vmatpush1.msra.mxu0 0.0
        %2456 = vmatprep.subr.mxu0 0.0
        %2457 = vmatpush1.msra.mxu0 0.0
        %2458 = vmatprep.subr.mxu0 0.0
        %2459 = vmatpush1.msra.mxu0 0.0
        %2460 = vmatprep.subr.mxu0 0.0
        %2461 = vmatpush1.msra.mxu0 0.0
        %2462 = vmatprep.subr.mxu0 0.0
        %2463 = vmatpush1.msra.mxu0 0.0
        %2464 = vmatprep.subr.mxu0 0.0
        %2465 = vmatpush1.msra.mxu0 0.0
        %2466 = vmatprep.subr.mxu0 0.0
        %2467 = vmatpush1.msra.mxu0 0.0
        %2468 = vmatprep.subr.mxu0 0.0
        %2469 = vmatpush1.msra.mxu0 0.0
        %2470 = vmatprep.subr.mxu0 0.0
        %2471 = vmatpush1.msra.mxu0 0.0
        %2472 = vmatprep.subr.mxu0 0.0
        %2473 = vmatpush1.msra.mxu0 0.0
        %2474 = vmatprep.subr.mxu0 0.0
        %2475 = vmatpush1.msra.mxu0 0.0
        %2476 = vmatprep.subr.mxu0 0.0
        %2477 = vmatpush1.msra.mxu0 0.0
        %2478 = vmatprep.mubr.f32.mxu0 0.0
        %2479 = vmatmul.mubr.f32.gmra.mrb[0].mxu0 %v1916
        %v2480 = vpop.f32.mrb[0].mxu0
        %v2481 = vadd.f32 0.0, %v2480
        %v2482 = vpop.f32.mrb[0].mxu0
        %v2483 = vadd.f32 0.0, %v2482
        %2484 = vdwg.mxu0
        %2485 = vmatprep.subr.mxu0 %v288
        %2486 = vmatpush1.msra.mxu0 %v287
        %2487 = vmatprep.subr.mxu0 %v320
        %2488 = vmatpush1.msra.mxu0 %v319
        %2489 = vmatprep.subr.mxu0 %v352
        %2490 = vmatpush1.msra.mxu0 %v351
        %2491 = vmatprep.subr.mxu0 %v384
        %2492 = vmatpush1.msra.mxu0 %v383
        %2493 = vmatprep.subr.mxu0 %v416
        %2494 = vmatpush1.msra.mxu0 %v415
        %2495 = vmatprep.subr.mxu0 %v448
        %2496 = vmatpush1.msra.mxu0 %v447
        %2497 = vmatprep.subr.mxu0 %v480
        %2498 = vmatpush1.msra.mxu0 %v479
        %2499 = vmatprep.subr.mxu0 %v512
        %2500 = vmatpush1.msra.mxu0 %v511
        %2501 = vmatprep.subr.mxu0 %v544
        %2502 = vmatpush1.msra.mxu0 %v543
        %2503 = vmatprep.subr.mxu0 %v576
        %2504 = vmatpush1.msra.mxu0 %v575
        %2505 = vmatprep.subr.mxu0 %v608
        %2506 = vmatpush1.msra.mxu0 %v607
        %2507 = vmatprep.subr.mxu0 %v640
        %2508 = vmatpush1.msra.mxu0 %v639
        %2509 = vmatprep.subr.mxu0 %v672
        %2510 = vmatpush1.msra.mxu0 %v671
        %2511 = vmatprep.subr.mxu0 %v704
        %2512 = vmatpush1.msra.mxu0 %v703
        %2513 = vmatprep.subr.mxu0 %v736
        %2514 = vmatpush1.msra.mxu0 %v735
        %2515 = vmatprep.subr.mxu0 %v768
        %2516 = vmatpush1.msra.mxu0 %v767
        %2517 = vmatprep.subr.mxu0 0.0
        %2518 = vmatpush1.msra.mxu0 0.0
        %2519 = vmatprep.subr.mxu0 0.0
        %2520 = vmatpush1.msra.mxu0 0.0
        %2521 = vmatprep.subr.mxu0 0.0
        %2522 = vmatpush1.msra.mxu0 0.0
        %2523 = vmatprep.subr.mxu0 0.0
        %2524 = vmatpush1.msra.mxu0 0.0
        %2525 = vmatprep.subr.mxu0 0.0
        %2526 = vmatpush1.msra.mxu0 0.0
        %2527 = vmatprep.subr.mxu0 0.0
        %2528 = vmatpush1.msra.mxu0 0.0
        %2529 = vmatprep.subr.mxu0 0.0
        %2530 = vmatpush1.msra.mxu0 0.0
        %2531 = vmatprep.subr.mxu0 0.0
        %2532 = vmatpush1.msra.mxu0 0.0
        %2533 = vmatprep.subr.mxu0 0.0
        %2534 = vmatpush1.msra.mxu0 0.0
        %2535 = vmatprep.subr.mxu0 0.0
        %2536 = vmatpush1.msra.mxu0 0.0
        %2537 = vmatprep.subr.mxu0 0.0
        %2538 = vmatpush1.msra.mxu0 0.0
        %2539 = vmatprep.subr.mxu0 0.0
        %2540 = vmatpush1.msra.mxu0 0.0
        %2541 = vmatprep.subr.mxu0 0.0
        %2542 = vmatpush1.msra.mxu0 0.0
        %2543 = vmatprep.subr.mxu0 0.0
        %2544 = vmatpush1.msra.mxu0 0.0
        %2545 = vmatprep.subr.mxu0 0.0
        %2546 = vmatpush1.msra.mxu0 0.0
        %2547 = vmatprep.subr.mxu0 0.0
        %2548 = vmatpush1.msra.mxu0 0.0
        %2549 = vmatprep.mubr.f32.mxu0 0.0
        %2550 = vmatmul.mubr.f32.gmra.mrb[0].mxu0 %v1916
        %v2551 = vpop.f32.mrb[0].mxu0
        %v2552 = vadd.f32 0.0, %v2551
        %v2553 = vpop.f32.mrb[0].mxu0
        %v2554 = vadd.f32 0.0, %v2553
        %2555 = vdwg.mxu0
        %2556 = vmatprep.subr.mxu0 %v290
        %2557 = vmatpush1.msra.mxu0 %v289
        %2558 = vmatprep.subr.mxu0 %v322
        %2559 = vmatpush1.msra.mxu0 %v321
        %2560 = vmatprep.subr.mxu0 %v354
        %2561 = vmatpush1.msra.mxu0 %v353
        %2562 = vmatprep.subr.mxu0 %v386
        %2563 = vmatpush1.msra.mxu0 %v385
        %2564 = vmatprep.subr.mxu0 %v418
        %2565 = vmatpush1.msra.mxu0 %v417
        %2566 = vmatprep.subr.mxu0 %v450
        %2567 = vmatpush1.msra.mxu0 %v449
        %2568 = vmatprep.subr.mxu0 %v482
        %2569 = vmatpush1.msra.mxu0 %v481
        %2570 = vmatprep.subr.mxu0 %v514
        %2571 = vmatpush1.msra.mxu0 %v513
        %2572 = vmatprep.subr.mxu0 %v546
        %2573 = vmatpush1.msra.mxu0 %v545
        %2574 = vmatprep.subr.mxu0 %v578
        %2575 = vmatpush1.msra.mxu0 %v577
        %2576 = vmatprep.subr.mxu0 %v610
        %2577 = vmatpush1.msra.mxu0 %v609
        %2578 = vmatprep.subr.mxu0 %v642
        %2579 = vmatpush1.msra.mxu0 %v641
        %2580 = vmatprep.subr.mxu0 %v674
        %2581 = vmatpush1.msra.mxu0 %v673
        %2582 = vmatprep.subr.mxu0 %v706
        %2583 = vmatpush1.msra.mxu0 %v705
        %2584 = vmatprep.subr.mxu0 %v738
        %2585 = vmatpush1.msra.mxu0 %v737
        %2586 = vmatprep.subr.mxu0 %v770
        %2587 = vmatpush1.msra.mxu0 %v769
        %2588 = vmatprep.subr.mxu0 0.0
        %2589 = vmatpush1.msra.mxu0 0.0
        %2590 = vmatprep.subr.mxu0 0.0
        %2591 = vmatpush1.msra.mxu0 0.0
        %2592 = vmatprep.subr.mxu0 0.0
        %2593 = vmatpush1.msra.mxu0 0.0
        %2594 = vmatprep.subr.mxu0 0.0
        %2595 = vmatpush1.msra.mxu0 0.0
        %2596 = vmatprep.subr.mxu0 0.0
        %2597 = vmatpush1.msra.mxu0 0.0
        %2598 = vmatprep.subr.mxu0 0.0
        %2599 = vmatpush1.msra.mxu0 0.0
        %2600 = vmatprep.subr.mxu0 0.0
        %2601 = vmatpush1.msra.mxu0 0.0
        %2602 = vmatprep.subr.mxu0 0.0
        %2603 = vmatpush1.msra.mxu0 0.0
        %2604 = vmatprep.subr.mxu0 0.0
        %2605 = vmatpush1.msra.mxu0 0.0
        %2606 = vmatprep.subr.mxu0 0.0
        %2607 = vmatpush1.msra.mxu0 0.0
        %2608 = vmatprep.subr.mxu0 0.0
        %2609 = vmatpush1.msra.mxu0 0.0
        %2610 = vmatprep.subr.mxu0 0.0
        %2611 = vmatpush1.msra.mxu0 0.0
        %2612 = vmatprep.subr.mxu0 0.0
        %2613 = vmatpush1.msra.mxu0 0.0
        %2614 = vmatprep.subr.mxu0 0.0
        %2615 = vmatpush1.msra.mxu0 0.0
        %2616 = vmatprep.subr.mxu0 0.0
        %2617 = vmatpush1.msra.mxu0 0.0
        %2618 = vmatprep.subr.mxu0 0.0
        %2619 = vmatpush1.msra.mxu0 0.0
        %2620 = vmatprep.mubr.f32.mxu0 0.0
        %2621 = vmatmul.mubr.f32.gmra.mrb[0].mxu0 %v1916
        %v2622 = vpop.f32.mrb[0].mxu0
        %v2623 = vadd.f32 0.0, %v2622
        %v2624 = vpop.f32.mrb[0].mxu0
        %v2625 = vadd.f32 0.0, %v2624
        %2626 = vdwg.mxu0
        %2627 = vmatprep.subr.mxu0 %v292
        %2628 = vmatpush1.msra.mxu0 %v291
        %2629 = vmatprep.subr.mxu0 %v324
        %2630 = vmatpush1.msra.mxu0 %v323
        %2631 = vmatprep.subr.mxu0 %v356
        %2632 = vmatpush1.msra.mxu0 %v355
        %2633 = vmatprep.subr.mxu0 %v388
        %2634 = vmatpush1.msra.mxu0 %v387
        %2635 = vmatprep.subr.mxu0 %v420
        %2636 = vmatpush1.msra.mxu0 %v419
        %2637 = vmatprep.subr.mxu0 %v452
        %2638 = vmatpush1.msra.mxu0 %v451
        %2639 = vmatprep.subr.mxu0 %v484
        %2640 = vmatpush1.msra.mxu0 %v483
        %2641 = vmatprep.subr.mxu0 %v516
        %2642 = vmatpush1.msra.mxu0 %v515
        %2643 = vmatprep.subr.mxu0 %v548
        %2644 = vmatpush1.msra.mxu0 %v547
        %2645 = vmatprep.subr.mxu0 %v580
        %2646 = vmatpush1.msra.mxu0 %v579
        %2647 = vmatprep.subr.mxu0 %v612
        %2648 = vmatpush1.msra.mxu0 %v611
        %2649 = vmatprep.subr.mxu0 %v644
        %2650 = vmatpush1.msra.mxu0 %v643
        %2651 = vmatprep.subr.mxu0 %v676
        %2652 = vmatpush1.msra.mxu0 %v675
        %2653 = vmatprep.subr.mxu0 %v708
        %2654 = vmatpush1.msra.mxu0 %v707
        %2655 = vmatprep.subr.mxu0 %v740
        %2656 = vmatpush1.msra.mxu0 %v739
        %2657 = vmatprep.subr.mxu0 %v772
        %2658 = vmatpush1.msra.mxu0 %v771
        %2659 = vmatprep.subr.mxu0 0.0
        %2660 = vmatpush1.msra.mxu0 0.0
        %2661 = vmatprep.subr.mxu0 0.0
        %2662 = vmatpush1.msra.mxu0 0.0
        %2663 = vmatprep.subr.mxu0 0.0
        %2664 = vmatpush1.msra.mxu0 0.0
        %2665 = vmatprep.subr.mxu0 0.0
        %2666 = vmatpush1.msra.mxu0 0.0
        %2667 = vmatprep.subr.mxu0 0.0
        %2668 = vmatpush1.msra.mxu0 0.0
        %2669 = vmatprep.subr.mxu0 0.0
        %2670 = vmatpush1.msra.mxu0 0.0
        %2671 = vmatprep.subr.mxu0 0.0
        %2672 = vmatpush1.msra.mxu0 0.0
        %2673 = vmatprep.subr.mxu0 0.0
        %2674 = vmatpush1.msra.mxu0 0.0
        %2675 = vmatprep.subr.mxu0 0.0
        %2676 = vmatpush1.msra.mxu0 0.0
        %2677 = vmatprep.subr.mxu0 0.0
        %2678 = vmatpush1.msra.mxu0 0.0
        %2679 = vmatprep.subr.mxu0 0.0
        %2680 = vmatpush1.msra.mxu0 0.0
        %2681 = vmatprep.subr.mxu0 0.0
        %2682 = vmatpush1.msra.mxu0 0.0
        %2683 = vmatprep.subr.mxu0 0.0
        %2684 = vmatpush1.msra.mxu0 0.0
        %2685 = vmatprep.subr.mxu0 0.0
        %2686 = vmatpush1.msra.mxu0 0.0
        %2687 = vmatprep.subr.mxu0 0.0
        %2688 = vmatpush1.msra.mxu0 0.0
        %2689 = vmatprep.subr.mxu0 0.0
        %2690 = vmatpush1.msra.mxu0 0.0
        %2691 = vmatprep.mubr.f32.mxu0 0.0
        %2692 = vmatmul.mubr.f32.gmra.mrb[0].mxu0 %v1916
        %v2693 = vpop.f32.mrb[0].mxu0
        %v2694 = vadd.f32 0.0, %v2693
        %v2695 = vpop.f32.mrb[0].mxu0
        %v2696 = vadd.f32 0.0, %v2695
        %2697 = vdwg.mxu0
        %2698 = vmatprep.subr.mxu0 %v294
        %2699 = vmatpush1.msra.mxu0 %v293
        %2700 = vmatprep.subr.mxu0 %v326
        %2701 = vmatpush1.msra.mxu0 %v325
        %2702 = vmatprep.subr.mxu0 %v358
        %2703 = vmatpush1.msra.mxu0 %v357
        %2704 = vmatprep.subr.mxu0 %v390
        %2705 = vmatpush1.msra.mxu0 %v389
        %2706 = vmatprep.subr.mxu0 %v422
        %2707 = vmatpush1.msra.mxu0 %v421
        %2708 = vmatprep.subr.mxu0 %v454
        %2709 = vmatpush1.msra.mxu0 %v453
        %2710 = vmatprep.subr.mxu0 %v486
        %2711 = vmatpush1.msra.mxu0 %v485
        %2712 = vmatprep.subr.mxu0 %v518
        %2713 = vmatpush1.msra.mxu0 %v517
        %2714 = vmatprep.subr.mxu0 %v550
        %2715 = vmatpush1.msra.mxu0 %v549
        %2716 = vmatprep.subr.mxu0 %v582
        %2717 = vmatpush1.msra.mxu0 %v581
        %2718 = vmatprep.subr.mxu0 %v614
        %2719 = vmatpush1.msra.mxu0 %v613
        %2720 = vmatprep.subr.mxu0 %v646
        %2721 = vmatpush1.msra.mxu0 %v645
        %2722 = vmatprep.subr.mxu0 %v678
        %2723 = vmatpush1.msra.mxu0 %v677
        %2724 = vmatprep.subr.mxu0 %v710
        %2725 = vmatpush1.msra.mxu0 %v709
        %2726 = vmatprep.subr.mxu0 %v742
        %2727 = vmatpush1.msra.mxu0 %v741
        %2728 = vmatprep.subr.mxu0 %v774
        %2729 = vmatpush1.msra.mxu0 %v773
        %2730 = vmatprep.subr.mxu0 0.0
        %2731 = vmatpush1.msra.mxu0 0.0
        %2732 = vmatprep.subr.mxu0 0.0
        %2733 = vmatpush1.msra.mxu0 0.0
        %2734 = vmatprep.subr.mxu0 0.0
        %2735 = vmatpush1.msra.mxu0 0.0
        %2736 = vmatprep.subr.mxu0 0.0
        %2737 = vmatpush1.msra.mxu0 0.0
        %2738 = vmatprep.subr.mxu0 0.0
        %2739 = vmatpush1.msra.mxu0 0.0
        %2740 = vmatprep.subr.mxu0 0.0
        %2741 = vmatpush1.msra.mxu0 0.0
        %2742 = vmatprep.subr.mxu0 0.0
        %2743 = vmatpush1.msra.mxu0 0.0
        %2744 = vmatprep.subr.mxu0 0.0
        %2745 = vmatpush1.msra.mxu0 0.0
        %2746 = vmatprep.subr.mxu0 0.0
        %2747 = vmatpush1.msra.mxu0 0.0
        %2748 = vmatprep.subr.mxu0 0.0
        %2749 = vmatpush1.msra.mxu0 0.0
        %2750 = vmatprep.subr.mxu0 0.0
        %2751 = vmatpush1.msra.mxu0 0.0
        %2752 = vmatprep.subr.mxu0 0.0
        %2753 = vmatpush1.msra.mxu0 0.0
        %2754 = vmatprep.subr.mxu0 0.0
        %2755 = vmatpush1.msra.mxu0 0.0
        %2756 = vmatprep.subr.mxu0 0.0
        %2757 = vmatpush1.msra.mxu0 0.0
        %2758 = vmatprep.subr.mxu0 0.0
        %2759 = vmatpush1.msra.mxu0 0.0
        %2760 = vmatprep.subr.mxu0 0.0
        %2761 = vmatpush1.msra.mxu0 0.0
        %2762 = vmatprep.mubr.f32.mxu0 0.0
        %2763 = vmatmul.mubr.f32.gmra.mrb[0].mxu0 %v1916
        %v2764 = vpop.f32.mrb[0].mxu0
        %v2765 = vadd.f32 0.0, %v2764
        %v2766 = vpop.f32.mrb[0].mxu0
        %v2767 = vadd.f32 0.0, %v2766
        %2768 = vdwg.mxu0
        %2769 = vmatprep.subr.mxu0 %v296
        %2770 = vmatpush1.msra.mxu0 %v295
        %2771 = vmatprep.subr.mxu0 %v328
        %2772 = vmatpush1.msra.mxu0 %v327
        %2773 = vmatprep.subr.mxu0 %v360
        %2774 = vmatpush1.msra.mxu0 %v359
        %2775 = vmatprep.subr.mxu0 %v392
        %2776 = vmatpush1.msra.mxu0 %v391
        %2777 = vmatprep.subr.mxu0 %v424
        %2778 = vmatpush1.msra.mxu0 %v423
        %2779 = vmatprep.subr.mxu0 %v456
        %2780 = vmatpush1.msra.mxu0 %v455
        %2781 = vmatprep.subr.mxu0 %v488
        %2782 = vmatpush1.msra.mxu0 %v487
        %2783 = vmatprep.subr.mxu0 %v520
        %2784 = vmatpush1.msra.mxu0 %v519
        %2785 = vmatprep.subr.mxu0 %v552
        %2786 = vmatpush1.msra.mxu0 %v551
        %2787 = vmatprep.subr.mxu0 %v584
        %2788 = vmatpush1.msra.mxu0 %v583
        %2789 = vmatprep.subr.mxu0 %v616
        %2790 = vmatpush1.msra.mxu0 %v615
        %2791 = vmatprep.subr.mxu0 %v648
        %2792 = vmatpush1.msra.mxu0 %v647
        %2793 = vmatprep.subr.mxu0 %v680
        %2794 = vmatpush1.msra.mxu0 %v679
        %2795 = vmatprep.subr.mxu0 %v712
        %2796 = vmatpush1.msra.mxu0 %v711
        %2797 = vmatprep.subr.mxu0 %v744
        %2798 = vmatpush1.msra.mxu0 %v743
        %2799 = vmatprep.subr.mxu0 %v776
        %2800 = vmatpush1.msra.mxu0 %v775
        %2801 = vmatprep.subr.mxu0 0.0
        %2802 = vmatpush1.msra.mxu0 0.0
        %2803 = vmatprep.subr.mxu0 0.0
        %2804 = vmatpush1.msra.mxu0 0.0
        %2805 = vmatprep.subr.mxu0 0.0
        %2806 = vmatpush1.msra.mxu0 0.0
        %2807 = vmatprep.subr.mxu0 0.0
        %2808 = vmatpush1.msra.mxu0 0.0
        %2809 = vmatprep.subr.mxu0 0.0
        %2810 = vmatpush1.msra.mxu0 0.0
        %2811 = vmatprep.subr.mxu0 0.0
        %2812 = vmatpush1.msra.mxu0 0.0
        %2813 = vmatprep.subr.mxu0 0.0
        %2814 = vmatpush1.msra.mxu0 0.0
        %2815 = vmatprep.subr.mxu0 0.0
        %2816 = vmatpush1.msra.mxu0 0.0
        %2817 = vmatprep.subr.mxu0 0.0
        %2818 = vmatpush1.msra.mxu0 0.0
        %2819 = vmatprep.subr.mxu0 0.0
        %2820 = vmatpush1.msra.mxu0 0.0
        %2821 = vmatprep.subr.mxu0 0.0
        %2822 = vmatpush1.msra.mxu0 0.0
        %2823 = vmatprep.subr.mxu0 0.0
        %2824 = vmatpush1.msra.mxu0 0.0
        %2825 = vmatprep.subr.mxu0 0.0
        %2826 = vmatpush1.msra.mxu0 0.0
        %2827 = vmatprep.subr.mxu0 0.0
        %2828 = vmatpush1.msra.mxu0 0.0
        %2829 = vmatprep.subr.mxu0 0.0
        %2830 = vmatpush1.msra.mxu0 0.0
        %2831 = vmatprep.subr.mxu0 0.0
        %2832 = vmatpush1.msra.mxu0 0.0
        %2833 = vmatprep.mubr.f32.mxu0 0.0
        %2834 = vmatmul.mubr.f32.gmra.mrb[0].mxu0 %v1916
        %v2835 = vpop.f32.mrb[0].mxu0
        %v2836 = vadd.f32 0.0, %v2835
        %v2837 = vpop.f32.mrb[0].mxu0
        %v2838 = vadd.f32 0.0, %v2837
        %2839 = vdwg.mxu0
        %2840 = vmatprep.subr.mxu0 %v298
        %2841 = vmatpush1.msra.mxu0 %v297
        %2842 = vmatprep.subr.mxu0 %v330
        %2843 = vmatpush1.msra.mxu0 %v329
        %2844 = vmatprep.subr.mxu0 %v362
        %2845 = vmatpush1.msra.mxu0 %v361
        %2846 = vmatprep.subr.mxu0 %v394
        %2847 = vmatpush1.msra.mxu0 %v393
        %2848 = vmatprep.subr.mxu0 %v426
        %2849 = vmatpush1.msra.mxu0 %v425
        %2850 = vmatprep.subr.mxu0 %v458
        %2851 = vmatpush1.msra.mxu0 %v457
        %2852 = vmatprep.subr.mxu0 %v490
        %2853 = vmatpush1.msra.mxu0 %v489
        %2854 = vmatprep.subr.mxu0 %v522
        %2855 = vmatpush1.msra.mxu0 %v521
        %2856 = vmatprep.subr.mxu0 %v554
        %2857 = vmatpush1.msra.mxu0 %v553
        %2858 = vmatprep.subr.mxu0 %v586
        %2859 = vmatpush1.msra.mxu0 %v585
        %2860 = vmatprep.subr.mxu0 %v618
        %2861 = vmatpush1.msra.mxu0 %v617
        %2862 = vmatprep.subr.mxu0 %v650
        %2863 = vmatpush1.msra.mxu0 %v649
        %2864 = vmatprep.subr.mxu0 %v682
        %2865 = vmatpush1.msra.mxu0 %v681
        %2866 = vmatprep.subr.mxu0 %v714
        %2867 = vmatpush1.msra.mxu0 %v713
        %2868 = vmatprep.subr.mxu0 %v746
        %2869 = vmatpush1.msra.mxu0 %v745
        %2870 = vmatprep.subr.mxu0 %v778
        %2871 = vmatpush1.msra.mxu0 %v777
        %2872 = vmatprep.subr.mxu0 0.0
        %2873 = vmatpush1.msra.mxu0 0.0
        %2874 = vmatprep.subr.mxu0 0.0
        %2875 = vmatpush1.msra.mxu0 0.0
        %2876 = vmatprep.subr.mxu0 0.0
        %2877 = vmatpush1.msra.mxu0 0.0
        %2878 = vmatprep.subr.mxu0 0.0
        %2879 = vmatpush1.msra.mxu0 0.0
        %2880 = vmatprep.subr.mxu0 0.0
        %2881 = vmatpush1.msra.mxu0 0.0
        %2882 = vmatprep.subr.mxu0 0.0
        %2883 = vmatpush1.msra.mxu0 0.0
        %2884 = vmatprep.subr.mxu0 0.0
        %2885 = vmatpush1.msra.mxu0 0.0
        %2886 = vmatprep.subr.mxu0 0.0
        %2887 = vmatpush1.msra.mxu0 0.0
        %2888 = vmatprep.subr.mxu0 0.0
        %2889 = vmatpush1.msra.mxu0 0.0
        %2890 = vmatprep.subr.mxu0 0.0
        %2891 = vmatpush1.msra.mxu0 0.0
        %2892 = vmatprep.subr.mxu0 0.0
        %2893 = vmatpush1.msra.mxu0 0.0
        %2894 = vmatprep.subr.mxu0 0.0
        %2895 = vmatpush1.msra.mxu0 0.0
        %2896 = vmatprep.subr.mxu0 0.0
        %2897 = vmatpush1.msra.mxu0 0.0
        %2898 = vmatprep.subr.mxu0 0.0
        %2899 = vmatpush1.msra.mxu0 0.0
        %2900 = vmatprep.subr.mxu0 0.0
        %2901 = vmatpush1.msra.mxu0 0.0
        %2902 = vmatprep.subr.mxu0 0.0
        %2903 = vmatpush1.msra.mxu0 0.0
        %2904 = vmatprep.mubr.f32.mxu0 0.0
        %2905 = vmatmul.mubr.f32.gmra.mrb[0].mxu0 %v1916
        %v2906 = vpop.f32.mrb[0].mxu0
        %v2907 = vadd.f32 0.0, %v2906
        %v2908 = vpop.f32.mrb[0].mxu0
        %v2909 = vadd.f32 0.0, %v2908
        %2910 = vdwg.mxu0
        %2911 = vmatprep.subr.mxu0 %v300
        %2912 = vmatpush1.msra.mxu0 %v299
        %2913 = vmatprep.subr.mxu0 %v332
        %2914 = vmatpush1.msra.mxu0 %v331
        %2915 = vmatprep.subr.mxu0 %v364
        %2916 = vmatpush1.msra.mxu0 %v363
        %2917 = vmatprep.subr.mxu0 %v396
        %2918 = vmatpush1.msra.mxu0 %v395
        %2919 = vmatprep.subr.mxu0 %v428
        %2920 = vmatpush1.msra.mxu0 %v427
        %2921 = vmatprep.subr.mxu0 %v460
        %2922 = vmatpush1.msra.mxu0 %v459
        %2923 = vmatprep.subr.mxu0 %v492
        %2924 = vmatpush1.msra.mxu0 %v491
        %2925 = vmatprep.subr.mxu0 %v524
        %2926 = vmatpush1.msra.mxu0 %v523
        %2927 = vmatprep.subr.mxu0 %v556
        %2928 = vmatpush1.msra.mxu0 %v555
        %2929 = vmatprep.subr.mxu0 %v588
        %2930 = vmatpush1.msra.mxu0 %v587
        %2931 = vmatprep.subr.mxu0 %v620
        %2932 = vmatpush1.msra.mxu0 %v619
        %2933 = vmatprep.subr.mxu0 %v652
        %2934 = vmatpush1.msra.mxu0 %v651
        %2935 = vmatprep.subr.mxu0 %v684
        %2936 = vmatpush1.msra.mxu0 %v683
        %2937 = vmatprep.subr.mxu0 %v716
        %2938 = vmatpush1.msra.mxu0 %v715
        %2939 = vmatprep.subr.mxu0 %v748
        %2940 = vmatpush1.msra.mxu0 %v747
        %2941 = vmatprep.subr.mxu0 %v780
        %2942 = vmatpush1.msra.mxu0 %v779
        %2943 = vmatprep.subr.mxu0 0.0
        %2944 = vmatpush1.msra.mxu0 0.0
        %2945 = vmatprep.subr.mxu0 0.0
        %2946 = vmatpush1.msra.mxu0 0.0
        %2947 = vmatprep.subr.mxu0 0.0
        %2948 = vmatpush1.msra.mxu0 0.0
        %2949 = vmatprep.subr.mxu0 0.0
        %2950 = vmatpush1.msra.mxu0 0.0
        %2951 = vmatprep.subr.mxu0 0.0
        %2952 = vmatpush1.msra.mxu0 0.0
        %2953 = vmatprep.subr.mxu0 0.0
        %2954 = vmatpush1.msra.mxu0 0.0
        %2955 = vmatprep.subr.mxu0 0.0
        %2956 = vmatpush1.msra.mxu0 0.0
        %2957 = vmatprep.subr.mxu0 0.0
        %2958 = vmatpush1.msra.mxu0 0.0
        %2959 = vmatprep.subr.mxu0 0.0
        %2960 = vmatpush1.msra.mxu0 0.0
        %2961 = vmatprep.subr.mxu0 0.0
        %2962 = vmatpush1.msra.mxu0 0.0
        %2963 = vmatprep.subr.mxu0 0.0
        %2964 = vmatpush1.msra.mxu0 0.0
        %2965 = vmatprep.subr.mxu0 0.0
        %2966 = vmatpush1.msra.mxu0 0.0
        %2967 = vmatprep.subr.mxu0 0.0
        %2968 = vmatpush1.msra.mxu0 0.0
        %2969 = vmatprep.subr.mxu0 0.0
        %2970 = vmatpush1.msra.mxu0 0.0
        %2971 = vmatprep.subr.mxu0 0.0
        %2972 = vmatpush1.msra.mxu0 0.0
        %2973 = vmatprep.subr.mxu0 0.0
        %2974 = vmatpush1.msra.mxu0 0.0
        %2975 = vmatprep.mubr.f32.mxu0 0.0
        %2976 = vmatmul.mubr.f32.gmra.mrb[0].mxu0 %v1916
        %v2977 = vpop.f32.mrb[0].mxu0
        %v2978 = vadd.f32 0.0, %v2977
        %v2979 = vpop.f32.mrb[0].mxu0
        %v2980 = vadd.f32 0.0, %v2979
        %2981 = vdwg.mxu0
        %2982 = vmatprep.subr.mxu0 %v302
        %2983 = vmatpush1.msra.mxu0 %v301
        %2984 = vmatprep.subr.mxu0 %v334
        %2985 = vmatpush1.msra.mxu0 %v333
        %2986 = vmatprep.subr.mxu0 %v366
        %2987 = vmatpush1.msra.mxu0 %v365
        %2988 = vmatprep.subr.mxu0 %v398
        %2989 = vmatpush1.msra.mxu0 %v397
        %2990 = vmatprep.subr.mxu0 %v430
        %2991 = vmatpush1.msra.mxu0 %v429
        %2992 = vmatprep.subr.mxu0 %v462
        %2993 = vmatpush1.msra.mxu0 %v461
        %2994 = vmatprep.subr.mxu0 %v494
        %2995 = vmatpush1.msra.mxu0 %v493
        %2996 = vmatprep.subr.mxu0 %v526
        %2997 = vmatpush1.msra.mxu0 %v525
        %2998 = vmatprep.subr.mxu0 %v558
        %2999 = vmatpush1.msra.mxu0 %v557
        %3000 = vmatprep.subr.mxu0 %v590
        %3001 = vmatpush1.msra.mxu0 %v589
        %3002 = vmatprep.subr.mxu0 %v622
        %3003 = vmatpush1.msra.mxu0 %v621
        %3004 = vmatprep.subr.mxu0 %v654
        %3005 = vmatpush1.msra.mxu0 %v653
        %3006 = vmatprep.subr.mxu0 %v686
        %3007 = vmatpush1.msra.mxu0 %v685
        %3008 = vmatprep.subr.mxu0 %v718
        %3009 = vmatpush1.msra.mxu0 %v717
        %3010 = vmatprep.subr.mxu0 %v750
        %3011 = vmatpush1.msra.mxu0 %v749
        %3012 = vmatprep.subr.mxu0 %v782
        %3013 = vmatpush1.msra.mxu0 %v781
        %3014 = vmatprep.subr.mxu0 0.0
        %3015 = vmatpush1.msra.mxu0 0.0
        %3016 = vmatprep.subr.mxu0 0.0
        %3017 = vmatpush1.msra.mxu0 0.0
        %3018 = vmatprep.subr.mxu0 0.0
        %3019 = vmatpush1.msra.mxu0 0.0
        %3020 = vmatprep.subr.mxu0 0.0
        %3021 = vmatpush1.msra.mxu0 0.0
        %3022 = vmatprep.subr.mxu0 0.0
        %3023 = vmatpush1.msra.mxu0 0.0
        %3024 = vmatprep.subr.mxu0 0.0
        %3025 = vmatpush1.msra.mxu0 0.0
        %3026 = vmatprep.subr.mxu0 0.0
        %3027 = vmatpush1.msra.mxu0 0.0
        %3028 = vmatprep.subr.mxu0 0.0
        %3029 = vmatpush1.msra.mxu0 0.0
        %3030 = vmatprep.subr.mxu0 0.0
        %3031 = vmatpush1.msra.mxu0 0.0
        %3032 = vmatprep.subr.mxu0 0.0
        %3033 = vmatpush1.msra.mxu0 0.0
        %3034 = vmatprep.subr.mxu0 0.0
        %3035 = vmatpush1.msra.mxu0 0.0
        %3036 = vmatprep.subr.mxu0 0.0
        %3037 = vmatpush1.msra.mxu0 0.0
        %3038 = vmatprep.subr.mxu0 0.0
        %3039 = vmatpush1.msra.mxu0 0.0
        %3040 = vmatprep.subr.mxu0 0.0
        %3041 = vmatpush1.msra.mxu0 0.0
        %3042 = vmatprep.subr.mxu0 0.0
        %3043 = vmatpush1.msra.mxu0 0.0
        %3044 = vmatprep.subr.mxu0 0.0
        %3045 = vmatpush1.msra.mxu0 0.0
        %3046 = vmatprep.mubr.f32.mxu0 0.0
        %3047 = vmatmul.mubr.f32.gmra.mrb[0].mxu0 %v1916
        %v3048 = vpop.f32.mrb[0].mxu0
        %v3049 = vadd.f32 0.0, %v3048
        %v3050 = vpop.f32.mrb[0].mxu0
        %v3051 = vadd.f32 0.0, %v3050
        %3052 = vdwg.mxu0
        %3053 = vst [vmem:[%s235] sm:$0xff] %v1984
        %3054 = vst [vmem:[%s235 + $0x8] sm:$0xff] %v1986
        %3055 = vst [vmem:[%s235 + $0x10] sm:$0xff] %v2055
        %3056 = vst [vmem:[%s235 + $0x18] sm:$0xff] %v2057
        %3057 = vst [vmem:[%s235 + $0x20] sm:$0xff] %v2126
        %3058 = vst [vmem:[%s235 + $0x28] sm:$0xff] %v2128
        %3059 = vst [vmem:[%s235 + $0x30] sm:$0xff] %v2197
        %3060 = vst [vmem:[%s235 + $0x38] sm:$0xff] %v2199
        %3061 = vst [vmem:[%s235 + $0x40] sm:$0xff] %v2268
        %3062 = vst [vmem:[%s235 + $0x48] sm:$0xff] %v2270
        %3063 = vst [vmem:[%s235 + $0x50] sm:$0xff] %v2339
        %3064 = vst [vmem:[%s235 + $0x58] sm:$0xff] %v2341
        %3065 = vst [vmem:[%s235 + $0x60] sm:$0xff] %v2410
        %3066 = vst [vmem:[%s235 + $0x68] sm:$0xff] %v2412
        %3067 = vst [vmem:[%s235 + $0x70] sm:$0xff] %v2481
        %3068 = vst [vmem:[%s235 + $0x78] sm:$0xff] %v2483
        %3069 = vst [vmem:[%s235 + $0x80] sm:$0xff] %v2552
        %3070 = vst [vmem:[%s235 + $0x88] sm:$0xff] %v2554
        %3071 = vst [vmem:[%s235 + $0x90] sm:$0xff] %v2623
        %3072 = vst [vmem:[%s235 + $0x98] sm:$0xff] %v2625
        %3073 = vst [vmem:[%s235 + $0xa0] sm:$0xff] %v2694
        %3074 = vst [vmem:[%s235 + $0xa8] sm:$0xff] %v2696
        %3075 = vst [vmem:[%s235 + $0xb0] sm:$0xff] %v2765
        %3076 = vst [vmem:[%s235 + $0xb8] sm:$0xff] %v2767
        %3077 = vst [vmem:[%s235 + $0xc0] sm:$0xff] %v2836
        %3078 = vst [vmem:[%s235 + $0xc8] sm:$0xff] %v2838
        %3079 = vst [vmem:[%s235 + $0xd0] sm:$0xff] %v2907
        %3080 = vst [vmem:[%s235 + $0xd8] sm:$0xff] %v2909
        %3081 = vst [vmem:[%s235 + $0xe0] sm:$0xff] %v2978
        %3082 = vst [vmem:[%s235 + $0xe8] sm:$0xff] %v2980
        %3083 = vst [vmem:[%s235 + $0xf0] sm:$0xff] %v3049
        %3084 = vst [vmem:[%s235 + $0xf8] sm:$0xff] %v3051
        %s3085 = sand.u32 %s102, 1
        %s3086 = scalar_lea.sflag [#allocation4], %s3085
        %s3087 = sand.u32 %s102, 1
        %s3088 = smul.addr %s3087, 256
        %s3089 = scalar_lea.vmem [#allocation8], %s3088
        // Predicated region
        $region45: #{tpu_custom_call.1} parent=31 // pred_check
          %p3090 = pneg %p112
        $region46: #{tpu_custom_call.1} parent=31 // pred_check_branch
          %3092 = sbr.rel (%p3090) target = $region48
        $region47: #{tpu_custom_call.1} parent=31 // pred_region
          %s3094 = ssub.s32 4096, 4096
          %3095 = vsyncadd %s3086, %s3094
          %s3096 = smul.addr %s21, 32
          %s3097 = smul.addr %s3096, 128
          %s3098 = scalar_lea.hbm %s3, %s3097
          %s3100 = sshll.u32 %s3089, 4
          %s3101 = int_to_ptr.vmem [resolvable:$true] %s3100
          %3103 = dma.vmem_to_hbm [thread:$0]  %s3101, 4096, %s3098, %s3086
        $region48: #{tpu_custom_call.1} parent=31 // pred_fallthru
          _
      $region32: #{tpu_custom_call.1} parent=5 // pred_fallthru
        _
      %p3104 = scmp.le.s32.totalorder 2, %s16
      // Predicated region
      $region49: #{tpu_custom_call.1} parent=5 // pred_check
        %p3105 = pneg %p3104
      $region50: #{tpu_custom_call.1} parent=5 // pred_check_branch
        %3107 = sbr.rel (%p3105) target = $region52
      $region51: #{tpu_custom_call.1} parent=5 // pred_region
        %s3108 = ssub.s32 %s16, 2
        // Predicated region
        $region53: #{tpu_custom_call.1} parent=51 // pred_check
          %p3109 = pneg %p118
        $region54: #{tpu_custom_call.1} parent=51 // pred_check_branch
          %3111 = sbr.rel (%p3109) target = $region56
        $region55: #{tpu_custom_call.1} parent=51 // pred_region
          %s3112 = sand.u32 %s103, 1
          %s3113 = scalar_lea.sflag [#allocation4], %s3112
          %s3114 = sand.u32 %s103, 1
          %s3115 = smul.addr %s3114, 256
          %s3116 = scalar_lea.vmem [#allocation8], %s3115
          %3117 = dma.done %s3113, 4096
        $region56: #{tpu_custom_call.1} parent=51 // pred_fallthru
          _
      $region52: #{tpu_custom_call.1} parent=5 // pred_fallthru
        _
    $region6: #{tpu_custom_call.1} parent=1 // loop_footer
      %s20 = sadd.s32 1, %s16
    $region7: #{tpu_custom_call.1} parent=1 // loop_footer_branch
      %15 = sbr.rel target = $region3
    $region8: #{tpu_custom_call.1} parent=1 // loop_exit
      _
    %3118 = vsyncpa [#allocation3], 1
    %s3119 = scalar_lea.sflag [#allocation3], 1
    %3120 = vsyncpa %s3119, 1
    %3121 = vsyncpa [#allocation6], 1
    %s3122 = scalar_lea.sflag [#allocation6], 1
    %3123 = vsyncpa %s3122, 1
    %3124 = vsyncpa [#allocation4], 1
    %s3125 = scalar_lea.sflag [#allocation4], 1
    %3126 = vsyncpa %s3125, 1

</llo_original>
